<compile_context>
chip_gen: v7x
topology: tpu7x:2x2x1
jax: 0.10.0
libtpu: 0.0.40
codegen_flags: <defaults>
</compile_context>

<pallas_src>
import math

import jax
import jax.numpy as jnp
from jax import lax
from jax.experimental import pallas as pl
from jax.experimental.pallas import tpu as pltpu

KSIZE = 3

# ---------------------------------------------------------------------------
# Layer table (order == execution order of forward()).
#   (conv name, bn name or None, activation, skip-split Cin or None)
# ---------------------------------------------------------------------------
LAYERS = [
    ("conv_b1_l1",   "bn_b1_l1", "relu",    None),
    ("conv_b1_l2",   "bn_b1_l2", "relu",    None),
    ("conv_b2_l1",   "bn_b2_l1", "relu",    None),
    ("conv_b2_l2",   "bn_b2_l2", "relu",    None),
    ("conv_b3_l1",   "bn_b3_l1", "relu",    None),
    ("conv_b3_l2",   None,       "relu",    None),   # no BN in reference forward
    ("conv_b4_l1",   "bn_b4_l1", "relu",    None),
    ("conv_b4_l2",   "bn_b4_l2", "relu",    None),
    ("deconv_b1_l0", None,       "none",    None),
    ("deconv_b1_l1", "bn_d1_l1", "relu",    64),     # cat(d10[64], e32[64])
    ("deconv_b1_l2", "bn_d1_l2", "relu",    None),
    ("deconv_b2_l0", None,       "none",    None),
    ("deconv_b2_l1", "bn_d2_l1", "relu",    32),     # cat(d20[32], e22[32])
    ("deconv_b2_l2", "bn_d2_l2", "relu",    None),
    ("deconv_b3_l0", None,       "none",    None),
    ("deconv_b3_l1", "bn_d3_l1", "relu",    16),     # cat(d30[16], e12[16])
    ("deconv_b3_l2", "bn_d3_l2", "relu",    None),
    ("output",       None,       "sigmoid", None),
]

CONV_DEFS = [
    ("conv_b1_l1", 1, 16), ("conv_b1_l2", 16, 16),
    ("conv_b2_l1", 16, 32), ("conv_b2_l2", 32, 32),
    ("conv_b3_l1", 32, 64), ("conv_b3_l2", 64, 64),
    ("conv_b4_l1", 64, 128), ("conv_b4_l2", 128, 128),
    ("deconv_b1_l0", 128, 64), ("deconv_b1_l1", 128, 64), ("deconv_b1_l2", 64, 64),
    ("deconv_b2_l0", 64, 32), ("deconv_b2_l1", 64, 32), ("deconv_b2_l2", 32, 32),
    ("deconv_b3_l0", 32, 16), ("deconv_b3_l1", 32, 16), ("deconv_b3_l2", 16, 16),
    ("output", 16, 1),
]
BN_DEFS = [
    ("bn_b1_l1", 16), ("bn_b1_l2", 16),
    ("bn_b2_l1", 32), ("bn_b2_l2", 32),
    ("bn_b3_l1", 64),
    ("bn_b4_l1", 128), ("bn_b4_l2", 128),
    ("bn_d1_l1", 64), ("bn_d1_l2", 64),
    ("bn_d2_l1", 32), ("bn_d2_l2", 32),
    ("bn_d3_l1", 16), ("bn_d3_l2", 16),
]


# ---------------------------------------------------------------------------
# Host-side parameter folding + packing:
#   BN scale -> weights, weights -> tap-major (3*Cin, Cout) matrices, then
#   everything packed into ONE (rows, 128) f32 buffer at 8-aligned row offsets.
# ---------------------------------------------------------------------------
def _pack_params(params):
    blocks, meta = [], []
    row = 0

    def add(mat):
        nonlocal row
        r, c = mat.shape
        rp = ((r + 7) // 8) * 8                      # 8-aligned row blocks
        buf = jnp.zeros((rp, 128), jnp.float32).at[:r, :c].set(
            mat.astype(jnp.float32))
        off = row
        blocks.append(buf)
        row += rp
        return (off, r, c)

    for conv_name, bn_name, act, split in LAYERS:
        w, b = params[conv_name]                     # (Cout, Cin, K), (Cout,)
        w = w.astype(jnp.float32)
        b = b.astype(jnp.float32)
        if bn_name is not None:
            gamma, beta, mean, var, eps = params[bn_name]
            scale = gamma / jnp.sqrt(var + eps)
            w = w * scale[:, None, None]             # fold BN scale into weights
            b = (b - mean) * scale + beta
        cout, cin, k = w.shape

        def to_mat(wp):                              # (Cout, Ci, K) -> (K*Ci, Cout)
            ci = wp.shape[1]                         # rows are tap-major (k, ci)
            return jnp.transpose(wp, (2, 1, 0)).reshape(k * ci, cout)

        if split is None:
            w_entries = [add(to_mat(w))]
        else:                                        # fused skip-concat: split Cin
            w_entries = [add(to_mat(w[:, :split, :])),
                         add(to_mat(w[:, split:, :]))]
        b_entry = add(b.reshape(1, cout))
        meta.append({"w": w_entries, "b": b_entry, "act": act})

    packed = jnp.concatenate(blocks, axis=0)         # (total_rows, 128) f32
    return packed, meta, row


# ---------------------------------------------------------------------------
# Fused per-sample Pallas kernel
# ---------------------------------------------------------------------------
def _make_munet_kernel(L, meta):
    """Builds the fused whole-network kernel for one sample of length L."""

    def kernel(x_ref, wb_ref, o_ref):
        # +/-1 tap shifts with zero 'same' padding: cheap sublane shifts
        # (XLU/VPU) instead of the previous O(N^2) MXU shift matmuls.
        def shift_dn(x):                              # row i <- x[i-1]
            z = jnp.zeros((1, x.shape[1]), jnp.float32)
            return jnp.concatenate([z, x[:-1, :]], axis=0)

        def shift_up(x):                              # row i <- x[i+1]
            z = jnp.zeros((1, x.shape[1]), jnp.float32)
            return jnp.concatenate([x[1:, :], z], axis=0)

        cursor = [0]

        def conv(x, skip=None):
            m = meta[cursor[0]]
            cursor[0] += 1
            xs = (x,) if skip is None else (x, skip)
            y = None
            for xi, (off, rows, cout) in zip(xs, m["w"]):
                w = wb_ref[off:off + rows, :][:, :cout]   # static 8-aligned slice
                if rows == KSIZE:                     # Cin == 1: broadcast-mul
                    t = (shift_dn(xi) * w[0:1, :]
                         + xi * w[1:2, :]
                         + shift_up(xi) * w[2:3, :])
                else:                                 # im2col-in-K: one MXU dot
                    xcat = jnp.concatenate(
                        [shift_dn(xi), xi, shift_up(xi)], axis=1)
                    t = jnp.dot(xcat, w, preferred_element_type=jnp.float32)
                y = t if y is None else y + t
            boff, _, bcols = m["b"]
            y = y + wb_ref[boff:boff + 1, :][:, :bcols]   # (1, Cout) bias
            act = m["act"]
            if act == "relu":
                return jnp.maximum(y, 0.0)
            if act == "sigmoid":
                return jax.nn.sigmoid(y)
            return y                                  # "none"

        def pool4(x):                                 # MaxPool1d(4, 4)
            n, c = x.shape
            return jnp.max(x.reshape(n // 4, 4, c), axis=1)

        def up4(x):                                   # Upsample(x4, nearest)
            n, c = x.shape
            return jnp.broadcast_to(x[:, None, :], (n, 4, c)).reshape(n * 4, c)

        x = x_ref[...]                                # (L, 1) — one sample
        # ---- encoder ------------------------------------------------------
        e11 = conv(x)
        e12 = conv(e11)                               # skip 1
        e21 = conv(pool4(e12))
        e22 = conv(e21)                               # skip 2
        e31 = conv(pool4(e22))
        e32 = conv(e31)                               # skip 3 (no BN)
        e41 = conv(pool4(e32))
        e42 = conv(e41)
        # ---- decoder ------------------------------------------------------
        d10 = conv(up4(e42))
        d11 = conv(d10, skip=e32)
        d12 = conv(d11)
        d20 = conv(up4(d12))
        d21 = conv(d20, skip=e22)
        d22 = conv(d21)
        d30 = conv(up4(d22))
        d31 = conv(d30, skip=e12)
        d32 = conv(d31)
        out = conv(d32)                               # (L, 1) sigmoid scores
        o_ref[...] = out.astype(o_ref.dtype)

    return kernel


def munet_forward_pallas(params, x):
    """x: (B, 1, L) float32 -> (B, 1, L) float32 (sigmoid scores)."""
    B, c_in, L = x.shape
    assert c_in == 1, "MUNet expects a single input channel"
    assert L % 64 == 0 and L >= 128, "length must be a multiple of 64 (>= 128)"

    wb, meta, tot_rows = _pack_params(params)
    x2d = x.astype(jnp.float32).reshape(B * L, 1)

    out2d = pl.pallas_call(
        _make_munet_kernel(L, meta),
        out_shape=jax.ShapeDtypeStruct((B * L, 1), jnp.float32),
        grid=(B,),
        in_specs=[
            pl.BlockSpec((L, 1), lambda b: (b, 0)),           # one sample / step
            pl.BlockSpec((tot_rows, 128), lambda b: (0, 0)),  # packed weights,
        ],                                                    # loaded once
        out_specs=pl.BlockSpec((L, 1), lambda b: (b, 0)),
        compiler_params=pltpu.CompilerParams(
            dimension_semantics=("parallel",),                # megacore-shardable
            vmem_limit_bytes=48 * 1024 * 1024,                # <= v7x 64 MiB VMEM
        ),
    )(x2d, wb)
    return out2d.reshape(B, 1, L)


# ---------------------------------------------------------------------------
# Pure-JAX reference (for correctness check)
# ---------------------------------------------------------------------------
def _conv_bn_act_ref(x, w, b, bn, act):
    y = lax.conv_general_dilated(
        x, w, window_strides=(1,), padding=[(1, 1)],
        dimension_numbers=("NCH", "OIH", "NCH"),
        precision=lax.Precision.HIGHEST)
    y = y + b[None, :, None]
    if bn is not None:
        gamma, beta, mean, var, eps = bn
        y = (y - mean[None, :, None]) / jnp.sqrt(var[None, :, None] + eps)
        y = y * gamma[None, :, None] + beta[None, :, None]
    if act == "relu":
        y = jnp.maximum(y, 0.0)
    elif act == "sigmoid":
        y = jax.nn.sigmoid(y)
    return y


def munet_forward_ref(params, x):
    def C(name, inp, act="relu", bn=None):
        w, b = params[name]
        return _conv_bn_act_ref(inp, w, b, params[bn] if bn else None, act)

    def pool(v):
        b_, c_, l_ = v.shape
        return v.reshape(b_, c_, l_ // 4, 4).max(axis=-1)

    def up(v):
        return jnp.repeat(v, 4, axis=-1)

    x = x.astype(jnp.float32)
    e11 = C("conv_b1_l1", x, bn="bn_b1_l1")
    e12 = C("conv_b1_l2", e11, bn="bn_b1_l2")
    e21 = C("conv_b2_l1", pool(e12), bn="bn_b2_l1")
    e22 = C("conv_b2_l2", e21, bn="bn_b2_l2")
    e31 = C("conv_b3_l1", pool(e22), bn="bn_b3_l1")
    e32 = C("conv_b3_l2", e31)                               # relu, no BN
    e41 = C("conv_b4_l1", pool(e32), bn="bn_b4_l1")
    e42 = C("conv_b4_l2", e41, bn="bn_b4_l2")
    d10 = C("deconv_b1_l0", up(e42), act="none")
    d11 = C("deconv_b1_l1", jnp.concatenate([d10, e32], axis=1), bn="bn_d1_l1")
    d12 = C("deconv_b1_l2", d11, bn="bn_d1_l2")
    d20 = C("deconv_b2_l0", up(d12), act="none")
    d21 = C("deconv_b2_l1", jnp.concatenate([d20, e22], axis=1), bn="bn_d2_l1")
    d22 = C("deconv_b2_l2", d21, bn="bn_d2_l2")
    d30 = C("deconv_b3_l0", up(d22), act="none")
    d31 = C("deconv_b3_l1", jnp.concatenate([d30, e12], axis=1), bn="bn_d3_l1")
    d32 = C("deconv_b3_l2", d31, bn="bn_d3_l2")
    return C("output", d32, act="sigmoid")


# ---------------------------------------------------------------------------
# Deterministic parameter init (mirrors PyTorch Conv1d defaults + BN eval stats)
# ---------------------------------------------------------------------------
def init_params(seed=0):
    root = jax.random.PRNGKey(seed)
    params = {}
    i = 0
    for name, cin, cout in CONV_DEFS:
        kw = jax.random.fold_in(root, i); i += 1
        kb = jax.random.fold_in(root, i); i += 1
        bound = 1.0 / math.sqrt(cin * KSIZE)
        w = jax.random.uniform(kw, (cout, cin, KSIZE), jnp.float32, -bound, bound)
        b = jax.random.uniform(kb, (cout,), jnp.float32, -bound, bound)
        params[name] = (w, b)
    for name, c in BN_DEFS:
        ka = jax.random.fold_in(root, i); i += 1
        kb = jax.random.fold_in(root, i); i += 1
        kc = jax.random.fold_in(root, i); i += 1
        kd = jax.random.fold_in(root, i); i += 1
        gamma = 1.0 + 0.1 * jax.random.uniform(ka, (c,), jnp.float32, -1.0, 1.0)
        beta = 0.1 * jax.random.uniform(kb, (c,), jnp.float32, -1.0, 1.0)
        mean = 0.1 * jax.random.uniform(kc, (c,), jnp.float32, -1.0, 1.0)
        var = 1.0 + 0.2 * jax.random.uniform(kd, (c,), jnp.float32, 0.0, 1.0)
        params[name] = (gamma, beta, mean, var, 1e-5)
    return params


# ---------------------------------------------------------------------------
if __name__ == "__main__":
    B, L = 2, 128                                # L divisible by 64, >= 128
    key = jax.random.PRNGKey(0)
    x = jax.random.normal(key, (B, 1, L), dtype=jnp.float32)
    params = init_params(seed=0)

    fwd_pallas = jax.jit(munet_forward_pallas)
    fwd_ref = jax.jit(munet_forward_ref)

    out = jax.block_until_ready(fwd_pallas(params, x))
    ref = jax.block_until_ready(fwd_ref(params, x))

    assert out.shape == (B, 1, L), out.shape
    max_err = float(jnp.max(jnp.abs(out - ref)))
    assert max_err < 5e-3, f"mismatch vs pure-JAX reference: {max_err}"
    print("KERNEL_OK")
</pallas_src>

<mosaic_0001>
module attributes {stable_mosaic.version = 11 : i64} {
  func.func @kernel(%arg0: i32, %arg1: memref<128x1xf32, #tpu.memory_space<vmem>>, %arg2: memref<2936x128xf32, #tpu.memory_space<vmem>>, %arg3: memref<128x1xf32, #tpu.memory_space<vmem>>) attributes {dimension_semantics = [#tpu.dimension_semantics<parallel>], iteration_bounds = array<i64: 2>, scalar_prefetch = 0 : i64, scratch_operands = 0 : i64, tpu.core_type = #tpu.core_type<tc>, window_params = [{transform_indices = @transform_0, window_bounds = array<i64: 128, 1>}, {pipeline_mode = #tpu.pipeline_mode<synchronous>, transform_indices = @transform_1, window_bounds = array<i64: 2936, 128>}, {transform_indices = @transform_2, window_bounds = array<i64: 128, 1>}]} {
    %c0 = arith.constant 0 : index
    %c0_0 = arith.constant 0 : index
    %0 = vector.load %arg1[%c0, %c0_0] : memref<128x1xf32, #tpu.memory_space<vmem>>, vector<128x1xf32>
    %c0_1 = arith.constant 0 : index
    %c0_2 = arith.constant 0 : index
    %1 = vector.load %arg2[%c0_1, %c0_2] : memref<2936x128xf32, #tpu.memory_space<vmem>>, vector<3x128xf32>
    %2 = vector.extract_strided_slice %1 {offsets = [0, 0], sizes = [3, 16], strides = [1, 1]} : vector<3x128xf32> to vector<3x16xf32>
    %cst = arith.constant 0.000000e+00 : f32
    %3 = vector.broadcast %cst : f32 to vector<1x1xf32>
    %4 = vector.extract_strided_slice %0 {offsets = [0, 0], sizes = [127, 1], strides = [1, 1]} : vector<128x1xf32> to vector<127x1xf32>
    %5 = tpu.concatenate %3, %4 in 0 : vector<1x1xf32>, vector<127x1xf32> -> vector<128x1xf32>
    %6 = vector.extract_strided_slice %2 {offsets = [0, 0], sizes = [1, 16], strides = [1, 1]} : vector<3x16xf32> to vector<1x16xf32>
    %7 = vector.broadcast %5 : vector<128x1xf32> to vector<128x16xf32>
    %8 = vector.broadcast %6 : vector<1x16xf32> to vector<128x16xf32>
    %9 = arith.mulf %7, %8 : vector<128x16xf32>
    %10 = vector.extract_strided_slice %2 {offsets = [1, 0], sizes = [1, 16], strides = [1, 1]} : vector<3x16xf32> to vector<1x16xf32>
    %11 = vector.broadcast %0 : vector<128x1xf32> to vector<128x16xf32>
    %12 = vector.broadcast %10 : vector<1x16xf32> to vector<128x16xf32>
    %13 = arith.mulf %11, %12 : vector<128x16xf32>
    %14 = arith.addf %9, %13 : vector<128x16xf32>
    %cst_3 = arith.constant 0.000000e+00 : f32
    %15 = vector.broadcast %cst_3 : f32 to vector<1x1xf32>
    %16 = vector.extract_strided_slice %0 {offsets = [1, 0], sizes = [127, 1], strides = [1, 1]} : vector<128x1xf32> to vector<127x1xf32>
    %17 = tpu.concatenate %16, %15 in 0 : vector<127x1xf32>, vector<1x1xf32> -> vector<128x1xf32>
    %18 = vector.extract_strided_slice %2 {offsets = [2, 0], sizes = [1, 16], strides = [1, 1]} : vector<3x16xf32> to vector<1x16xf32>
    %19 = vector.broadcast %17 : vector<128x1xf32> to vector<128x16xf32>
    %20 = vector.broadcast %18 : vector<1x16xf32> to vector<128x16xf32>
    %21 = arith.mulf %19, %20 : vector<128x16xf32>
    %22 = arith.addf %14, %21 : vector<128x16xf32>
    %c8 = arith.constant 8 : index
    %c0_4 = arith.constant 0 : index
    %23 = vector.load %arg2[%c8, %c0_4] : memref<2936x128xf32, #tpu.memory_space<vmem>>, vector<1x128xf32>
    %24 = vector.extract_strided_slice %23 {offsets = [0, 0], sizes = [1, 16], strides = [1, 1]} : vector<1x128xf32> to vector<1x16xf32>
    %25 = vector.broadcast %24 : vector<1x16xf32> to vector<128x16xf32>
    %26 = arith.addf %22, %25 : vector<128x16xf32>
    %cst_5 = arith.constant 0.000000e+00 : f32
    %27 = vector.broadcast %cst_5 : f32 to vector<128x16xf32>
    %28 = arith.maximumf %26, %27 : vector<128x16xf32>
    %c16 = arith.constant 16 : index
    %c0_6 = arith.constant 0 : index
    %29 = vector.load %arg2[%c16, %c0_6] : memref<2936x128xf32, #tpu.memory_space<vmem>>, vector<48x128xf32>
    %30 = vector.extract_strided_slice %29 {offsets = [0, 0], sizes = [48, 16], strides = [1, 1]} : vector<48x128xf32> to vector<48x16xf32>
    %cst_7 = arith.constant 0.000000e+00 : f32
    %31 = vector.broadcast %cst_7 : f32 to vector<1x16xf32>
    %32 = vector.extract_strided_slice %28 {offsets = [0, 0], sizes = [127, 16], strides = [1, 1]} : vector<128x16xf32> to vector<127x16xf32>
    %33 = tpu.concatenate %31, %32 in 0 : vector<1x16xf32>, vector<127x16xf32> -> vector<128x16xf32>
    %cst_8 = arith.constant 0.000000e+00 : f32
    %34 = vector.broadcast %cst_8 : f32 to vector<1x16xf32>
    %35 = vector.extract_strided_slice %28 {offsets = [1, 0], sizes = [127, 16], strides = [1, 1]} : vector<128x16xf32> to vector<127x16xf32>
    %36 = tpu.concatenate %35, %34 in 0 : vector<127x16xf32>, vector<1x16xf32> -> vector<128x16xf32>
    %37 = tpu.concatenate %33, %28, %36 in 1 : vector<128x16xf32>, vector<128x16xf32>, vector<128x16xf32> -> vector<128x48xf32>
    %cst_9 = arith.constant dense<0.000000e+00> : vector<128x16xf32>
    %38 = tpu.matmul %37, %30, %cst_9 {dimension_numbers = #tpu.dot_dimension_numbers<[1], [0], [0], [1], [0, 0, 1, 1], [], []>} : vector<128x48xf32>, vector<48x16xf32>, vector<128x16xf32> -> vector<128x16xf32>
    %c64 = arith.constant 64 : index
    %c0_10 = arith.constant 0 : index
    %39 = vector.load %arg2[%c64, %c0_10] : memref<2936x128xf32, #tpu.memory_space<vmem>>, vector<1x128xf32>
    %40 = vector.extract_strided_slice %39 {offsets = [0, 0], sizes = [1, 16], strides = [1, 1]} : vector<1x128xf32> to vector<1x16xf32>
    %41 = vector.broadcast %40 : vector<1x16xf32> to vector<128x16xf32>
    %42 = arith.addf %38, %41 : vector<128x16xf32>
    %cst_11 = arith.constant 0.000000e+00 : f32
    %43 = vector.broadcast %cst_11 : f32 to vector<128x16xf32>
    %44 = arith.maximumf %42, %43 : vector<128x16xf32>
    %45 = vector.shape_cast %44 : vector<128x16xf32> to vector<32x4x16xf32>
    %cst_12 = arith.constant dense<0xFF800000> : vector<32x16xf32>
    %46 = vector.multi_reduction <maximumf>, %45, %cst_12 [1] : vector<32x4x16xf32> to vector<32x16xf32>
    %c72 = arith.constant 72 : index
    %c0_13 = arith.constant 0 : index
    %47 = vector.load %arg2[%c72, %c0_13] : memref<2936x128xf32, #tpu.memory_space<vmem>>, vector<48x128xf32>
    %48 = vector.extract_strided_slice %47 {offsets = [0, 0], sizes = [48, 32], strides = [1, 1]} : vector<48x128xf32> to vector<48x32xf32>
    %cst_14 = arith.constant 0.000000e+00 : f32
    %49 = vector.broadcast %cst_14 : f32 to vector<1x16xf32>
    %50 = vector.extract_strided_slice %46 {offsets = [0, 0], sizes = [31, 16], strides = [1, 1]} : vector<32x16xf32> to vector<31x16xf32>
    %51 = tpu.concatenate %49, %50 in 0 : vector<1x16xf32>, vector<31x16xf32> -> vector<32x16xf32>
    %cst_15 = arith.constant 0.000000e+00 : f32
    %52 = vector.broadcast %cst_15 : f32 to vector<1x16xf32>
    %53 = vector.extract_strided_slice %46 {offsets = [1, 0], sizes = [31, 16], strides = [1, 1]} : vector<32x16xf32> to vector<31x16xf32>
    %54 = tpu.concatenate %53, %52 in 0 : vector<31x16xf32>, vector<1x16xf32> -> vector<32x16xf32>
    %55 = tpu.concatenate %51, %46, %54 in 1 : vector<32x16xf32>, vector<32x16xf32>, vector<32x16xf32> -> vector<32x48xf32>
    %cst_16 = arith.constant dense<0.000000e+00> : vector<32x32xf32>
    %56 = tpu.matmul %55, %48, %cst_16 {dimension_numbers = #tpu.dot_dimension_numbers<[1], [0], [0], [1], [0, 0, 1, 1], [], []>} : vector<32x48xf32>, vector<48x32xf32>, vector<32x32xf32> -> vector<32x32xf32>
    %c120 = arith.constant 120 : index
    %c0_17 = arith.constant 0 : index
    %57 = vector.load %arg2[%c120, %c0_17] : memref<2936x128xf32, #tpu.memory_space<vmem>>, vector<1x128xf32>
    %58 = vector.extract_strided_slice %57 {offsets = [0, 0], sizes = [1, 32], strides = [1, 1]} : vector<1x128xf32> to vector<1x32xf32>
    %59 = vector.broadcast %58 : vector<1x32xf32> to vector<32x32xf32>
    %60 = arith.addf %56, %59 : vector<32x32xf32>
    %cst_18 = arith.constant 0.000000e+00 : f32
    %61 = vector.broadcast %cst_18 : f32 to vector<32x32xf32>
    %62 = arith.maximumf %60, %61 : vector<32x32xf32>
    %c128 = arith.constant 128 : index
    %c0_19 = arith.constant 0 : index
    %63 = vector.load %arg2[%c128, %c0_19] : memref<2936x128xf32, #tpu.memory_space<vmem>>, vector<96x128xf32>
    %64 = vector.extract_strided_slice %63 {offsets = [0, 0], sizes = [96, 32], strides = [1, 1]} : vector<96x128xf32> to vector<96x32xf32>
    %cst_20 = arith.constant 0.000000e+00 : f32
    %65 = vector.broadcast %cst_20 : f32 to vector<1x32xf32>
    %66 = vector.extract_strided_slice %62 {offsets = [0, 0], sizes = [31, 32], strides = [1, 1]} : vector<32x32xf32> to vector<31x32xf32>
    %67 = tpu.concatenate %65, %66 in 0 : vector<1x32xf32>, vector<31x32xf32> -> vector<32x32xf32>
    %cst_21 = arith.constant 0.000000e+00 : f32
    %68 = vector.broadcast %cst_21 : f32 to vector<1x32xf32>
    %69 = vector.extract_strided_slice %62 {offsets = [1, 0], sizes = [31, 32], strides = [1, 1]} : vector<32x32xf32> to vector<31x32xf32>
    %70 = tpu.concatenate %69, %68 in 0 : vector<31x32xf32>, vector<1x32xf32> -> vector<32x32xf32>
    %71 = tpu.concatenate %67, %62, %70 in 1 : vector<32x32xf32>, vector<32x32xf32>, vector<32x32xf32> -> vector<32x96xf32>
    %cst_22 = arith.constant dense<0.000000e+00> : vector<32x32xf32>
    %72 = tpu.matmul %71, %64, %cst_22 {dimension_numbers = #tpu.dot_dimension_numbers<[1], [0], [0], [1], [0, 0, 1, 1], [], []>} : vector<32x96xf32>, vector<96x32xf32>, vector<32x32xf32> -> vector<32x32xf32>
    %c224 = arith.constant 224 : index
    %c0_23 = arith.constant 0 : index
    %73 = vector.load %arg2[%c224, %c0_23] : memref<2936x128xf32, #tpu.memory_space<vmem>>, vector<1x128xf32>
    %74 = vector.extract_strided_slice %73 {offsets = [0, 0], sizes = [1, 32], strides = [1, 1]} : vector<1x128xf32> to vector<1x32xf32>
    %75 = vector.broadcast %74 : vector<1x32xf32> to vector<32x32xf32>
    %76 = arith.addf %72, %75 : vector<32x32xf32>
    %cst_24 = arith.constant 0.000000e+00 : f32
    %77 = vector.broadcast %cst_24 : f32 to vector<32x32xf32>
    %78 = arith.maximumf %76, %77 : vector<32x32xf32>
    %79 = vector.shape_cast %78 : vector<32x32xf32> to vector<8x4x32xf32>
    %cst_25 = arith.constant dense<0xFF800000> : vector<8x32xf32>
    %80 = vector.multi_reduction <maximumf>, %79, %cst_25 [1] : vector<8x4x32xf32> to vector<8x32xf32>
    %c232 = arith.constant 232 : index
    %c0_26 = arith.constant 0 : index
    %81 = vector.load %arg2[%c232, %c0_26] : memref<2936x128xf32, #tpu.memory_space<vmem>>, vector<96x128xf32>
    %82 = vector.extract_strided_slice %81 {offsets = [0, 0], sizes = [96, 64], strides = [1, 1]} : vector<96x128xf32> to vector<96x64xf32>
    %cst_27 = arith.constant 0.000000e+00 : f32
    %83 = vector.broadcast %cst_27 : f32 to vector<1x32xf32>
    %84 = vector.extract_strided_slice %80 {offsets = [0, 0], sizes = [7, 32], strides = [1, 1]} : vector<8x32xf32> to vector<7x32xf32>
    %85 = tpu.concatenate %83, %84 in 0 : vector<1x32xf32>, vector<7x32xf32> -> vector<8x32xf32>
    %cst_28 = arith.constant 0.000000e+00 : f32
    %86 = vector.broadcast %cst_28 : f32 to vector<1x32xf32>
    %87 = vector.extract_strided_slice %80 {offsets = [1, 0], sizes = [7, 32], strides = [1, 1]} : vector<8x32xf32> to vector<7x32xf32>
    %88 = tpu.concatenate %87, %86 in 0 : vector<7x32xf32>, vector<1x32xf32> -> vector<8x32xf32>
    %89 = tpu.concatenate %85, %80, %88 in 1 : vector<8x32xf32>, vector<8x32xf32>, vector<8x32xf32> -> vector<8x96xf32>
    %cst_29 = arith.constant dense<0.000000e+00> : vector<8x64xf32>
    %90 = tpu.matmul %89, %82, %cst_29 {dimension_numbers = #tpu.dot_dimension_numbers<[1], [0], [0], [1], [0, 0, 1, 1], [], []>} : vector<8x96xf32>, vector<96x64xf32>, vector<8x64xf32> -> vector<8x64xf32>
    %c328 = arith.constant 328 : index
    %c0_30 = arith.constant 0 : index
    %91 = vector.load %arg2[%c328, %c0_30] : memref<2936x128xf32, #tpu.memory_space<vmem>>, vector<1x128xf32>
    %92 = vector.extract_strided_slice %91 {offsets = [0, 0], sizes = [1, 64], strides = [1, 1]} : vector<1x128xf32> to vector<1x64xf32>
    %93 = vector.broadcast %92 : vector<1x64xf32> to vector<8x64xf32>
    %94 = arith.addf %90, %93 : vector<8x64xf32>
    %cst_31 = arith.constant 0.000000e+00 : f32
    %95 = vector.broadcast %cst_31 : f32 to vector<8x64xf32>
    %96 = arith.maximumf %94, %95 : vector<8x64xf32>
    %c336 = arith.constant 336 : index
    %c0_32 = arith.constant 0 : index
    %97 = vector.load %arg2[%c336, %c0_32] : memref<2936x128xf32, #tpu.memory_space<vmem>>, vector<192x128xf32>
    %98 = vector.extract_strided_slice %97 {offsets = [0, 0], sizes = [192, 64], strides = [1, 1]} : vector<192x128xf32> to vector<192x64xf32>
    %cst_33 = arith.constant 0.000000e+00 : f32
    %99 = vector.broadcast %cst_33 : f32 to vector<1x64xf32>
    %100 = vector.extract_strided_slice %96 {offsets = [0, 0], sizes = [7, 64], strides = [1, 1]} : vector<8x64xf32> to vector<7x64xf32>
    %101 = tpu.concatenate %99, %100 in 0 : vector<1x64xf32>, vector<7x64xf32> -> vector<8x64xf32>
    %cst_34 = arith.constant 0.000000e+00 : f32
    %102 = vector.broadcast %cst_34 : f32 to vector<1x64xf32>
    %103 = vector.extract_strided_slice %96 {offsets = [1, 0], sizes = [7, 64], strides = [1, 1]} : vector<8x64xf32> to vector<7x64xf32>
    %104 = tpu.concatenate %103, %102 in 0 : vector<7x64xf32>, vector<1x64xf32> -> vector<8x64xf32>
    %105 = tpu.concatenate %101, %96, %104 in 1 : vector<8x64xf32>, vector<8x64xf32>, vector<8x64xf32> -> vector<8x192xf32>
    %cst_35 = arith.constant dense<0.000000e+00> : vector<8x64xf32>
    %106 = tpu.matmul %105, %98, %cst_35 {dimension_numbers = #tpu.dot_dimension_numbers<[1], [0], [0], [1], [0, 0, 1, 1], [], []>} : vector<8x192xf32>, vector<192x64xf32>, vector<8x64xf32> -> vector<8x64xf32>
    %c528 = arith.constant 528 : index
    %c0_36 = arith.constant 0 : index
    %107 = vector.load %arg2[%c528, %c0_36] : memref<2936x128xf32, #tpu.memory_space<vmem>>, vector<1x128xf32>
    %108 = vector.extract_strided_slice %107 {offsets = [0, 0], sizes = [1, 64], strides = [1, 1]} : vector<1x128xf32> to vector<1x64xf32>
    %109 = vector.broadcast %108 : vector<1x64xf32> to vector<8x64xf32>
    %110 = arith.addf %106, %109 : vector<8x64xf32>
    %cst_37 = arith.constant 0.000000e+00 : f32
    %111 = vector.broadcast %cst_37 : f32 to vector<8x64xf32>
    %112 = arith.maximumf %110, %111 : vector<8x64xf32>
    %113 = vector.shape_cast %112 : vector<8x64xf32> to vector<2x4x64xf32>
    %cst_38 = arith.constant dense<0xFF800000> : vector<2x64xf32>
    %114 = vector.multi_reduction <maximumf>, %113, %cst_38 [1] : vector<2x4x64xf32> to vector<2x64xf32>
    %c536 = arith.constant 536 : index
    %c0_39 = arith.constant 0 : index
    %115 = vector.load %arg2[%c536, %c0_39] : memref<2936x128xf32, #tpu.memory_space<vmem>>, vector<192x128xf32>
    %cst_40 = arith.constant 0.000000e+00 : f32
    %116 = vector.broadcast %cst_40 : f32 to vector<1x64xf32>
    %117 = vector.extract_strided_slice %114 {offsets = [0, 0], sizes = [1, 64], strides = [1, 1]} : vector<2x64xf32> to vector<1x64xf32>
    %118 = tpu.concatenate %116, %117 in 0 : vector<1x64xf32>, vector<1x64xf32> -> vector<2x64xf32>
    %cst_41 = arith.constant 0.000000e+00 : f32
    %119 = vector.broadcast %cst_41 : f32 to vector<1x64xf32>
    %120 = vector.extract_strided_slice %114 {offsets = [1, 0], sizes = [1, 64], strides = [1, 1]} : vector<2x64xf32> to vector<1x64xf32>
    %121 = tpu.concatenate %120, %119 in 0 : vector<1x64xf32>, vector<1x64xf32> -> vector<2x64xf32>
    %122 = tpu.concatenate %118, %114, %121 in 1 : vector<2x64xf32>, vector<2x64xf32>, vector<2x64xf32> -> vector<2x192xf32>
    %cst_42 = arith.constant dense<0.000000e+00> : vector<2x128xf32>
    %123 = tpu.matmul %122, %115, %cst_42 {dimension_numbers = #tpu.dot_dimension_numbers<[1], [0], [0], [1], [0, 0, 1, 1], [], []>} : vector<2x192xf32>, vector<192x128xf32>, vector<2x128xf32> -> vector<2x128xf32>
    %c728 = arith.constant 728 : index
    %c0_43 = arith.constant 0 : index
    %124 = vector.load %arg2[%c728, %c0_43] : memref<2936x128xf32, #tpu.memory_space<vmem>>, vector<1x128xf32>
    %125 = vector.broadcast %124 : vector<1x128xf32> to vector<2x128xf32>
    %126 = arith.addf %123, %125 : vector<2x128xf32>
    %cst_44 = arith.constant 0.000000e+00 : f32
    %127 = vector.broadcast %cst_44 : f32 to vector<2x128xf32>
    %128 = arith.maximumf %126, %127 : vector<2x128xf32>
    %c736 = arith.constant 736 : index
    %c0_45 = arith.constant 0 : index
    %129 = vector.load %arg2[%c736, %c0_45] : memref<2936x128xf32, #tpu.memory_space<vmem>>, vector<384x128xf32>
    %cst_46 = arith.constant 0.000000e+00 : f32
    %130 = vector.broadcast %cst_46 : f32 to vector<1x128xf32>
    %131 = vector.extract_strided_slice %128 {offsets = [0, 0], sizes = [1, 128], strides = [1, 1]} : vector<2x128xf32> to vector<1x128xf32>
    %132 = tpu.concatenate %130, %131 in 0 : vector<1x128xf32>, vector<1x128xf32> -> vector<2x128xf32>
    %cst_47 = arith.constant 0.000000e+00 : f32
    %133 = vector.broadcast %cst_47 : f32 to vector<1x128xf32>
    %134 = vector.extract_strided_slice %128 {offsets = [1, 0], sizes = [1, 128], strides = [1, 1]} : vector<2x128xf32> to vector<1x128xf32>
    %135 = tpu.concatenate %134, %133 in 0 : vector<1x128xf32>, vector<1x128xf32> -> vector<2x128xf32>
    %136 = tpu.concatenate %132, %128, %135 in 1 : vector<2x128xf32>, vector<2x128xf32>, vector<2x128xf32> -> vector<2x384xf32>
    %cst_48 = arith.constant dense<0.000000e+00> : vector<2x128xf32>
    %137 = tpu.matmul %136, %129, %cst_48 {dimension_numbers = #tpu.dot_dimension_numbers<[1], [0], [0], [1], [0, 0, 1, 1], [], []>} : vector<2x384xf32>, vector<384x128xf32>, vector<2x128xf32> -> vector<2x128xf32>
    %c1120 = arith.constant 1120 : index
    %c0_49 = arith.constant 0 : index
    %138 = vector.load %arg2[%c1120, %c0_49] : memref<2936x128xf32, #tpu.memory_space<vmem>>, vector<1x128xf32>
    %139 = vector.broadcast %138 : vector<1x128xf32> to vector<2x128xf32>
    %140 = arith.addf %137, %139 : vector<2x128xf32>
    %cst_50 = arith.constant 0.000000e+00 : f32
    %141 = vector.broadcast %cst_50 : f32 to vector<2x128xf32>
    %142 = arith.maximumf %140, %141 : vector<2x128xf32>
    %143 = vector.shape_cast %142 : vector<2x128xf32> to vector<2x1x128xf32>
    %144 = vector.shape_cast %143 : vector<2x1x128xf32> to vector<2x1x128xf32>
    %145 = vector.broadcast %144 : vector<2x1x128xf32> to vector<2x4x128xf32>
    %146 = vector.shape_cast %145 : vector<2x4x128xf32> to vector<8x128xf32>
    %c1128 = arith.constant 1128 : index
    %c0_51 = arith.constant 0 : index
    %147 = vector.load %arg2[%c1128, %c0_51] : memref<2936x128xf32, #tpu.memory_space<vmem>>, vector<384x128xf32>
    %148 = vector.extract_strided_slice %147 {offsets = [0, 0], sizes = [384, 64], strides = [1, 1]} : vector<384x128xf32> to vector<384x64xf32>
    %cst_52 = arith.constant 0.000000e+00 : f32
    %149 = vector.broadcast %cst_52 : f32 to vector<1x128xf32>
    %150 = vector.extract_strided_slice %146 {offsets = [0, 0], sizes = [7, 128], strides = [1, 1]} : vector<8x128xf32> to vector<7x128xf32>
    %151 = tpu.concatenate %149, %150 in 0 : vector<1x128xf32>, vector<7x128xf32> -> vector<8x128xf32>
    %cst_53 = arith.constant 0.000000e+00 : f32
    %152 = vector.broadcast %cst_53 : f32 to vector<1x128xf32>
    %153 = vector.extract_strided_slice %146 {offsets = [1, 0], sizes = [7, 128], strides = [1, 1]} : vector<8x128xf32> to vector<7x128xf32>
    %154 = tpu.concatenate %153, %152 in 0 : vector<7x128xf32>, vector<1x128xf32> -> vector<8x128xf32>
    %155 = tpu.concatenate %151, %146, %154 in 1 : vector<8x128xf32>, vector<8x128xf32>, vector<8x128xf32> -> vector<8x384xf32>
    %cst_54 = arith.constant dense<0.000000e+00> : vector<8x64xf32>
    %156 = tpu.matmul %155, %148, %cst_54 {dimension_numbers = #tpu.dot_dimension_numbers<[1], [0], [0], [1], [0, 0, 1, 1], [], []>} : vector<8x384xf32>, vector<384x64xf32>, vector<8x64xf32> -> vector<8x64xf32>
    %c1512 = arith.constant 1512 : index
    %c0_55 = arith.constant 0 : index
    %157 = vector.load %arg2[%c1512, %c0_55] : memref<2936x128xf32, #tpu.memory_space<vmem>>, vector<1x128xf32>
    %158 = vector.extract_strided_slice %157 {offsets = [0, 0], sizes = [1, 64], strides = [1, 1]} : vector<1x128xf32> to vector<1x64xf32>
    %159 = vector.broadcast %158 : vector<1x64xf32> to vector<8x64xf32>
    %160 = arith.addf %156, %159 : vector<8x64xf32>
    %c1520 = arith.constant 1520 : index
    %c0_56 = arith.constant 0 : index
    %161 = vector.load %arg2[%c1520, %c0_56] : memref<2936x128xf32, #tpu.memory_space<vmem>>, vector<192x128xf32>
    %162 = vector.extract_strided_slice %161 {offsets = [0, 0], sizes = [192, 64], strides = [1, 1]} : vector<192x128xf32> to vector<192x64xf32>
    %cst_57 = arith.constant 0.000000e+00 : f32
    %163 = vector.broadcast %cst_57 : f32 to vector<1x64xf32>
    %164 = vector.extract_strided_slice %160 {offsets = [0, 0], sizes = [7, 64], strides = [1, 1]} : vector<8x64xf32> to vector<7x64xf32>
    %165 = tpu.concatenate %163, %164 in 0 : vector<1x64xf32>, vector<7x64xf32> -> vector<8x64xf32>
    %cst_58 = arith.constant 0.000000e+00 : f32
    %166 = vector.broadcast %cst_58 : f32 to vector<1x64xf32>
    %167 = vector.extract_strided_slice %160 {offsets = [1, 0], sizes = [7, 64], strides = [1, 1]} : vector<8x64xf32> to vector<7x64xf32>
    %168 = tpu.concatenate %167, %166 in 0 : vector<7x64xf32>, vector<1x64xf32> -> vector<8x64xf32>
    %169 = tpu.concatenate %165, %160, %168 in 1 : vector<8x64xf32>, vector<8x64xf32>, vector<8x64xf32> -> vector<8x192xf32>
    %cst_59 = arith.constant dense<0.000000e+00> : vector<8x64xf32>
    %170 = tpu.matmul %169, %162, %cst_59 {dimension_numbers = #tpu.dot_dimension_numbers<[1], [0], [0], [1], [0, 0, 1, 1], [], []>} : vector<8x192xf32>, vector<192x64xf32>, vector<8x64xf32> -> vector<8x64xf32>
    %c1712 = arith.constant 1712 : index
    %c0_60 = arith.constant 0 : index
    %171 = vector.load %arg2[%c1712, %c0_60] : memref<2936x128xf32, #tpu.memory_space<vmem>>, vector<192x128xf32>
    %172 = vector.extract_strided_slice %171 {offsets = [0, 0], sizes = [192, 64], strides = [1, 1]} : vector<192x128xf32> to vector<192x64xf32>
    %cst_61 = arith.constant 0.000000e+00 : f32
    %173 = vector.broadcast %cst_61 : f32 to vector<1x64xf32>
    %174 = vector.extract_strided_slice %112 {offsets = [0, 0], sizes = [7, 64], strides = [1, 1]} : vector<8x64xf32> to vector<7x64xf32>
    %175 = tpu.concatenate %173, %174 in 0 : vector<1x64xf32>, vector<7x64xf32> -> vector<8x64xf32>
    %cst_62 = arith.constant 0.000000e+00 : f32
    %176 = vector.broadcast %cst_62 : f32 to vector<1x64xf32>
    %177 = vector.extract_strided_slice %112 {offsets = [1, 0], sizes = [7, 64], strides = [1, 1]} : vector<8x64xf32> to vector<7x64xf32>
    %178 = tpu.concatenate %177, %176 in 0 : vector<7x64xf32>, vector<1x64xf32> -> vector<8x64xf32>
    %179 = tpu.concatenate %175, %112, %178 in 1 : vector<8x64xf32>, vector<8x64xf32>, vector<8x64xf32> -> vector<8x192xf32>
    %cst_63 = arith.constant dense<0.000000e+00> : vector<8x64xf32>
    %180 = tpu.matmul %179, %172, %cst_63 {dimension_numbers = #tpu.dot_dimension_numbers<[1], [0], [0], [1], [0, 0, 1, 1], [], []>} : vector<8x192xf32>, vector<192x64xf32>, vector<8x64xf32> -> vector<8x64xf32>
    %181 = arith.addf %170, %180 : vector<8x64xf32>
    %c1904 = arith.constant 1904 : index
    %c0_64 = arith.constant 0 : index
    %182 = vector.load %arg2[%c1904, %c0_64] : memref<2936x128xf32, #tpu.memory_space<vmem>>, vector<1x128xf32>
    %183 = vector.extract_strided_slice %182 {offsets = [0, 0], sizes = [1, 64], strides = [1, 1]} : vector<1x128xf32> to vector<1x64xf32>
    %184 = vector.broadcast %183 : vector<1x64xf32> to vector<8x64xf32>
    %185 = arith.addf %181, %184 : vector<8x64xf32>
    %cst_65 = arith.constant 0.000000e+00 : f32
    %186 = vector.broadcast %cst_65 : f32 to vector<8x64xf32>
    %187 = arith.maximumf %185, %186 : vector<8x64xf32>
    %c1912 = arith.constant 1912 : index
    %c0_66 = arith.constant 0 : index
    %188 = vector.load %arg2[%c1912, %c0_66] : memref<2936x128xf32, #tpu.memory_space<vmem>>, vector<192x128xf32>
    %189 = vector.extract_strided_slice %188 {offsets = [0, 0], sizes = [192, 64], strides = [1, 1]} : vector<192x128xf32> to vector<192x64xf32>
    %cst_67 = arith.constant 0.000000e+00 : f32
    %190 = vector.broadcast %cst_67 : f32 to vector<1x64xf32>
    %191 = vector.extract_strided_slice %187 {offsets = [0, 0], sizes = [7, 64], strides = [1, 1]} : vector<8x64xf32> to vector<7x64xf32>
    %192 = tpu.concatenate %190, %191 in 0 : vector<1x64xf32>, vector<7x64xf32> -> vector<8x64xf32>
    %cst_68 = arith.constant 0.000000e+00 : f32
    %193 = vector.broadcast %cst_68 : f32 to vector<1x64xf32>
    %194 = vector.extract_strided_slice %187 {offsets = [1, 0], sizes = [7, 64], strides = [1, 1]} : vector<8x64xf32> to vector<7x64xf32>
    %195 = tpu.concatenate %194, %193 in 0 : vector<7x64xf32>, vector<1x64xf32> -> vector<8x64xf32>
    %196 = tpu.concatenate %192, %187, %195 in 1 : vector<8x64xf32>, vector<8x64xf32>, vector<8x64xf32> -> vector<8x192xf32>
    %cst_69 = arith.constant dense<0.000000e+00> : vector<8x64xf32>
    %197 = tpu.matmul %196, %189, %cst_69 {dimension_numbers = #tpu.dot_dimension_numbers<[1], [0], [0], [1], [0, 0, 1, 1], [], []>} : vector<8x192xf32>, vector<192x64xf32>, vector<8x64xf32> -> vector<8x64xf32>
    %c2104 = arith.constant 2104 : index
    %c0_70 = arith.constant 0 : index
    %198 = vector.load %arg2[%c2104, %c0_70] : memref<2936x128xf32, #tpu.memory_space<vmem>>, vector<1x128xf32>
    %199 = vector.extract_strided_slice %198 {offsets = [0, 0], sizes = [1, 64], strides = [1, 1]} : vector<1x128xf32> to vector<1x64xf32>
    %200 = vector.broadcast %199 : vector<1x64xf32> to vector<8x64xf32>
    %201 = arith.addf %197, %200 : vector<8x64xf32>
    %cst_71 = arith.constant 0.000000e+00 : f32
    %202 = vector.broadcast %cst_71 : f32 to vector<8x64xf32>
    %203 = arith.maximumf %201, %202 : vector<8x64xf32>
    %204 = vector.shape_cast %203 : vector<8x64xf32> to vector<8x1x64xf32>
    %205 = vector.shape_cast %204 : vector<8x1x64xf32> to vector<8x1x64xf32>
    %206 = vector.broadcast %205 : vector<8x1x64xf32> to vector<8x4x64xf32>
    %207 = vector.shape_cast %206 : vector<8x4x64xf32> to vector<32x64xf32>
    %c2112 = arith.constant 2112 : index
    %c0_72 = arith.constant 0 : index
    %208 = vector.load %arg2[%c2112, %c0_72] : memref<2936x128xf32, #tpu.memory_space<vmem>>, vector<192x128xf32>
    %209 = vector.extract_strided_slice %208 {offsets = [0, 0], sizes = [192, 32], strides = [1, 1]} : vector<192x128xf32> to vector<192x32xf32>
    %cst_73 = arith.constant 0.000000e+00 : f32
    %210 = vector.broadcast %cst_73 : f32 to vector<1x64xf32>
    %211 = vector.extract_strided_slice %207 {offsets = [0, 0], sizes = [31, 64], strides = [1, 1]} : vector<32x64xf32> to vector<31x64xf32>
    %212 = tpu.concatenate %210, %211 in 0 : vector<1x64xf32>, vector<31x64xf32> -> vector<32x64xf32>
    %cst_74 = arith.constant 0.000000e+00 : f32
    %213 = vector.broadcast %cst_74 : f32 to vector<1x64xf32>
    %214 = vector.extract_strided_slice %207 {offsets = [1, 0], sizes = [31, 64], strides = [1, 1]} : vector<32x64xf32> to vector<31x64xf32>
    %215 = tpu.concatenate %214, %213 in 0 : vector<31x64xf32>, vector<1x64xf32> -> vector<32x64xf32>
    %216 = tpu.concatenate %212, %207, %215 in 1 : vector<32x64xf32>, vector<32x64xf32>, vector<32x64xf32> -> vector<32x192xf32>
    %cst_75 = arith.constant dense<0.000000e+00> : vector<32x32xf32>
    %217 = tpu.matmul %216, %209, %cst_75 {dimension_numbers = #tpu.dot_dimension_numbers<[1], [0], [0], [1], [0, 0, 1, 1], [], []>} : vector<32x192xf32>, vector<192x32xf32>, vector<32x32xf32> -> vector<32x32xf32>
    %c2304 = arith.constant 2304 : index
    %c0_76 = arith.constant 0 : index
    %218 = vector.load %arg2[%c2304, %c0_76] : memref<2936x128xf32, #tpu.memory_space<vmem>>, vector<1x128xf32>
    %219 = vector.extract_strided_slice %218 {offsets = [0, 0], sizes = [1, 32], strides = [1, 1]} : vector<1x128xf32> to vector<1x32xf32>
    %220 = vector.broadcast %219 : vector<1x32xf32> to vector<32x32xf32>
    %221 = arith.addf %217, %220 : vector<32x32xf32>
    %c2312 = arith.constant 2312 : index
    %c0_77 = arith.constant 0 : index
    %222 = vector.load %arg2[%c2312, %c0_77] : memref<2936x128xf32, #tpu.memory_space<vmem>>, vector<96x128xf32>
    %223 = vector.extract_strided_slice %222 {offsets = [0, 0], sizes = [96, 32], strides = [1, 1]} : vector<96x128xf32> to vector<96x32xf32>
    %cst_78 = arith.constant 0.000000e+00 : f32
    %224 = vector.broadcast %cst_78 : f32 to vector<1x32xf32>
    %225 = vector.extract_strided_slice %221 {offsets = [0, 0], sizes = [31, 32], strides = [1, 1]} : vector<32x32xf32> to vector<31x32xf32>
    %226 = tpu.concatenate %224, %225 in 0 : vector<1x32xf32>, vector<31x32xf32> -> vector<32x32xf32>
    %cst_79 = arith.constant 0.000000e+00 : f32
    %227 = vector.broadcast %cst_79 : f32 to vector<1x32xf32>
    %228 = vector.extract_strided_slice %221 {offsets = [1, 0], sizes = [31, 32], strides = [1, 1]} : vector<32x32xf32> to vector<31x32xf32>
    %229 = tpu.concatenate %228, %227 in 0 : vector<31x32xf32>, vector<1x32xf32> -> vector<32x32xf32>
    %230 = tpu.concatenate %226, %221, %229 in 1 : vector<32x32xf32>, vector<32x32xf32>, vector<32x32xf32> -> vector<32x96xf32>
    %cst_80 = arith.constant dense<0.000000e+00> : vector<32x32xf32>
    %231 = tpu.matmul %230, %223, %cst_80 {dimension_numbers = #tpu.dot_dimension_numbers<[1], [0], [0], [1], [0, 0, 1, 1], [], []>} : vector<32x96xf32>, vector<96x32xf32>, vector<32x32xf32> -> vector<32x32xf32>
    %c2408 = arith.constant 2408 : index
    %c0_81 = arith.constant 0 : index
    %232 = vector.load %arg2[%c2408, %c0_81] : memref<2936x128xf32, #tpu.memory_space<vmem>>, vector<96x128xf32>
    %233 = vector.extract_strided_slice %232 {offsets = [0, 0], sizes = [96, 32], strides = [1, 1]} : vector<96x128xf32> to vector<96x32xf32>
    %cst_82 = arith.constant 0.000000e+00 : f32
    %234 = vector.broadcast %cst_82 : f32 to vector<1x32xf32>
    %235 = vector.extract_strided_slice %78 {offsets = [0, 0], sizes = [31, 32], strides = [1, 1]} : vector<32x32xf32> to vector<31x32xf32>
    %236 = tpu.concatenate %234, %235 in 0 : vector<1x32xf32>, vector<31x32xf32> -> vector<32x32xf32>
    %cst_83 = arith.constant 0.000000e+00 : f32
    %237 = vector.broadcast %cst_83 : f32 to vector<1x32xf32>
    %238 = vector.extract_strided_slice %78 {offsets = [1, 0], sizes = [31, 32], strides = [1, 1]} : vector<32x32xf32> to vector<31x32xf32>
    %239 = tpu.concatenate %238, %237 in 0 : vector<31x32xf32>, vector<1x32xf32> -> vector<32x32xf32>
    %240 = tpu.concatenate %236, %78, %239 in 1 : vector<32x32xf32>, vector<32x32xf32>, vector<32x32xf32> -> vector<32x96xf32>
    %cst_84 = arith.constant dense<0.000000e+00> : vector<32x32xf32>
    %241 = tpu.matmul %240, %233, %cst_84 {dimension_numbers = #tpu.dot_dimension_numbers<[1], [0], [0], [1], [0, 0, 1, 1], [], []>} : vector<32x96xf32>, vector<96x32xf32>, vector<32x32xf32> -> vector<32x32xf32>
    %242 = arith.addf %231, %241 : vector<32x32xf32>
    %c2504 = arith.constant 2504 : index
    %c0_85 = arith.constant 0 : index
    %243 = vector.load %arg2[%c2504, %c0_85] : memref<2936x128xf32, #tpu.memory_space<vmem>>, vector<1x128xf32>
    %244 = vector.extract_strided_slice %243 {offsets = [0, 0], sizes = [1, 32], strides = [1, 1]} : vector<1x128xf32> to vector<1x32xf32>
    %245 = vector.broadcast %244 : vector<1x32xf32> to vector<32x32xf32>
    %246 = arith.addf %242, %245 : vector<32x32xf32>
    %cst_86 = arith.constant 0.000000e+00 : f32
    %247 = vector.broadcast %cst_86 : f32 to vector<32x32xf32>
    %248 = arith.maximumf %246, %247 : vector<32x32xf32>
    %c2512 = arith.constant 2512 : index
    %c0_87 = arith.constant 0 : index
    %249 = vector.load %arg2[%c2512, %c0_87] : memref<2936x128xf32, #tpu.memory_space<vmem>>, vector<96x128xf32>
    %250 = vector.extract_strided_slice %249 {offsets = [0, 0], sizes = [96, 32], strides = [1, 1]} : vector<96x128xf32> to vector<96x32xf32>
    %cst_88 = arith.constant 0.000000e+00 : f32
    %251 = vector.broadcast %cst_88 : f32 to vector<1x32xf32>
    %252 = vector.extract_strided_slice %248 {offsets = [0, 0], sizes = [31, 32], strides = [1, 1]} : vector<32x32xf32> to vector<31x32xf32>
    %253 = tpu.concatenate %251, %252 in 0 : vector<1x32xf32>, vector<31x32xf32> -> vector<32x32xf32>
    %cst_89 = arith.constant 0.000000e+00 : f32
    %254 = vector.broadcast %cst_89 : f32 to vector<1x32xf32>
    %255 = vector.extract_strided_slice %248 {offsets = [1, 0], sizes = [31, 32], strides = [1, 1]} : vector<32x32xf32> to vector<31x32xf32>
    %256 = tpu.concatenate %255, %254 in 0 : vector<31x32xf32>, vector<1x32xf32> -> vector<32x32xf32>
    %257 = tpu.concatenate %253, %248, %256 in 1 : vector<32x32xf32>, vector<32x32xf32>, vector<32x32xf32> -> vector<32x96xf32>
    %cst_90 = arith.constant dense<0.000000e+00> : vector<32x32xf32>
    %258 = tpu.matmul %257, %250, %cst_90 {dimension_numbers = #tpu.dot_dimension_numbers<[1], [0], [0], [1], [0, 0, 1, 1], [], []>} : vector<32x96xf32>, vector<96x32xf32>, vector<32x32xf32> -> vector<32x32xf32>
    %c2608 = arith.constant 2608 : index
    %c0_91 = arith.constant 0 : index
    %259 = vector.load %arg2[%c2608, %c0_91] : memref<2936x128xf32, #tpu.memory_space<vmem>>, vector<1x128xf32>
    %260 = vector.extract_strided_slice %259 {offsets = [0, 0], sizes = [1, 32], strides = [1, 1]} : vector<1x128xf32> to vector<1x32xf32>
    %261 = vector.broadcast %260 : vector<1x32xf32> to vector<32x32xf32>
    %262 = arith.addf %258, %261 : vector<32x32xf32>
    %cst_92 = arith.constant 0.000000e+00 : f32
    %263 = vector.broadcast %cst_92 : f32 to vector<32x32xf32>
    %264 = arith.maximumf %262, %263 : vector<32x32xf32>
    %265 = vector.shape_cast %264 : vector<32x32xf32> to vector<32x1x32xf32>
    %266 = vector.shape_cast %265 : vector<32x1x32xf32> to vector<32x1x32xf32>
    %267 = vector.broadcast %266 : vector<32x1x32xf32> to vector<32x4x32xf32>
    %268 = vector.shape_cast %267 : vector<32x4x32xf32> to vector<128x32xf32>
    %c2616 = arith.constant 2616 : index
    %c0_93 = arith.constant 0 : index
    %269 = vector.load %arg2[%c2616, %c0_93] : memref<2936x128xf32, #tpu.memory_space<vmem>>, vector<96x128xf32>
    %270 = vector.extract_strided_slice %269 {offsets = [0, 0], sizes = [96, 16], strides = [1, 1]} : vector<96x128xf32> to vector<96x16xf32>
    %cst_94 = arith.constant 0.000000e+00 : f32
    %271 = vector.broadcast %cst_94 : f32 to vector<1x32xf32>
    %272 = vector.extract_strided_slice %268 {offsets = [0, 0], sizes = [127, 32], strides = [1, 1]} : vector<128x32xf32> to vector<127x32xf32>
    %273 = tpu.concatenate %271, %272 in 0 : vector<1x32xf32>, vector<127x32xf32> -> vector<128x32xf32>
    %cst_95 = arith.constant 0.000000e+00 : f32
    %274 = vector.broadcast %cst_95 : f32 to vector<1x32xf32>
    %275 = vector.extract_strided_slice %268 {offsets = [1, 0], sizes = [127, 32], strides = [1, 1]} : vector<128x32xf32> to vector<127x32xf32>
    %276 = tpu.concatenate %275, %274 in 0 : vector<127x32xf32>, vector<1x32xf32> -> vector<128x32xf32>
    %277 = tpu.concatenate %273, %268, %276 in 1 : vector<128x32xf32>, vector<128x32xf32>, vector<128x32xf32> -> vector<128x96xf32>
    %cst_96 = arith.constant dense<0.000000e+00> : vector<128x16xf32>
    %278 = tpu.matmul %277, %270, %cst_96 {dimension_numbers = #tpu.dot_dimension_numbers<[1], [0], [0], [1], [0, 0, 1, 1], [], []>} : vector<128x96xf32>, vector<96x16xf32>, vector<128x16xf32> -> vector<128x16xf32>
    %c2712 = arith.constant 2712 : index
    %c0_97 = arith.constant 0 : index
    %279 = vector.load %arg2[%c2712, %c0_97] : memref<2936x128xf32, #tpu.memory_space<vmem>>, vector<1x128xf32>
    %280 = vector.extract_strided_slice %279 {offsets = [0, 0], sizes = [1, 16], strides = [1, 1]} : vector<1x128xf32> to vector<1x16xf32>
    %281 = vector.broadcast %280 : vector<1x16xf32> to vector<128x16xf32>
    %282 = arith.addf %278, %281 : vector<128x16xf32>
    %c2720 = arith.constant 2720 : index
    %c0_98 = arith.constant 0 : index
    %283 = vector.load %arg2[%c2720, %c0_98] : memref<2936x128xf32, #tpu.memory_space<vmem>>, vector<48x128xf32>
    %284 = vector.extract_strided_slice %283 {offsets = [0, 0], sizes = [48, 16], strides = [1, 1]} : vector<48x128xf32> to vector<48x16xf32>
    %cst_99 = arith.constant 0.000000e+00 : f32
    %285 = vector.broadcast %cst_99 : f32 to vector<1x16xf32>
    %286 = vector.extract_strided_slice %282 {offsets = [0, 0], sizes = [127, 16], strides = [1, 1]} : vector<128x16xf32> to vector<127x16xf32>
    %287 = tpu.concatenate %285, %286 in 0 : vector<1x16xf32>, vector<127x16xf32> -> vector<128x16xf32>
    %cst_100 = arith.constant 0.000000e+00 : f32
    %288 = vector.broadcast %cst_100 : f32 to vector<1x16xf32>
    %289 = vector.extract_strided_slice %282 {offsets = [1, 0], sizes = [127, 16], strides = [1, 1]} : vector<128x16xf32> to vector<127x16xf32>
    %290 = tpu.concatenate %289, %288 in 0 : vector<127x16xf32>, vector<1x16xf32> -> vector<128x16xf32>
    %291 = tpu.concatenate %287, %282, %290 in 1 : vector<128x16xf32>, vector<128x16xf32>, vector<128x16xf32> -> vector<128x48xf32>
    %cst_101 = arith.constant dense<0.000000e+00> : vector<128x16xf32>
    %292 = tpu.matmul %291, %284, %cst_101 {dimension_numbers = #tpu.dot_dimension_numbers<[1], [0], [0], [1], [0, 0, 1, 1], [], []>} : vector<128x48xf32>, vector<48x16xf32>, vector<128x16xf32> -> vector<128x16xf32>
    %c2768 = arith.constant 2768 : index
    %c0_102 = arith.constant 0 : index
    %293 = vector.load %arg2[%c2768, %c0_102] : memref<2936x128xf32, #tpu.memory_space<vmem>>, vector<48x128xf32>
    %294 = vector.extract_strided_slice %293 {offsets = [0, 0], sizes = [48, 16], strides = [1, 1]} : vector<48x128xf32> to vector<48x16xf32>
    %cst_103 = arith.constant 0.000000e+00 : f32
    %295 = vector.broadcast %cst_103 : f32 to vector<1x16xf32>
    %296 = vector.extract_strided_slice %44 {offsets = [0, 0], sizes = [127, 16], strides = [1, 1]} : vector<128x16xf32> to vector<127x16xf32>
    %297 = tpu.concatenate %295, %296 in 0 : vector<1x16xf32>, vector<127x16xf32> -> vector<128x16xf32>
    %cst_104 = arith.constant 0.000000e+00 : f32
    %298 = vector.broadcast %cst_104 : f32 to vector<1x16xf32>
    %299 = vector.extract_strided_slice %44 {offsets = [1, 0], sizes = [127, 16], strides = [1, 1]} : vector<128x16xf32> to vector<127x16xf32>
    %300 = tpu.concatenate %299, %298 in 0 : vector<127x16xf32>, vector<1x16xf32> -> vector<128x16xf32>
    %301 = tpu.concatenate %297, %44, %300 in 1 : vector<128x16xf32>, vector<128x16xf32>, vector<128x16xf32> -> vector<128x48xf32>
    %cst_105 = arith.constant dense<0.000000e+00> : vector<128x16xf32>
    %302 = tpu.matmul %301, %294, %cst_105 {dimension_numbers = #tpu.dot_dimension_numbers<[1], [0], [0], [1], [0, 0, 1, 1], [], []>} : vector<128x48xf32>, vector<48x16xf32>, vector<128x16xf32> -> vector<128x16xf32>
    %303 = arith.addf %292, %302 : vector<128x16xf32>
    %c2816 = arith.constant 2816 : index
    %c0_106 = arith.constant 0 : index
    %304 = vector.load %arg2[%c2816, %c0_106] : memref<2936x128xf32, #tpu.memory_space<vmem>>, vector<1x128xf32>
    %305 = vector.extract_strided_slice %304 {offsets = [0, 0], sizes = [1, 16], strides = [1, 1]} : vector<1x128xf32> to vector<1x16xf32>
    %306 = vector.broadcast %305 : vector<1x16xf32> to vector<128x16xf32>
    %307 = arith.addf %303, %306 : vector<128x16xf32>
    %cst_107 = arith.constant 0.000000e+00 : f32
    %308 = vector.broadcast %cst_107 : f32 to vector<128x16xf32>
    %309 = arith.maximumf %307, %308 : vector<128x16xf32>
    %c2824 = arith.constant 2824 : index
    %c0_108 = arith.constant 0 : index
    %310 = vector.load %arg2[%c2824, %c0_108] : memref<2936x128xf32, #tpu.memory_space<vmem>>, vector<48x128xf32>
    %311 = vector.extract_strided_slice %310 {offsets = [0, 0], sizes = [48, 16], strides = [1, 1]} : vector<48x128xf32> to vector<48x16xf32>
    %cst_109 = arith.constant 0.000000e+00 : f32
    %312 = vector.broadcast %cst_109 : f32 to vector<1x16xf32>
    %313 = vector.extract_strided_slice %309 {offsets = [0, 0], sizes = [127, 16], strides = [1, 1]} : vector<128x16xf32> to vector<127x16xf32>
    %314 = tpu.concatenate %312, %313 in 0 : vector<1x16xf32>, vector<127x16xf32> -> vector<128x16xf32>
    %cst_110 = arith.constant 0.000000e+00 : f32
    %315 = vector.broadcast %cst_110 : f32 to vector<1x16xf32>
    %316 = vector.extract_strided_slice %309 {offsets = [1, 0], sizes = [127, 16], strides = [1, 1]} : vector<128x16xf32> to vector<127x16xf32>
    %317 = tpu.concatenate %316, %315 in 0 : vector<127x16xf32>, vector<1x16xf32> -> vector<128x16xf32>
    %318 = tpu.concatenate %314, %309, %317 in 1 : vector<128x16xf32>, vector<128x16xf32>, vector<128x16xf32> -> vector<128x48xf32>
    %cst_111 = arith.constant dense<0.000000e+00> : vector<128x16xf32>
    %319 = tpu.matmul %318, %311, %cst_111 {dimension_numbers = #tpu.dot_dimension_numbers<[1], [0], [0], [1], [0, 0, 1, 1], [], []>} : vector<128x48xf32>, vector<48x16xf32>, vector<128x16xf32> -> vector<128x16xf32>
    %c2872 = arith.constant 2872 : index
    %c0_112 = arith.constant 0 : index
    %320 = vector.load %arg2[%c2872, %c0_112] : memref<2936x128xf32, #tpu.memory_space<vmem>>, vector<1x128xf32>
    %321 = vector.extract_strided_slice %320 {offsets = [0, 0], sizes = [1, 16], strides = [1, 1]} : vector<1x128xf32> to vector<1x16xf32>
    %322 = vector.broadcast %321 : vector<1x16xf32> to vector<128x16xf32>
    %323 = arith.addf %319, %322 : vector<128x16xf32>
    %cst_113 = arith.constant 0.000000e+00 : f32
    %324 = vector.broadcast %cst_113 : f32 to vector<128x16xf32>
    %325 = arith.maximumf %323, %324 : vector<128x16xf32>
    %c2880 = arith.constant 2880 : index
    %c0_114 = arith.constant 0 : index
    %326 = vector.load %arg2[%c2880, %c0_114] : memref<2936x128xf32, #tpu.memory_space<vmem>>, vector<48x128xf32>
    %327 = vector.extract_strided_slice %326 {offsets = [0, 0], sizes = [48, 1], strides = [1, 1]} : vector<48x128xf32> to vector<48x1xf32>
    %cst_115 = arith.constant 0.000000e+00 : f32
    %328 = vector.broadcast %cst_115 : f32 to vector<1x16xf32>
    %329 = vector.extract_strided_slice %325 {offsets = [0, 0], sizes = [127, 16], strides = [1, 1]} : vector<128x16xf32> to vector<127x16xf32>
    %330 = tpu.concatenate %328, %329 in 0 : vector<1x16xf32>, vector<127x16xf32> -> vector<128x16xf32>
    %cst_116 = arith.constant 0.000000e+00 : f32
    %331 = vector.broadcast %cst_116 : f32 to vector<1x16xf32>
    %332 = vector.extract_strided_slice %325 {offsets = [1, 0], sizes = [127, 16], strides = [1, 1]} : vector<128x16xf32> to vector<127x16xf32>
    %333 = tpu.concatenate %332, %331 in 0 : vector<127x16xf32>, vector<1x16xf32> -> vector<128x16xf32>
    %334 = tpu.concatenate %330, %325, %333 in 1 : vector<128x16xf32>, vector<128x16xf32>, vector<128x16xf32> -> vector<128x48xf32>
    %cst_117 = arith.constant dense<0.000000e+00> : vector<128x1xf32>
    %335 = tpu.matmul %334, %327, %cst_117 {dimension_numbers = #tpu.dot_dimension_numbers<[1], [0], [0], [1], [0, 0, 1, 1], [], []>} : vector<128x48xf32>, vector<48x1xf32>, vector<128x1xf32> -> vector<128x1xf32>
    %c2928 = arith.constant 2928 : index
    %c0_118 = arith.constant 0 : index
    %336 = vector.load %arg2[%c2928, %c0_118] : memref<2936x128xf32, #tpu.memory_space<vmem>>, vector<1x128xf32>
    %337 = vector.extract_strided_slice %336 {offsets = [0, 0], sizes = [1, 1], strides = [1, 1]} : vector<1x128xf32> to vector<1x1xf32>
    %338 = vector.broadcast %337 : vector<1x1xf32> to vector<128x1xf32>
    %339 = arith.addf %335, %338 : vector<128x1xf32>
    %340 = arith.negf %339 : vector<128x1xf32>
    %341 = math.exp %340 : vector<128x1xf32>
    %cst_119 = arith.constant 1.000000e+00 : f32
    %342 = vector.broadcast %cst_119 : f32 to vector<128x1xf32>
    %343 = arith.addf %342, %341 : vector<128x1xf32>
    %344 = arith.divf %342, %343 : vector<128x1xf32>
    %c0_120 = arith.constant 0 : index
    %c0_121 = arith.constant 0 : index
    %345 = vector.load %arg3[%c0_120, %c0_121] : memref<128x1xf32, #tpu.memory_space<vmem>>, vector<128x1xf32>
    tpu.vector_store %arg3[%c0_120, %c0_121], %344 {strides = array<i32>} : memref<128x1xf32, #tpu.memory_space<vmem>>, vector<128x1xf32>,
    return
  }
  func.func @transform_0(%arg0: i32) -> (i32, i32) {
    %c0_i32 = arith.constant 0 : i32
    %c0_i32_0 = arith.constant 0 : i32
    return %arg0, %c0_i32 : i32, i32
  }
  func.func @transform_1(%arg0: i32) -> (i32, i32) {
    %c0_i32 = arith.constant 0 : i32
    %c0_i32_0 = arith.constant 0 : i32
    %c0_i32_1 = arith.constant 0 : i32
    return %c0_i32, %c0_i32_0 : i32, i32
  }
  func.func @transform_2(%arg0: i32) -> (i32, i32) {
    %c0_i32 = arith.constant 0 : i32
    %c0_i32_0 = arith.constant 0 : i32
    return %arg0, %c0_i32 : i32, i32
  }
}

</mosaic_0001>

<llo_original>
// kernel: munet_forward_pallas.1
$region0: #{munet_forward_pallas.1}
  #allocation0 [shape = 'u32[]', space=smem, size = 0x4, offset = 0x4, fixed_abs, tag = 'smem constant byte address 0x4 - core index']
  #allocation1 [shape = 'u32[144,128]{1,0:T(1,128)}', space=vmem, size = 0x12000, scoped, tag = 'internal scratch']
  %s0 = inlined_call_operand.vmem [shape: f32[256,1], index: 0, kind: input, shape index: {}]
  %s1 = inlined_call_operand.vmem [shape: f32[2936,128], index: 1, kind: input, shape index: {}]
  %s2 = inlined_call_operand.vmem [shape: f32[256,1], index: 2, kind: output, shape index: {}]
  %s3 = sld [smem:[#allocation0]]
  $region41: #{munet_forward_pallas.1} parent=0
    _
  %s5 = ssub.s32 1, %s3
  %s6 = scalar_select 0, %s5, %s3
  loop: start=0, step=1, limit=4
  $region2: #{munet_forward_pallas.1} parent=0 // loop_pre_header
    _
  $region3: #{munet_forward_pallas.1} parent=0 // loop_header
    %s8 = sphi 0, %s12
    %p9 = scmp.ge.s32.totalorder %s8, 4
    %s18 = sphi 0, %s20
    %s21 = sphi 0, %s18
    %s22 = sphi 0, %s21
    %s38 = sphi 0, %s22
    %s42 = sphi 0, %s42
    %s44 = sphi 0, %s42
    %s45 = sphi 0, %s44
    %s59 = sphi 0, %s45
    %s65 = sphi 0, %s67
    %s68 = sphi 0, %s65
    %s69 = sphi 0, %s68
    %s85 = sphi 0, %s69
  $region4: #{munet_forward_pallas.1} parent=0 // loop_header_branch
    %11 = sbr.rel (%p9) target = $region8
  $region5: #{munet_forward_pallas.1} parent=0 // loop_body
    %s13 = ssub.s32 %s8, 1
    %s14 = ssub.s32 %s8, 2
    %s15 = sadd.s32 %s8, 1
    %s16 = ssub.s32 %s8, %s15
    %p17 = scmp.eq.s32.totalorder %s16, 0
    %s19 = sadd.s32 %s18, 1
    %s20 = scalar_select %p17, %s18, %s19
    %p23 = pneg %p17
    %p24 = scmp.eq.s32.totalorder %s8, 1
    %p25 = por %p23, %p24
    %p26 = scmp.ne.s32.totalorder %s18, %s21
    %p27 = scmp.eq.s32.totalorder %s8, 0
    %p28 = por %p26, %p27
    %p29 = scmp.ne.s32.totalorder %s18, %s21
    %p30 = scmp.eq.s32.totalorder %s13, 1
    %p31 = por %p29, %p30
    %p32 = scmp.ne.s32.totalorder %s21, %s22
    %p33 = scmp.eq.s32.totalorder %s13, 0
    %p34 = por %p32, %p33
    %p35 = scmp.ne.s32.totalorder %s21, %s22
    %p36 = scmp.eq.s32.totalorder %s14, 1
    %p37 = por %p35, %p36
    %p39 = scmp.ne.s32.totalorder %s22, %s38
    %p40 = scmp.eq.s32.totalorder %s14, 0
    %p41 = por %p39, %p40
    %s43 = sadd.s32 %s42, 1
    %p46 = scmp.eq.s32.totalorder %s8, 1
    %p47 = scmp.ne.s32.totalorder %s42, %s44
    %p48 = scmp.eq.s32.totalorder %s8, 0
    %p49 = por %p47, %p48
    %p50 = scmp.ne.s32.totalorder %s42, %s44
    %p51 = scmp.eq.s32.totalorder %s13, 1
    %p52 = por %p50, %p51
    %p53 = scmp.ne.s32.totalorder %s44, %s45
    %p54 = scmp.eq.s32.totalorder %s13, 0
    %p55 = por %p53, %p54
    %p56 = scmp.ne.s32.totalorder %s44, %s45
    %p57 = scmp.eq.s32.totalorder %s14, 1
    %p58 = por %p56, %p57
    %p60 = scmp.ne.s32.totalorder %s45, %s59
    %p61 = scmp.eq.s32.totalorder %s14, 0
    %p62 = por %p60, %p61
    %s63 = ssub.s32 %s8, %s15
    %p64 = scmp.eq.s32.totalorder %s63, 0
    %s66 = sadd.s32 %s65, 1
    %s67 = scalar_select %p64, %s65, %s66
    %p70 = pneg %p64
    %p71 = scmp.eq.s32.totalorder %s8, 1
    %p72 = por %p70, %p71
    %p73 = scmp.ne.s32.totalorder %s65, %s68
    %p74 = scmp.eq.s32.totalorder %s8, 0
    %p75 = por %p73, %p74
    %p76 = scmp.ne.s32.totalorder %s65, %s68
    %p77 = scmp.eq.s32.totalorder %s13, 1
    %p78 = por %p76, %p77
    %p79 = scmp.ne.s32.totalorder %s68, %s69
    %p80 = scmp.eq.s32.totalorder %s13, 0
    %p81 = por %p79, %p80
    %p82 = scmp.ne.s32.totalorder %s68, %s69
    %p83 = scmp.eq.s32.totalorder %s14, 1
    %p84 = por %p82, %p83
    %p86 = scmp.ne.s32.totalorder %s69, %s85
    %p87 = scmp.eq.s32.totalorder %s14, 0
    %p88 = por %p86, %p87
    %p89 = scmp.le.s32.totalorder 1, %s8
    %p90 = scmp.lt.s32.totalorder %s8, 3
    %p91 = pnand %p89, %p90
    %p92 = pneg %p91
    // Predicated region
    $region9: #{munet_forward_pallas.1} parent=5 // pred_check
      _
    $region10: #{munet_forward_pallas.1} parent=5 // pred_check_branch
      %94 = sbr.rel (%p91) target = $region12
    $region11: #{munet_forward_pallas.1} parent=5 // pred_region
      %s95 = ssub.s32 %s8, 1
      // Predicated region
      $region13: #{munet_forward_pallas.1} parent=11 // pred_check
        %p96 = pneg %p55
      $region14: #{munet_forward_pallas.1} parent=11 // pred_check_branch
        %98 = sbr.rel (%p96) target = $region16
      $region15: #{munet_forward_pallas.1} parent=11 // pred_region
        _
      $region16: #{munet_forward_pallas.1} parent=11 // pred_fallthru
        _
    $region12: #{munet_forward_pallas.1} parent=5 // pred_fallthru
      _
    %p99 = scmp.lt.s32.totalorder %s8, 2
    // Predicated region
    $region17: #{munet_forward_pallas.1} parent=5 // pred_check
      %p100 = pneg %p99
    $region18: #{munet_forward_pallas.1} parent=5 // pred_check_branch
      %102 = sbr.rel (%p100) target = $region20
    $region19: #{munet_forward_pallas.1} parent=5 // pred_region
      // Predicated region
      $region21: #{munet_forward_pallas.1} parent=19 // pred_check
        %p103 = pneg %p28
      $region22: #{munet_forward_pallas.1} parent=19 // pred_check_branch
        %105 = sbr.rel (%p103) target = $region24
      $region23: #{munet_forward_pallas.1} parent=19 // pred_region
        %s106 = smul.u32 16, %s8
        %p107 = scmp.lt.s32.totalorder %s106, 31
        %s108 = scalar_select %p107, %s106, 31
        %s109 = smul.addr %s108, 8
        %s110 = scalar_lea.vmem %s0, %s109
        %s111 = smul.u32 16, %s8
      $region24: #{munet_forward_pallas.1} parent=19 // pred_fallthru
        _
    $region20: #{munet_forward_pallas.1} parent=5 // pred_fallthru
      _
    %p112 = scmp.le.s32.totalorder 1, %s8
    %p113 = scmp.lt.s32.totalorder %s8, 3
    %p114 = pnand %p112, %p113
    %p115 = pneg %p114
    // Predicated region
    $region25: #{munet_forward_pallas.1} parent=5 // pred_check
      _
    $region26: #{munet_forward_pallas.1} parent=5 // pred_check_branch
      %117 = sbr.rel (%p114) target = $region28
    $region27: #{munet_forward_pallas.1} parent=5 // pred_region
      %s118 = ssub.s32 %s8, 1
      %s119 = smul.u32 16, %s13
      %p120 = scmp.lt.s32.totalorder %s119, 31
      %s121 = scalar_select %p120, %s119, 31
      %s122 = smul.addr %s121, 8
      %s123 = scalar_lea.vmem %s0, %s122
      %p124 = pneg %p34
      %p125 = pneg %p31
      %p126 = pneg %p55
      %p127 = pneg %p52
      %p128 = pneg %p81
      %p129 = pneg %p78
      %s130 = smul.u32 16, %s13
      %p131 = scmp.lt.s32.totalorder %s130, 31
      %s132 = scalar_select %p131, %s130, 31
      %s133 = smul.addr %s132, 8
      %s134 = scalar_lea.vmem %s2, %s133
      %s135 = smul.u32 16, %s13
      %p136 = scmp.lt.s32.totalorder %s135, 31
      %s137 = scalar_select %p136, %s135, 31
      %s138 = smul.addr %s137, 8
      %s139 = scalar_lea.vmem %s0, %s138
      %s140 = smul.u32 16, %s13
      %s141 = smul.u32 16, %s13
      %p142 = scmp.lt.s32.totalorder %s141, 31
      %s143 = scalar_select %p142, %s141, 31
      %s144 = smul.addr %s143, 8
      %s145 = scalar_lea.vmem %s2, %s144
      %s146 = smul.u32 16, %s13
      %v147 = vld [vmem:[%s139] sm:$0xff]
      %v148 = vld [vmem:[%s139 + $0x8] sm:$0xff]
      %v149 = vld [vmem:[%s139 + $0x10] sm:$0xff]
      %v150 = vld [vmem:[%s139 + $0x18] sm:$0xff]
      %v151 = vld [vmem:[%s139 + $0x20] sm:$0xff]
      %v152 = vld [vmem:[%s139 + $0x28] sm:$0xff]
      %v153 = vld [vmem:[%s139 + $0x30] sm:$0xff]
      %v154 = vld [vmem:[%s139 + $0x38] sm:$0xff]
      %v155 = vld [vmem:[%s139 + $0x40] sm:$0xff]
      %v156 = vld [vmem:[%s139 + $0x48] sm:$0xff]
      %v157 = vld [vmem:[%s139 + $0x50] sm:$0xff]
      %v158 = vld [vmem:[%s139 + $0x58] sm:$0xff]
      %v159 = vld [vmem:[%s139 + $0x60] sm:$0xff]
      %v160 = vld [vmem:[%s139 + $0x68] sm:$0xff]
      %v161 = vld [vmem:[%s139 + $0x70] sm:$0xff]
      %v162 = vld [vmem:[%s139 + $0x78] sm:$0xff]
      %v163 = vld [vmem:[%s1] sm:$0x7]
      %vm180 = vcmask 1040384
      %v181 = vrot.slane %v147, 7
      %v182 = vrot.slane %v148, 7
      %v183 = vsel %vm180, %v181, %v182
      %v184 = vrot.slane %v149, 7
      %v185 = vsel %vm180, %v182, %v184
      %v186 = vrot.slane %v150, 7
      %v187 = vsel %vm180, %v184, %v186
      %v188 = vrot.slane %v151, 7
      %v189 = vsel %vm180, %v186, %v188
      %v190 = vrot.slane %v152, 7
      %v191 = vsel %vm180, %v188, %v190
      %v192 = vrot.slane %v153, 7
      %v193 = vsel %vm180, %v190, %v192
      %v194 = vrot.slane %v154, 7
      %v195 = vsel %vm180, %v192, %v194
      %v196 = vrot.slane %v155, 7
      %v197 = vsel %vm180, %v194, %v196
      %v198 = vrot.slane %v156, 7
      %v199 = vsel %vm180, %v196, %v198
      %v200 = vrot.slane %v157, 7
      %v201 = vsel %vm180, %v198, %v200
      %v202 = vrot.slane %v158, 7
      %v203 = vsel %vm180, %v200, %v202
      %v204 = vrot.slane %v159, 7
      %v205 = vsel %vm180, %v202, %v204
      %v206 = vrot.slane %v160, 7
      %v207 = vsel %vm180, %v204, %v206
      %v208 = vrot.slane %v161, 7
      %v209 = vsel %vm180, %v206, %v208
      %v210 = vrot.slane %v162, 7
      %v211 = vsel %vm180, %v208, %v210
      %v213 = vsel %vm180, 0.0, %v181
      %215 = vset.pattern.permute.xlu0 0
      %216 = vperm.xlu0 %215, %v213
      %v217 = vpop.permute.xlu0 %216
      %219 = vset.pattern.permute.xlu0 0
      %220 = vperm.xlu0 %219, %v183
      %v221 = vpop.permute.xlu0 %220
      %223 = vset.pattern.permute.xlu0 0
      %224 = vperm.xlu0 %223, %v185
      %v225 = vpop.permute.xlu0 %224
      %227 = vset.pattern.permute.xlu0 0
      %228 = vperm.xlu0 %227, %v187
      %v229 = vpop.permute.xlu0 %228
      %231 = vset.pattern.permute.xlu0 0
      %232 = vperm.xlu0 %231, %v189
      %v233 = vpop.permute.xlu0 %232
      %235 = vset.pattern.permute.xlu0 0
      %236 = vperm.xlu0 %235, %v191
      %v237 = vpop.permute.xlu0 %236
      %239 = vset.pattern.permute.xlu0 0
      %240 = vperm.xlu0 %239, %v193
      %v241 = vpop.permute.xlu0 %240
      %243 = vset.pattern.permute.xlu0 0
      %244 = vperm.xlu0 %243, %v195
      %v245 = vpop.permute.xlu0 %244
      %247 = vset.pattern.permute.xlu0 0
      %248 = vperm.xlu0 %247, %v197
      %v249 = vpop.permute.xlu0 %248
      %251 = vset.pattern.permute.xlu0 0
      %252 = vperm.xlu0 %251, %v199
      %v253 = vpop.permute.xlu0 %252
      %255 = vset.pattern.permute.xlu0 0
      %256 = vperm.xlu0 %255, %v201
      %v257 = vpop.permute.xlu0 %256
      %259 = vset.pattern.permute.xlu0 0
      %260 = vperm.xlu0 %259, %v203
      %v261 = vpop.permute.xlu0 %260
      %263 = vset.pattern.permute.xlu0 0
      %264 = vperm.xlu0 %263, %v205
      %v265 = vpop.permute.xlu0 %264
      %267 = vset.pattern.permute.xlu0 0
      %268 = vperm.xlu0 %267, %v207
      %v269 = vpop.permute.xlu0 %268
      %271 = vset.pattern.permute.xlu0 0
      %272 = vperm.xlu0 %271, %v209
      %v273 = vpop.permute.xlu0 %272
      %275 = vset.pattern.permute.xlu0 0
      %276 = vperm.xlu0 %275, %v211
      %v277 = vpop.permute.xlu0 %276
      %v279 = vlaneseq
      %v280 = vshrl.u32 %v279, 7
      %v281 = vsub.s32 0, %v280
      %v282 = vrot.slane %v163, %v281
      %v283 = vmul.f32 %v217, %v282
      %v284 = vmul.f32 %v221, %v282
      %v285 = vmul.f32 %v225, %v282
      %v286 = vmul.f32 %v229, %v282
      %v287 = vmul.f32 %v233, %v282
      %v288 = vmul.f32 %v237, %v282
      %v289 = vmul.f32 %v241, %v282
      %v290 = vmul.f32 %v245, %v282
      %v291 = vmul.f32 %v249, %v282
      %v292 = vmul.f32 %v253, %v282
      %v293 = vmul.f32 %v257, %v282
      %v294 = vmul.f32 %v261, %v282
      %v295 = vmul.f32 %v265, %v282
      %v296 = vmul.f32 %v269, %v282
      %v297 = vmul.f32 %v273, %v282
      %v298 = vmul.f32 %v277, %v282
      %299 = vset.pattern.permute.xlu0 0
      %300 = vperm.xlu0 %299, %v147
      %v301 = vpop.permute.xlu0 %300
      %303 = vset.pattern.permute.xlu0 0
      %304 = vperm.xlu0 %303, %v148
      %v305 = vpop.permute.xlu0 %304
      %307 = vset.pattern.permute.xlu0 0
      %308 = vperm.xlu0 %307, %v149
      %v309 = vpop.permute.xlu0 %308
      %311 = vset.pattern.permute.xlu0 0
      %312 = vperm.xlu0 %311, %v150
      %v313 = vpop.permute.xlu0 %312
      %315 = vset.pattern.permute.xlu0 0
      %316 = vperm.xlu0 %315, %v151
      %v317 = vpop.permute.xlu0 %316
      %319 = vset.pattern.permute.xlu0 0
      %320 = vperm.xlu0 %319, %v152
      %v321 = vpop.permute.xlu0 %320
      %323 = vset.pattern.permute.xlu0 0
      %324 = vperm.xlu0 %323, %v153
      %v325 = vpop.permute.xlu0 %324
      %327 = vset.pattern.permute.xlu0 0
      %328 = vperm.xlu0 %327, %v154
      %v329 = vpop.permute.xlu0 %328
      %331 = vset.pattern.permute.xlu0 0
      %332 = vperm.xlu0 %331, %v155
      %v333 = vpop.permute.xlu0 %332
      %335 = vset.pattern.permute.xlu0 0
      %336 = vperm.xlu0 %335, %v156
      %v337 = vpop.permute.xlu0 %336
      %339 = vset.pattern.permute.xlu0 0
      %340 = vperm.xlu0 %339, %v157
      %v341 = vpop.permute.xlu0 %340
      %343 = vset.pattern.permute.xlu0 0
      %344 = vperm.xlu0 %343, %v158
      %v345 = vpop.permute.xlu0 %344
      %347 = vset.pattern.permute.xlu0 0
      %348 = vperm.xlu0 %347, %v159
      %v349 = vpop.permute.xlu0 %348
      %351 = vset.pattern.permute.xlu0 0
      %352 = vperm.xlu0 %351, %v160
      %v353 = vpop.permute.xlu0 %352
      %355 = vset.pattern.permute.xlu0 0
      %356 = vperm.xlu0 %355, %v161
      %v357 = vpop.permute.xlu0 %356
      %359 = vset.pattern.permute.xlu0 0
      %360 = vperm.xlu0 %359, %v162
      %v361 = vpop.permute.xlu0 %360
      %v363 = vlaneseq
      %v364 = vshrl.u32 %v363, 7
      %v365 = vsub.s32 1, %v364
      %v366 = vrot.slane %v163, %v365
      %v367 = vmul.f32 %v301, %v366
      %v368 = vmul.f32 %v305, %v366
      %v369 = vmul.f32 %v309, %v366
      %v370 = vmul.f32 %v313, %v366
      %v371 = vmul.f32 %v317, %v366
      %v372 = vmul.f32 %v321, %v366
      %v373 = vmul.f32 %v325, %v366
      %v374 = vmul.f32 %v329, %v366
      %v375 = vmul.f32 %v333, %v366
      %v376 = vmul.f32 %v337, %v366
      %v377 = vmul.f32 %v341, %v366
      %v378 = vmul.f32 %v345, %v366
      %v379 = vmul.f32 %v349, %v366
      %v380 = vmul.f32 %v353, %v366
      %v381 = vmul.f32 %v357, %v366
      %v382 = vmul.f32 %v361, %v366
      %v383 = vadd.f32 %v283, %v367
      %v384 = vadd.f32 %v284, %v368
      %v385 = vadd.f32 %v285, %v369
      %v386 = vadd.f32 %v286, %v370
      %v387 = vadd.f32 %v287, %v371
      %v388 = vadd.f32 %v288, %v372
      %v389 = vadd.f32 %v289, %v373
      %v390 = vadd.f32 %v290, %v374
      %v391 = vadd.f32 %v291, %v375
      %v392 = vadd.f32 %v292, %v376
      %v393 = vadd.f32 %v293, %v377
      %v394 = vadd.f32 %v294, %v378
      %v395 = vadd.f32 %v295, %v379
      %v396 = vadd.f32 %v296, %v380
      %v397 = vadd.f32 %v297, %v381
      %v398 = vadd.f32 %v298, %v382
      %vm399 = vcmask 1046528
      %v400 = vrot.slane %v147, 1
      %v401 = vrot.slane %v148, 1
      %v402 = vsel %vm399, %v400, %v401
      %v403 = vrot.slane %v149, 1
      %v404 = vsel %vm399, %v401, %v403
      %v405 = vrot.slane %v150, 1
      %v406 = vsel %vm399, %v403, %v405
      %v407 = vrot.slane %v151, 1
      %v408 = vsel %vm399, %v405, %v407
      %v409 = vrot.slane %v152, 1
      %v410 = vsel %vm399, %v407, %v409
      %v411 = vrot.slane %v153, 1
      %v412 = vsel %vm399, %v409, %v411
      %v413 = vrot.slane %v154, 1
      %v414 = vsel %vm399, %v411, %v413
      %v415 = vrot.slane %v155, 1
      %v416 = vsel %vm399, %v413, %v415
      %v417 = vrot.slane %v156, 1
      %v418 = vsel %vm399, %v415, %v417
      %v419 = vrot.slane %v157, 1
      %v420 = vsel %vm399, %v417, %v419
      %v421 = vrot.slane %v158, 1
      %v422 = vsel %vm399, %v419, %v421
      %v423 = vrot.slane %v159, 1
      %v424 = vsel %vm399, %v421, %v423
      %v425 = vrot.slane %v160, 1
      %v426 = vsel %vm399, %v423, %v425
      %v427 = vrot.slane %v161, 1
      %v428 = vsel %vm399, %v425, %v427
      %v429 = vrot.slane %v162, 1
      %v430 = vsel %vm399, %v427, %v429
      %v432 = vsel %vm399, %v429, 0.0
      %433 = vset.pattern.permute.xlu0 0
      %434 = vperm.xlu0 %433, %v402
      %v435 = vpop.permute.xlu0 %434
      %437 = vset.pattern.permute.xlu0 0
      %438 = vperm.xlu0 %437, %v404
      %v439 = vpop.permute.xlu0 %438
      %441 = vset.pattern.permute.xlu0 0
      %442 = vperm.xlu0 %441, %v406
      %v443 = vpop.permute.xlu0 %442
      %445 = vset.pattern.permute.xlu0 0
      %446 = vperm.xlu0 %445, %v408
      %v447 = vpop.permute.xlu0 %446
      %449 = vset.pattern.permute.xlu0 0
      %450 = vperm.xlu0 %449, %v410
      %v451 = vpop.permute.xlu0 %450
      %453 = vset.pattern.permute.xlu0 0
      %454 = vperm.xlu0 %453, %v412
      %v455 = vpop.permute.xlu0 %454
      %457 = vset.pattern.permute.xlu0 0
      %458 = vperm.xlu0 %457, %v414
      %v459 = vpop.permute.xlu0 %458
      %461 = vset.pattern.permute.xlu0 0
      %462 = vperm.xlu0 %461, %v416
      %v463 = vpop.permute.xlu0 %462
      %465 = vset.pattern.permute.xlu0 0
      %466 = vperm.xlu0 %465, %v418
      %v467 = vpop.permute.xlu0 %466
      %469 = vset.pattern.permute.xlu0 0
      %470 = vperm.xlu0 %469, %v420
      %v471 = vpop.permute.xlu0 %470
      %473 = vset.pattern.permute.xlu0 0
      %474 = vperm.xlu0 %473, %v422
      %v475 = vpop.permute.xlu0 %474
      %477 = vset.pattern.permute.xlu0 0
      %478 = vperm.xlu0 %477, %v424
      %v479 = vpop.permute.xlu0 %478
      %481 = vset.pattern.permute.xlu0 0
      %482 = vperm.xlu0 %481, %v426
      %v483 = vpop.permute.xlu0 %482
      %485 = vset.pattern.permute.xlu0 0
      %486 = vperm.xlu0 %485, %v428
      %v487 = vpop.permute.xlu0 %486
      %489 = vset.pattern.permute.xlu0 0
      %490 = vperm.xlu0 %489, %v430
      %v491 = vpop.permute.xlu0 %490
      %494 = vset.pattern.permute.xlu0 0
      %495 = vperm.xlu0 %494, %v432
      %v496 = vpop.permute.xlu0 %495
      %v498 = vlaneseq
      %v499 = vshrl.u32 %v498, 7
      %v500 = vsub.s32 2, %v499
      %v501 = vrot.slane %v163, %v500
      %v502 = vmul.f32 %v435, %v501
      %v503 = vmul.f32 %v439, %v501
      %v504 = vmul.f32 %v443, %v501
      %v505 = vmul.f32 %v447, %v501
      %v506 = vmul.f32 %v451, %v501
      %v507 = vmul.f32 %v455, %v501
      %v508 = vmul.f32 %v459, %v501
      %v509 = vmul.f32 %v463, %v501
      %v510 = vmul.f32 %v467, %v501
      %v511 = vmul.f32 %v471, %v501
      %v512 = vmul.f32 %v475, %v501
      %v513 = vmul.f32 %v479, %v501
      %v514 = vmul.f32 %v483, %v501
      %v515 = vmul.f32 %v487, %v501
      %v516 = vmul.f32 %v491, %v501
      %v517 = vmul.f32 %v496, %v501
      %v518 = vadd.f32 %v383, %v502
      %v519 = vadd.f32 %v384, %v503
      %v520 = vadd.f32 %v385, %v504
      %v521 = vadd.f32 %v386, %v505
      %v522 = vadd.f32 %v387, %v506
      %v523 = vadd.f32 %v388, %v507
      %v524 = vadd.f32 %v389, %v508
      %v525 = vadd.f32 %v390, %v509
      %v526 = vadd.f32 %v391, %v510
      %v527 = vadd.f32 %v392, %v511
      %v528 = vadd.f32 %v393, %v512
      %v529 = vadd.f32 %v394, %v513
      %v530 = vadd.f32 %v395, %v514
      %v531 = vadd.f32 %v396, %v515
      %v532 = vadd.f32 %v397, %v516
      %v533 = vadd.f32 %v398, %v517
      %v534 = vld [vmem:[%s1 + $0x8] sm:$0x1]
      %v535 = vlaneseq
      %v536 = vshrl.u32 %v535, 7
      %v537 = vsub.s32 0, %v536
      %v538 = vrot.slane %v534, %v537
      %v539 = vadd.f32 %v518, %v538
      %v540 = vadd.f32 %v519, %v538
      %v541 = vadd.f32 %v520, %v538
      %v542 = vadd.f32 %v521, %v538
      %v543 = vadd.f32 %v522, %v538
      %v544 = vadd.f32 %v523, %v538
      %v545 = vadd.f32 %v524, %v538
      %v546 = vadd.f32 %v525, %v538
      %v547 = vadd.f32 %v526, %v538
      %v548 = vadd.f32 %v527, %v538
      %v549 = vadd.f32 %v528, %v538
      %v550 = vadd.f32 %v529, %v538
      %v551 = vadd.f32 %v530, %v538
      %v552 = vadd.f32 %v531, %v538
      %v553 = vadd.f32 %v532, %v538
      %v554 = vadd.f32 %v533, %v538
      %v555 = vmax.f32 %v539, 0.0
      %v556 = vmax.f32 %v540, 0.0
      %v557 = vmax.f32 %v541, 0.0
      %v558 = vmax.f32 %v542, 0.0
      %v559 = vmax.f32 %v543, 0.0
      %v560 = vmax.f32 %v544, 0.0
      %v561 = vmax.f32 %v545, 0.0
      %v562 = vmax.f32 %v546, 0.0
      %v563 = vmax.f32 %v547, 0.0
      %v564 = vmax.f32 %v548, 0.0
      %v565 = vmax.f32 %v549, 0.0
      %v566 = vmax.f32 %v550, 0.0
      %v567 = vmax.f32 %v551, 0.0
      %v568 = vmax.f32 %v552, 0.0
      %v569 = vmax.f32 %v553, 0.0
      %v570 = vmax.f32 %v554, 0.0
      %v571 = vld [vmem:[%s1 + $0x10] sm:$0xff]
      %v572 = vld [vmem:[%s1 + $0x18] sm:$0xff]
      %v573 = vld [vmem:[%s1 + $0x20] sm:$0xff]
      %v574 = vld [vmem:[%s1 + $0x28] sm:$0xff]
      %v575 = vld [vmem:[%s1 + $0x30] sm:$0xff]
      %v576 = vld [vmem:[%s1 + $0x38] sm:$0xff]
      %v593 = vrot.slane %v555, 7
      %v594 = vrot.slane %v556, 7
      %v595 = vsel %vm180, %v593, %v594
      %v596 = vrot.slane %v557, 7
      %v597 = vsel %vm180, %v594, %v596
      %v598 = vrot.slane %v558, 7
      %v599 = vsel %vm180, %v596, %v598
      %v600 = vrot.slane %v559, 7
      %v601 = vsel %vm180, %v598, %v600
      %v602 = vrot.slane %v560, 7
      %v603 = vsel %vm180, %v600, %v602
      %v604 = vrot.slane %v561, 7
      %v605 = vsel %vm180, %v602, %v604
      %v606 = vrot.slane %v562, 7
      %v607 = vsel %vm180, %v604, %v606
      %v608 = vrot.slane %v563, 7
      %v609 = vsel %vm180, %v606, %v608
      %v610 = vrot.slane %v564, 7
      %v611 = vsel %vm180, %v608, %v610
      %v612 = vrot.slane %v565, 7
      %v613 = vsel %vm180, %v610, %v612
      %v614 = vrot.slane %v566, 7
      %v615 = vsel %vm180, %v612, %v614
      %v616 = vrot.slane %v567, 7
      %v617 = vsel %vm180, %v614, %v616
      %v618 = vrot.slane %v568, 7
      %v619 = vsel %vm180, %v616, %v618
      %v620 = vrot.slane %v569, 7
      %v621 = vsel %vm180, %v618, %v620
      %v622 = vrot.slane %v570, 7
      %v623 = vsel %vm180, %v620, %v622
      %v640 = vsel %vm180, 0.0, %v593
      %v641 = vrot.slane %v555, 1
      %v642 = vrot.slane %v556, 1
      %v643 = vsel %vm399, %v641, %v642
      %v644 = vrot.slane %v557, 1
      %v645 = vsel %vm399, %v642, %v644
      %v646 = vrot.slane %v558, 1
      %v647 = vsel %vm399, %v644, %v646
      %v648 = vrot.slane %v559, 1
      %v649 = vsel %vm399, %v646, %v648
      %v650 = vrot.slane %v560, 1
      %v651 = vsel %vm399, %v648, %v650
      %v652 = vrot.slane %v561, 1
      %v653 = vsel %vm399, %v650, %v652
      %v654 = vrot.slane %v562, 1
      %v655 = vsel %vm399, %v652, %v654
      %v656 = vrot.slane %v563, 1
      %v657 = vsel %vm399, %v654, %v656
      %v658 = vrot.slane %v564, 1
      %v659 = vsel %vm399, %v656, %v658
      %v660 = vrot.slane %v565, 1
      %v661 = vsel %vm399, %v658, %v660
      %v662 = vrot.slane %v566, 1
      %v663 = vsel %vm399, %v660, %v662
      %v664 = vrot.slane %v567, 1
      %v665 = vsel %vm399, %v662, %v664
      %v666 = vrot.slane %v568, 1
      %v667 = vsel %vm399, %v664, %v666
      %v668 = vrot.slane %v569, 1
      %v669 = vsel %vm399, %v666, %v668
      %v670 = vrot.slane %v570, 1
      %v671 = vsel %vm399, %v668, %v670
      %v673 = vsel %vm399, %v670, 0.0
      %674 = vrot.lane.b32.xlu0 %v555, 16
      %v675 = vpop.permute.xlu0 %674
      %676 = vrot.lane.b32.xlu0 %v556, 16
      %v677 = vpop.permute.xlu0 %676
      %678 = vrot.lane.b32.xlu0 %v557, 16
      %v679 = vpop.permute.xlu0 %678
      %680 = vrot.lane.b32.xlu0 %v558, 16
      %v681 = vpop.permute.xlu0 %680
      %682 = vrot.lane.b32.xlu0 %v559, 16
      %v683 = vpop.permute.xlu0 %682
      %684 = vrot.lane.b32.xlu0 %v560, 16
      %v685 = vpop.permute.xlu0 %684
      %686 = vrot.lane.b32.xlu0 %v561, 16
      %v687 = vpop.permute.xlu0 %686
      %688 = vrot.lane.b32.xlu0 %v562, 16
      %v689 = vpop.permute.xlu0 %688
      %690 = vrot.lane.b32.xlu0 %v563, 16
      %v691 = vpop.permute.xlu0 %690
      %692 = vrot.lane.b32.xlu0 %v564, 16
      %v693 = vpop.permute.xlu0 %692
      %694 = vrot.lane.b32.xlu0 %v565, 16
      %v695 = vpop.permute.xlu0 %694
      %696 = vrot.lane.b32.xlu0 %v566, 16
      %v697 = vpop.permute.xlu0 %696
      %698 = vrot.lane.b32.xlu0 %v567, 16
      %v699 = vpop.permute.xlu0 %698
      %700 = vrot.lane.b32.xlu0 %v568, 16
      %v701 = vpop.permute.xlu0 %700
      %702 = vrot.lane.b32.xlu0 %v569, 16
      %v703 = vpop.permute.xlu0 %702
      %704 = vrot.lane.b32.xlu0 %v570, 16
      %v705 = vpop.permute.xlu0 %704
      %723 = vrot.lane.b32.xlu0 %v643, 32
      %v724 = vpop.permute.xlu0 %723
      %725 = vrot.lane.b32.xlu0 %v645, 32
      %v726 = vpop.permute.xlu0 %725
      %727 = vrot.lane.b32.xlu0 %v647, 32
      %v728 = vpop.permute.xlu0 %727
      %729 = vrot.lane.b32.xlu0 %v649, 32
      %v730 = vpop.permute.xlu0 %729
      %731 = vrot.lane.b32.xlu0 %v651, 32
      %v732 = vpop.permute.xlu0 %731
      %733 = vrot.lane.b32.xlu0 %v653, 32
      %v734 = vpop.permute.xlu0 %733
      %735 = vrot.lane.b32.xlu0 %v655, 32
      %v736 = vpop.permute.xlu0 %735
      %737 = vrot.lane.b32.xlu0 %v657, 32
      %v738 = vpop.permute.xlu0 %737
      %739 = vrot.lane.b32.xlu0 %v659, 32
      %v740 = vpop.permute.xlu0 %739
      %741 = vrot.lane.b32.xlu0 %v661, 32
      %v742 = vpop.permute.xlu0 %741
      %743 = vrot.lane.b32.xlu0 %v663, 32
      %v744 = vpop.permute.xlu0 %743
      %745 = vrot.lane.b32.xlu0 %v665, 32
      %v746 = vpop.permute.xlu0 %745
      %747 = vrot.lane.b32.xlu0 %v667, 32
      %v748 = vpop.permute.xlu0 %747
      %749 = vrot.lane.b32.xlu0 %v669, 32
      %v750 = vpop.permute.xlu0 %749
      %751 = vrot.lane.b32.xlu0 %v671, 32
      %v752 = vpop.permute.xlu0 %751
      %753 = vrot.lane.b32.xlu0 %v673, 32
      %v754 = vpop.permute.xlu0 %753
      %vm771 = vcmask 130048
      %v772 = vsel %vm771, %v640, %v675
      %v773 = vsel %vm771, %v595, %v677
      %v774 = vsel %vm771, %v597, %v679
      %v775 = vsel %vm771, %v599, %v681
      %v776 = vsel %vm771, %v601, %v683
      %v777 = vsel %vm771, %v603, %v685
      %v778 = vsel %vm771, %v605, %v687
      %v779 = vsel %vm771, %v607, %v689
      %v780 = vsel %vm771, %v609, %v691
      %v781 = vsel %vm771, %v611, %v693
      %v782 = vsel %vm771, %v613, %v695
      %v783 = vsel %vm771, %v615, %v697
      %v784 = vsel %vm771, %v617, %v699
      %v785 = vsel %vm771, %v619, %v701
      %v786 = vsel %vm771, %v621, %v703
      %v787 = vsel %vm771, %v623, %v705
      %vm788 = vcmask 261120
      %v789 = vsel %vm788, %v772, %v724
      %v790 = vsel %vm788, %v773, %v726
      %v791 = vsel %vm788, %v774, %v728
      %v792 = vsel %vm788, %v775, %v730
      %v793 = vsel %vm788, %v776, %v732
      %v794 = vsel %vm788, %v777, %v734
      %v795 = vsel %vm788, %v778, %v736
      %v796 = vsel %vm788, %v779, %v738
      %v797 = vsel %vm788, %v780, %v740
      %v798 = vsel %vm788, %v781, %v742
      %v799 = vsel %vm788, %v782, %v744
      %v800 = vsel %vm788, %v783, %v746
      %v801 = vsel %vm788, %v784, %v748
      %v802 = vsel %vm788, %v785, %v750
      %v803 = vsel %vm788, %v786, %v752
      %v804 = vsel %vm788, %v787, %v754
      %v805 = vld [vmem:[%s1 + $0x40] sm:$0x1]
      %v806 = vlaneseq
      %v807 = vshrl.u32 %v806, 7
      %v808 = vsub.s32 0, %v807
      %v809 = vrot.slane %v805, %v808
      %vm810 = vcmask 392192
      %v812 = vsel %vm810, %v789, 0
      %v815 = vsel %vm810, %v790, 0
      %v818 = vsel %vm810, %v791, 0
      %v821 = vsel %vm810, %v792, 0
      %v824 = vsel %vm810, %v793, 0
      %v827 = vsel %vm810, %v794, 0
      %v830 = vsel %vm810, %v795, 0
      %v833 = vsel %vm810, %v796, 0
      %v836 = vsel %vm810, %v797, 0
      %v839 = vsel %vm810, %v798, 0
      %v842 = vsel %vm810, %v799, 0
      %v845 = vsel %vm810, %v800, 0
      %v848 = vsel %vm810, %v801, 0
      %v851 = vsel %vm810, %v802, 0
      %v854 = vsel %vm810, %v803, 0
      %v857 = vsel %vm810, %v804, 0
      %859 = vmatprep.subr.mxu0 0.0
      %860 = vmatpush1.msra.mxu0 %v571
      %861 = vmatprep.subr.mxu0 0.0
      %862 = vmatpush1.msra.mxu0 %v572
      %863 = vmatprep.subr.mxu0 0.0
      %864 = vmatpush1.msra.mxu0 %v573
      %865 = vmatprep.subr.mxu0 0.0
      %866 = vmatpush1.msra.mxu0 %v574
      %867 = vmatprep.subr.mxu0 0.0
      %868 = vmatpush1.msra.mxu0 %v575
      %869 = vmatprep.subr.mxu0 0.0
      %870 = vmatpush1.msra.mxu0 %v576
      %871 = vmatprep.subr.mxu0 0.0
      %872 = vmatpush1.msra.mxu0 0.0
      %873 = vmatprep.subr.mxu0 0.0
      %874 = vmatpush1.msra.mxu0 0.0
      %875 = vmatprep.subr.mxu0 0.0
      %876 = vmatpush1.msra.mxu0 0.0
      %877 = vmatprep.subr.mxu0 0.0
      %878 = vmatpush1.msra.mxu0 0.0
      %879 = vmatprep.subr.mxu0 0.0
      %880 = vmatpush1.msra.mxu0 0.0
      %881 = vmatprep.subr.mxu0 0.0
      %882 = vmatpush1.msra.mxu0 0.0
      %883 = vmatprep.subr.mxu0 0.0
      %884 = vmatpush1.msra.mxu0 0.0
      %885 = vmatprep.subr.mxu0 0.0
      %886 = vmatpush1.msra.mxu0 0.0
      %887 = vmatprep.subr.mxu0 0.0
      %888 = vmatpush1.msra.mxu0 0.0
      %889 = vmatprep.subr.mxu0 0.0
      %890 = vmatpush1.msra.mxu0 0.0
      %891 = vmatprep.subr.mxu0 0.0
      %892 = vmatpush1.msra.mxu0 0.0
      %893 = vmatprep.subr.mxu0 0.0
      %894 = vmatpush1.msra.mxu0 0.0
      %895 = vmatprep.subr.mxu0 0.0
      %896 = vmatpush1.msra.mxu0 0.0
      %897 = vmatprep.subr.mxu0 0.0
      %898 = vmatpush1.msra.mxu0 0.0
      %899 = vmatprep.subr.mxu0 0.0
      %900 = vmatpush1.msra.mxu0 0.0
      %901 = vmatprep.subr.mxu0 0.0
      %902 = vmatpush1.msra.mxu0 0.0
      %903 = vmatprep.subr.mxu0 0.0
      %904 = vmatpush1.msra.mxu0 0.0
      %905 = vmatprep.subr.mxu0 0.0
      %906 = vmatpush1.msra.mxu0 0.0
      %907 = vmatprep.subr.mxu0 0.0
      %908 = vmatpush1.msra.mxu0 0.0
      %909 = vmatprep.subr.mxu0 0.0
      %910 = vmatpush1.msra.mxu0 0.0
      %911 = vmatprep.subr.mxu0 0.0
      %912 = vmatpush1.msra.mxu0 0.0
      %913 = vmatprep.subr.mxu0 0.0
      %914 = vmatpush1.msra.mxu0 0.0
      %915 = vmatprep.subr.mxu0 0.0
      %916 = vmatpush1.msra.mxu0 0.0
      %917 = vmatprep.subr.mxu0 0.0
      %918 = vmatpush1.msra.mxu0 0.0
      %919 = vmatprep.subr.mxu0 0.0
      %920 = vmatpush1.msra.mxu0 0.0
      %921 = vmatprep.subr.mxu0 0.0
      %922 = vmatpush1.msra.mxu0 0.0
      %923 = vmatprep.mubr.f32.mxu0 0.0
      %924 = vmatmul.mubr.f32.gmra.mrb[0].mxu0 %v812
      %v925 = vpop.f32.mrb[0].mxu0
      %v926 = vadd.f32 %v809, %v925
      %v927 = vpop.f32.mrb[0].mxu0
      %928 = vmatprep.mubr.f32.mxu0 0.0
      %929 = vmatmul.mubr.f32.gmra.mrb[0].mxu0 %v815
      %v930 = vpop.f32.mrb[0].mxu0
      %v931 = vadd.f32 %v809, %v930
      %v932 = vpop.f32.mrb[0].mxu0
      %933 = vmatprep.mubr.f32.mxu0 0.0
      %934 = vmatmul.mubr.f32.gmra.mrb[0].mxu0 %v818
      %v935 = vpop.f32.mrb[0].mxu0
      %v936 = vadd.f32 %v809, %v935
      %v937 = vpop.f32.mrb[0].mxu0
      %938 = vmatprep.mubr.f32.mxu0 0.0
      %939 = vmatmul.mubr.f32.gmra.mrb[0].mxu0 %v821
      %v940 = vpop.f32.mrb[0].mxu0
      %v941 = vadd.f32 %v809, %v940
      %v942 = vpop.f32.mrb[0].mxu0
      %943 = vmatprep.mubr.f32.mxu0 0.0
      %944 = vmatmul.mubr.f32.gmra.mrb[0].mxu0 %v824
      %v945 = vpop.f32.mrb[0].mxu0
      %v946 = vadd.f32 %v809, %v945
      %v947 = vpop.f32.mrb[0].mxu0
      %948 = vmatprep.mubr.f32.mxu0 0.0
      %949 = vmatmul.mubr.f32.gmra.mrb[0].mxu0 %v827
      %v950 = vpop.f32.mrb[0].mxu0
      %v951 = vadd.f32 %v809, %v950
      %v952 = vpop.f32.mrb[0].mxu0
      %953 = vmatprep.mubr.f32.mxu0 0.0
      %954 = vmatmul.mubr.f32.gmra.mrb[0].mxu0 %v830
      %v955 = vpop.f32.mrb[0].mxu0
      %v956 = vadd.f32 %v809, %v955
      %v957 = vpop.f32.mrb[0].mxu0
      %958 = vmatprep.mubr.f32.mxu0 0.0
      %959 = vmatmul.mubr.f32.gmra.mrb[0].mxu0 %v833
      %v960 = vpop.f32.mrb[0].mxu0
      %v961 = vadd.f32 %v809, %v960
      %v962 = vpop.f32.mrb[0].mxu0
      %963 = vmatprep.mubr.f32.mxu0 0.0
      %964 = vmatmul.mubr.f32.gmra.mrb[0].mxu0 %v836
      %v965 = vpop.f32.mrb[0].mxu0
      %v966 = vadd.f32 %v809, %v965
      %v967 = vpop.f32.mrb[0].mxu0
      %968 = vmatprep.mubr.f32.mxu0 0.0
      %969 = vmatmul.mubr.f32.gmra.mrb[0].mxu0 %v839
      %v970 = vpop.f32.mrb[0].mxu0
      %v971 = vadd.f32 %v809, %v970
      %v972 = vpop.f32.mrb[0].mxu0
      %973 = vmatprep.mubr.f32.mxu0 0.0
      %974 = vmatmul.mubr.f32.gmra.mrb[0].mxu0 %v842
      %v975 = vpop.f32.mrb[0].mxu0
      %v976 = vadd.f32 %v809, %v975
      %v977 = vpop.f32.mrb[0].mxu0
      %978 = vmatprep.mubr.f32.mxu0 0.0
      %979 = vmatmul.mubr.f32.gmra.mrb[0].mxu0 %v845
      %v980 = vpop.f32.mrb[0].mxu0
      %v981 = vadd.f32 %v809, %v980
      %v982 = vpop.f32.mrb[0].mxu0
      %983 = vmatprep.mubr.f32.mxu0 0.0
      %984 = vmatmul.mubr.f32.gmra.mrb[0].mxu0 %v848
      %v985 = vpop.f32.mrb[0].mxu0
      %v986 = vadd.f32 %v809, %v985
      %v987 = vpop.f32.mrb[0].mxu0
      %988 = vmatprep.mubr.f32.mxu0 0.0
      %989 = vmatmul.mubr.f32.gmra.mrb[0].mxu0 %v851
      %v990 = vpop.f32.mrb[0].mxu0
      %v991 = vadd.f32 %v809, %v990
      %v992 = vpop.f32.mrb[0].mxu0
      %993 = vmatprep.mubr.f32.mxu0 0.0
      %994 = vmatmul.mubr.f32.gmra.mrb[0].mxu0 %v854
      %v995 = vpop.f32.mrb[0].mxu0
      %v996 = vadd.f32 %v809, %v995
      %v997 = vpop.f32.mrb[0].mxu0
      %998 = vmatprep.mubr.f32.mxu0 0.0
      %999 = vmatmul.mubr.f32.gmra.mrb[0].mxu0 %v857
      %v1000 = vpop.f32.mrb[0].mxu0
      %v1001 = vadd.f32 %v809, %v1000
      %v1002 = vpop.f32.mrb[0].mxu0
      %1003 = vdwg.mxu0
      %v1004 = vmax.f32 %v926, 0.0
      %v1005 = vmax.f32 %v931, 0.0
      %v1006 = vmax.f32 %v936, 0.0
      %v1007 = vmax.f32 %v941, 0.0
      %v1008 = vmax.f32 %v946, 0.0
      %v1009 = vmax.f32 %v951, 0.0
      %v1010 = vmax.f32 %v956, 0.0
      %v1011 = vmax.f32 %v961, 0.0
      %v1012 = vmax.f32 %v966, 0.0
      %v1013 = vmax.f32 %v971, 0.0
      %v1014 = vmax.f32 %v976, 0.0
      %v1015 = vmax.f32 %v981, 0.0
      %v1016 = vmax.f32 %v986, 0.0
      %v1017 = vmax.f32 %v991, 0.0
      %v1018 = vmax.f32 %v996, 0.0
      %v1019 = vmax.f32 %v1001, 0.0
      %v1036 = vcombine.high %v1004, %v1004
      %v1037 = vcombine.high %v1005, %v1005
      %v1038 = vcombine.high %v1006, %v1006
      %v1039 = vcombine.high %v1007, %v1007
      %v1040 = vcombine.high %v1008, %v1008
      %v1041 = vcombine.high %v1009, %v1009
      %v1042 = vcombine.high %v1010, %v1010
      %v1043 = vcombine.high %v1011, %v1011
      %v1044 = vcombine.high %v1012, %v1012
      %v1045 = vcombine.high %v1013, %v1013
      %v1046 = vcombine.high %v1014, %v1014
      %v1047 = vcombine.high %v1015, %v1015
      %v1048 = vcombine.high %v1016, %v1016
      %v1049 = vcombine.high %v1017, %v1017
      %v1050 = vcombine.high %v1018, %v1018
      %v1051 = vcombine.high %v1019, %v1019
      %vm1068 = vcmask 125952
      %v1069 = vsel %vm1068, %v1004, -inf
      %v1070 = vrot.slane %v1069, 4
      %v1071 = vmax.f32 %v1069, %v1070
      %v1072 = vrot.slane %v1071, 2
      %v1073 = vmax.f32 %v1071, %v1072
      %v1074 = vrot.slane %v1073, 1
      %v1075 = vmax.f32 %v1073, %v1074
      %v1076 = vsel %vm1068, %v1036, -inf
      %v1077 = vrot.slane %v1076, 4
      %v1078 = vmax.f32 %v1076, %v1077
      %v1079 = vrot.slane %v1078, 2
      %v1080 = vmax.f32 %v1078, %v1079
      %v1081 = vrot.slane %v1080, 1
      %v1082 = vmax.f32 %v1080, %v1081
      %v1083 = vsel %vm1068, %v1005, -inf
      %v1084 = vrot.slane %v1083, 4
      %v1085 = vmax.f32 %v1083, %v1084
      %v1086 = vrot.slane %v1085, 2
      %v1087 = vmax.f32 %v1085, %v1086
      %v1088 = vrot.slane %v1087, 1
      %v1089 = vmax.f32 %v1087, %v1088
      %v1090 = vsel %vm1068, %v1037, -inf
      %v1091 = vrot.slane %v1090, 4
      %v1092 = vmax.f32 %v1090, %v1091
      %v1093 = vrot.slane %v1092, 2
      %v1094 = vmax.f32 %v1092, %v1093
      %v1095 = vrot.slane %v1094, 1
      %v1096 = vmax.f32 %v1094, %v1095
      %v1097 = vsel %vm1068, %v1006, -inf
      %v1098 = vrot.slane %v1097, 4
      %v1099 = vmax.f32 %v1097, %v1098
      %v1100 = vrot.slane %v1099, 2
      %v1101 = vmax.f32 %v1099, %v1100
      %v1102 = vrot.slane %v1101, 1
      %v1103 = vmax.f32 %v1101, %v1102
      %v1104 = vsel %vm1068, %v1038, -inf
      %v1105 = vrot.slane %v1104, 4
      %v1106 = vmax.f32 %v1104, %v1105
      %v1107 = vrot.slane %v1106, 2
      %v1108 = vmax.f32 %v1106, %v1107
      %v1109 = vrot.slane %v1108, 1
      %v1110 = vmax.f32 %v1108, %v1109
      %v1111 = vsel %vm1068, %v1007, -inf
      %v1112 = vrot.slane %v1111, 4
      %v1113 = vmax.f32 %v1111, %v1112
      %v1114 = vrot.slane %v1113, 2
      %v1115 = vmax.f32 %v1113, %v1114
      %v1116 = vrot.slane %v1115, 1
      %v1117 = vmax.f32 %v1115, %v1116
      %v1118 = vsel %vm1068, %v1039, -inf
      %v1119 = vrot.slane %v1118, 4
      %v1120 = vmax.f32 %v1118, %v1119
      %v1121 = vrot.slane %v1120, 2
      %v1122 = vmax.f32 %v1120, %v1121
      %v1123 = vrot.slane %v1122, 1
      %v1124 = vmax.f32 %v1122, %v1123
      %v1125 = vsel %vm1068, %v1008, -inf
      %v1126 = vrot.slane %v1125, 4
      %v1127 = vmax.f32 %v1125, %v1126
      %v1128 = vrot.slane %v1127, 2
      %v1129 = vmax.f32 %v1127, %v1128
      %v1130 = vrot.slane %v1129, 1
      %v1131 = vmax.f32 %v1129, %v1130
      %v1132 = vsel %vm1068, %v1040, -inf
      %v1133 = vrot.slane %v1132, 4
      %v1134 = vmax.f32 %v1132, %v1133
      %v1135 = vrot.slane %v1134, 2
      %v1136 = vmax.f32 %v1134, %v1135
      %v1137 = vrot.slane %v1136, 1
      %v1138 = vmax.f32 %v1136, %v1137
      %v1139 = vsel %vm1068, %v1009, -inf
      %v1140 = vrot.slane %v1139, 4
      %v1141 = vmax.f32 %v1139, %v1140
      %v1142 = vrot.slane %v1141, 2
      %v1143 = vmax.f32 %v1141, %v1142
      %v1144 = vrot.slane %v1143, 1
      %v1145 = vmax.f32 %v1143, %v1144
      %v1146 = vsel %vm1068, %v1041, -inf
      %v1147 = vrot.slane %v1146, 4
      %v1148 = vmax.f32 %v1146, %v1147
      %v1149 = vrot.slane %v1148, 2
      %v1150 = vmax.f32 %v1148, %v1149
      %v1151 = vrot.slane %v1150, 1
      %v1152 = vmax.f32 %v1150, %v1151
      %v1153 = vsel %vm1068, %v1010, -inf
      %v1154 = vrot.slane %v1153, 4
      %v1155 = vmax.f32 %v1153, %v1154
      %v1156 = vrot.slane %v1155, 2
      %v1157 = vmax.f32 %v1155, %v1156
      %v1158 = vrot.slane %v1157, 1
      %v1159 = vmax.f32 %v1157, %v1158
      %v1160 = vsel %vm1068, %v1042, -inf
      %v1161 = vrot.slane %v1160, 4
      %v1162 = vmax.f32 %v1160, %v1161
      %v1163 = vrot.slane %v1162, 2
      %v1164 = vmax.f32 %v1162, %v1163
      %v1165 = vrot.slane %v1164, 1
      %v1166 = vmax.f32 %v1164, %v1165
      %v1167 = vsel %vm1068, %v1011, -inf
      %v1168 = vrot.slane %v1167, 4
      %v1169 = vmax.f32 %v1167, %v1168
      %v1170 = vrot.slane %v1169, 2
      %v1171 = vmax.f32 %v1169, %v1170
      %v1172 = vrot.slane %v1171, 1
      %v1173 = vmax.f32 %v1171, %v1172
      %v1174 = vsel %vm1068, %v1043, -inf
      %v1175 = vrot.slane %v1174, 4
      %v1176 = vmax.f32 %v1174, %v1175
      %v1177 = vrot.slane %v1176, 2
      %v1178 = vmax.f32 %v1176, %v1177
      %v1179 = vrot.slane %v1178, 1
      %v1180 = vmax.f32 %v1178, %v1179
      %v1181 = vsel %vm1068, %v1012, -inf
      %v1182 = vrot.slane %v1181, 4
      %v1183 = vmax.f32 %v1181, %v1182
      %v1184 = vrot.slane %v1183, 2
      %v1185 = vmax.f32 %v1183, %v1184
      %v1186 = vrot.slane %v1185, 1
      %v1187 = vmax.f32 %v1185, %v1186
      %v1188 = vsel %vm1068, %v1044, -inf
      %v1189 = vrot.slane %v1188, 4
      %v1190 = vmax.f32 %v1188, %v1189
      %v1191 = vrot.slane %v1190, 2
      %v1192 = vmax.f32 %v1190, %v1191
      %v1193 = vrot.slane %v1192, 1
      %v1194 = vmax.f32 %v1192, %v1193
      %v1195 = vsel %vm1068, %v1013, -inf
      %v1196 = vrot.slane %v1195, 4
      %v1197 = vmax.f32 %v1195, %v1196
      %v1198 = vrot.slane %v1197, 2
      %v1199 = vmax.f32 %v1197, %v1198
      %v1200 = vrot.slane %v1199, 1
      %v1201 = vmax.f32 %v1199, %v1200
      %v1202 = vsel %vm1068, %v1045, -inf
      %v1203 = vrot.slane %v1202, 4
      %v1204 = vmax.f32 %v1202, %v1203
      %v1205 = vrot.slane %v1204, 2
      %v1206 = vmax.f32 %v1204, %v1205
      %v1207 = vrot.slane %v1206, 1
      %v1208 = vmax.f32 %v1206, %v1207
      %v1209 = vsel %vm1068, %v1014, -inf
      %v1210 = vrot.slane %v1209, 4
      %v1211 = vmax.f32 %v1209, %v1210
      %v1212 = vrot.slane %v1211, 2
      %v1213 = vmax.f32 %v1211, %v1212
      %v1214 = vrot.slane %v1213, 1
      %v1215 = vmax.f32 %v1213, %v1214
      %v1216 = vsel %vm1068, %v1046, -inf
      %v1217 = vrot.slane %v1216, 4
      %v1218 = vmax.f32 %v1216, %v1217
      %v1219 = vrot.slane %v1218, 2
      %v1220 = vmax.f32 %v1218, %v1219
      %v1221 = vrot.slane %v1220, 1
      %v1222 = vmax.f32 %v1220, %v1221
      %v1223 = vsel %vm1068, %v1015, -inf
      %v1224 = vrot.slane %v1223, 4
      %v1225 = vmax.f32 %v1223, %v1224
      %v1226 = vrot.slane %v1225, 2
      %v1227 = vmax.f32 %v1225, %v1226
      %v1228 = vrot.slane %v1227, 1
      %v1229 = vmax.f32 %v1227, %v1228
      %v1230 = vsel %vm1068, %v1047, -inf
      %v1231 = vrot.slane %v1230, 4
      %v1232 = vmax.f32 %v1230, %v1231
      %v1233 = vrot.slane %v1232, 2
      %v1234 = vmax.f32 %v1232, %v1233
      %v1235 = vrot.slane %v1234, 1
      %v1236 = vmax.f32 %v1234, %v1235
      %v1237 = vsel %vm1068, %v1016, -inf
      %v1238 = vrot.slane %v1237, 4
      %v1239 = vmax.f32 %v1237, %v1238
      %v1240 = vrot.slane %v1239, 2
      %v1241 = vmax.f32 %v1239, %v1240
      %v1242 = vrot.slane %v1241, 1
      %v1243 = vmax.f32 %v1241, %v1242
      %v1244 = vsel %vm1068, %v1048, -inf
      %v1245 = vrot.slane %v1244, 4
      %v1246 = vmax.f32 %v1244, %v1245
      %v1247 = vrot.slane %v1246, 2
      %v1248 = vmax.f32 %v1246, %v1247
      %v1249 = vrot.slane %v1248, 1
      %v1250 = vmax.f32 %v1248, %v1249
      %v1251 = vsel %vm1068, %v1017, -inf
      %v1252 = vrot.slane %v1251, 4
      %v1253 = vmax.f32 %v1251, %v1252
      %v1254 = vrot.slane %v1253, 2
      %v1255 = vmax.f32 %v1253, %v1254
      %v1256 = vrot.slane %v1255, 1
      %v1257 = vmax.f32 %v1255, %v1256
      %v1258 = vsel %vm1068, %v1049, -inf
      %v1259 = vrot.slane %v1258, 4
      %v1260 = vmax.f32 %v1258, %v1259
      %v1261 = vrot.slane %v1260, 2
      %v1262 = vmax.f32 %v1260, %v1261
      %v1263 = vrot.slane %v1262, 1
      %v1264 = vmax.f32 %v1262, %v1263
      %v1265 = vsel %vm1068, %v1018, -inf
      %v1266 = vrot.slane %v1265, 4
      %v1267 = vmax.f32 %v1265, %v1266
      %v1268 = vrot.slane %v1267, 2
      %v1269 = vmax.f32 %v1267, %v1268
      %v1270 = vrot.slane %v1269, 1
      %v1271 = vmax.f32 %v1269, %v1270
      %v1272 = vsel %vm1068, %v1050, -inf
      %v1273 = vrot.slane %v1272, 4
      %v1274 = vmax.f32 %v1272, %v1273
      %v1275 = vrot.slane %v1274, 2
      %v1276 = vmax.f32 %v1274, %v1275
      %v1277 = vrot.slane %v1276, 1
      %v1278 = vmax.f32 %v1276, %v1277
      %v1279 = vsel %vm1068, %v1019, -inf
      %v1280 = vrot.slane %v1279, 4
      %v1281 = vmax.f32 %v1279, %v1280
      %v1282 = vrot.slane %v1281, 2
      %v1283 = vmax.f32 %v1281, %v1282
      %v1284 = vrot.slane %v1283, 1
      %v1285 = vmax.f32 %v1283, %v1284
      %v1286 = vsel %vm1068, %v1051, -inf
      %v1287 = vrot.slane %v1286, 4
      %v1288 = vmax.f32 %v1286, %v1287
      %v1289 = vrot.slane %v1288, 2
      %v1290 = vmax.f32 %v1288, %v1289
      %v1291 = vrot.slane %v1290, 1
      %v1292 = vmax.f32 %v1290, %v1291
      %v1293 = vld [vmem:[%s1 + $0x48] sm:$0xff]
      %v1294 = vld [vmem:[%s1 + $0x50] sm:$0xff]
      %v1295 = vld [vmem:[%s1 + $0x58] sm:$0xff]
      %v1296 = vld [vmem:[%s1 + $0x60] sm:$0xff]
      %v1297 = vld [vmem:[%s1 + $0x68] sm:$0xff]
      %v1298 = vld [vmem:[%s1 + $0x70] sm:$0xff]
      %vm1330 = vcmask 1042434
      %v1331 = vsel %vm1330, %v1082, %v1075
      %vm1332 = vcmask 1043459
      %v1333 = vsel %vm1332, %v1089, %v1331
      %vm1334 = vcmask 1044484
      %v1335 = vsel %vm1334, %v1096, %v1333
      %vm1336 = vcmask 1045509
      %v1337 = vsel %vm1336, %v1103, %v1335
      %vm1338 = vcmask 1046534
      %v1339 = vsel %vm1338, %v1110, %v1337
      %vm1340 = vcmask 1047559
      %v1341 = vsel %vm1340, %v1117, %v1339
      %vm1342 = vcmask 1041409
      %v1343 = vsel %vm1342, %v1131, %v1124
      %v1344 = vsel %vm1330, %v1138, %v1343
      %v1345 = vsel %vm1332, %v1145, %v1344
      %v1346 = vsel %vm1334, %v1152, %v1345
      %v1347 = vsel %vm1336, %v1159, %v1346
      %v1348 = vsel %vm1338, %v1166, %v1347
      %v1349 = vsel %vm1340, %v1173, %v1348
      %v1350 = vsel %vm1342, %v1187, %v1180
      %v1351 = vsel %vm1330, %v1194, %v1350
      %v1352 = vsel %vm1332, %v1201, %v1351
      %v1353 = vsel %vm1334, %v1208, %v1352
      %v1354 = vsel %vm1336, %v1215, %v1353
      %v1355 = vsel %vm1338, %v1222, %v1354
      %v1356 = vsel %vm1340, %v1229, %v1355
      %v1357 = vsel %vm1342, %v1243, %v1236
      %v1358 = vsel %vm1330, %v1250, %v1357
      %v1359 = vsel %vm1332, %v1257, %v1358
      %v1360 = vsel %vm1334, %v1264, %v1359
      %v1361 = vsel %vm1336, %v1271, %v1360
      %v1362 = vsel %vm1338, %v1278, %v1361
      %v1363 = vsel %vm1340, %v1285, %v1362
      %v1368 = vsel %vm180, 0.0, %v1341
      %v1370 = vsel %vm1342, %v1089, %v1082
      %v1371 = vsel %vm1330, %v1096, %v1370
      %v1372 = vsel %vm1332, %v1103, %v1371
      %v1373 = vsel %vm1334, %v1110, %v1372
      %v1374 = vsel %vm1336, %v1117, %v1373
      %v1375 = vsel %vm1338, %v1124, %v1374
      %v1376 = vsel %vm1340, %v1131, %v1375
      %v1377 = vsel %vm1342, %v1145, %v1138
      %v1378 = vsel %vm1330, %v1152, %v1377
      %v1379 = vsel %vm1332, %v1159, %v1378
      %v1380 = vsel %vm1334, %v1166, %v1379
      %v1381 = vsel %vm1336, %v1173, %v1380
      %v1382 = vsel %vm1338, %v1180, %v1381
      %v1383 = vsel %vm1340, %v1187, %v1382
      %v1384 = vsel %vm1342, %v1201, %v1194
      %v1385 = vsel %vm1330, %v1208, %v1384
      %v1386 = vsel %vm1332, %v1215, %v1385
      %v1387 = vsel %vm1334, %v1222, %v1386
      %v1388 = vsel %vm1336, %v1229, %v1387
      %v1389 = vsel %vm1338, %v1236, %v1388
      %v1390 = vsel %vm1340, %v1243, %v1389
      %v1391 = vsel %vm1342, %v1257, %v1250
      %v1392 = vsel %vm1330, %v1264, %v1391
      %v1393 = vsel %vm1332, %v1271, %v1392
      %v1394 = vsel %vm1334, %v1278, %v1393
      %v1395 = vsel %vm1336, %v1285, %v1394
      %v1396 = vsel %vm1338, %v1292, %v1395
      %v1398 = vsel %vm399, %v1396, 0.0
      %v1399 = vsel %vm1342, %v1082, %v1075
      %v1400 = vsel %vm1330, %v1089, %v1399
      %v1401 = vsel %vm1332, %v1096, %v1400
      %v1402 = vsel %vm1334, %v1103, %v1401
      %v1403 = vsel %vm1336, %v1110, %v1402
      %v1404 = vsel %vm1338, %v1117, %v1403
      %v1405 = vsel %vm1340, %v1124, %v1404
      %v1406 = vsel %vm1342, %v1138, %v1131
      %v1407 = vsel %vm1330, %v1145, %v1406
      %v1408 = vsel %vm1332, %v1152, %v1407
      %v1409 = vsel %vm1334, %v1159, %v1408
      %v1410 = vsel %vm1336, %v1166, %v1409
      %v1411 = vsel %vm1338, %v1173, %v1410
      %v1412 = vsel %vm1340, %v1180, %v1411
      %v1413 = vsel %vm1342, %v1194, %v1187
      %v1414 = vsel %vm1330, %v1201, %v1413
      %v1415 = vsel %vm1332, %v1208, %v1414
      %v1416 = vsel %vm1334, %v1215, %v1415
      %v1417 = vsel %vm1336, %v1222, %v1416
      %v1418 = vsel %vm1338, %v1229, %v1417
      %v1419 = vsel %vm1340, %v1236, %v1418
      %v1420 = vsel %vm1342, %v1250, %v1243
      %v1421 = vsel %vm1330, %v1257, %v1420
      %v1422 = vsel %vm1332, %v1264, %v1421
      %v1423 = vsel %vm1334, %v1271, %v1422
      %v1424 = vsel %vm1336, %v1278, %v1423
      %v1425 = vsel %vm1338, %v1285, %v1424
      %v1426 = vsel %vm1340, %v1292, %v1425
      %1427 = vrot.lane.b32.xlu0 %v1405, 16
      %v1428 = vpop.permute.xlu0 %1427
      %1429 = vrot.lane.b32.xlu0 %v1412, 16
      %v1430 = vpop.permute.xlu0 %1429
      %1431 = vrot.lane.b32.xlu0 %v1419, 16
      %v1432 = vpop.permute.xlu0 %1431
      %1433 = vrot.lane.b32.xlu0 %v1426, 16
      %v1434 = vpop.permute.xlu0 %1433
      %1440 = vrot.lane.b32.xlu0 %v1376, 32
      %v1441 = vpop.permute.xlu0 %1440
      %1442 = vrot.lane.b32.xlu0 %v1383, 32
      %v1443 = vpop.permute.xlu0 %1442
      %1444 = vrot.lane.b32.xlu0 %v1390, 32
      %v1445 = vpop.permute.xlu0 %1444
      %1446 = vrot.lane.b32.xlu0 %v1398, 32
      %v1447 = vpop.permute.xlu0 %1446
      %v1452 = vsel %vm771, %v1368, %v1428
      %v1453 = vsel %vm771, %v1349, %v1430
      %v1454 = vsel %vm771, %v1356, %v1432
      %v1455 = vsel %vm771, %v1363, %v1434
      %v1456 = vsel %vm788, %v1452, %v1441
      %v1457 = vsel %vm788, %v1453, %v1443
      %v1458 = vsel %vm788, %v1454, %v1445
      %v1459 = vsel %vm788, %v1455, %v1447
      %v1460 = vld [vmem:[%s1 + $0x78] sm:$0x1]
      %v1461 = vlaneseq
      %v1462 = vshrl.u32 %v1461, 7
      %v1463 = vsub.s32 0, %v1462
      %v1464 = vrot.slane %v1460, %v1463
      %v1466 = vsel %vm810, %v1456, 0
      %v1469 = vsel %vm810, %v1457, 0
      %v1472 = vsel %vm810, %v1458, 0
      %v1475 = vsel %vm810, %v1459, 0
      %1477 = vmatprep.subr.mxu0 0.0
      %1478 = vmatpush1.msra.mxu0 %v1293
      %1479 = vmatprep.subr.mxu0 0.0
      %1480 = vmatpush1.msra.mxu0 %v1294
      %1481 = vmatprep.subr.mxu0 0.0
      %1482 = vmatpush1.msra.mxu0 %v1295
      %1483 = vmatprep.subr.mxu0 0.0
      %1484 = vmatpush1.msra.mxu0 %v1296
      %1485 = vmatprep.subr.mxu0 0.0
      %1486 = vmatpush1.msra.mxu0 %v1297
      %1487 = vmatprep.subr.mxu0 0.0
      %1488 = vmatpush1.msra.mxu0 %v1298
      %1489 = vmatprep.subr.mxu0 0.0
      %1490 = vmatpush1.msra.mxu0 0.0
      %1491 = vmatprep.subr.mxu0 0.0
      %1492 = vmatpush1.msra.mxu0 0.0
      %1493 = vmatprep.subr.mxu0 0.0
      %1494 = vmatpush1.msra.mxu0 0.0
      %1495 = vmatprep.subr.mxu0 0.0
      %1496 = vmatpush1.msra.mxu0 0.0
      %1497 = vmatprep.subr.mxu0 0.0
      %1498 = vmatpush1.msra.mxu0 0.0
      %1499 = vmatprep.subr.mxu0 0.0
      %1500 = vmatpush1.msra.mxu0 0.0
      %1501 = vmatprep.subr.mxu0 0.0
      %1502 = vmatpush1.msra.mxu0 0.0
      %1503 = vmatprep.subr.mxu0 0.0
      %1504 = vmatpush1.msra.mxu0 0.0
      %1505 = vmatprep.subr.mxu0 0.0
      %1506 = vmatpush1.msra.mxu0 0.0
      %1507 = vmatprep.subr.mxu0 0.0
      %1508 = vmatpush1.msra.mxu0 0.0
      %1509 = vmatprep.subr.mxu0 0.0
      %1510 = vmatpush1.msra.mxu0 0.0
      %1511 = vmatprep.subr.mxu0 0.0
      %1512 = vmatpush1.msra.mxu0 0.0
      %1513 = vmatprep.subr.mxu0 0.0
      %1514 = vmatpush1.msra.mxu0 0.0
      %1515 = vmatprep.subr.mxu0 0.0
      %1516 = vmatpush1.msra.mxu0 0.0
      %1517 = vmatprep.subr.mxu0 0.0
      %1518 = vmatpush1.msra.mxu0 0.0
      %1519 = vmatprep.subr.mxu0 0.0
      %1520 = vmatpush1.msra.mxu0 0.0
      %1521 = vmatprep.subr.mxu0 0.0
      %1522 = vmatpush1.msra.mxu0 0.0
      %1523 = vmatprep.subr.mxu0 0.0
      %1524 = vmatpush1.msra.mxu0 0.0
      %1525 = vmatprep.subr.mxu0 0.0
      %1526 = vmatpush1.msra.mxu0 0.0
      %1527 = vmatprep.subr.mxu0 0.0
      %1528 = vmatpush1.msra.mxu0 0.0
      %1529 = vmatprep.subr.mxu0 0.0
      %1530 = vmatpush1.msra.mxu0 0.0
      %1531 = vmatprep.subr.mxu0 0.0
      %1532 = vmatpush1.msra.mxu0 0.0
      %1533 = vmatprep.subr.mxu0 0.0
      %1534 = vmatpush1.msra.mxu0 0.0
      %1535 = vmatprep.subr.mxu0 0.0
      %1536 = vmatpush1.msra.mxu0 0.0
      %1537 = vmatprep.subr.mxu0 0.0
      %1538 = vmatpush1.msra.mxu0 0.0
      %1539 = vmatprep.subr.mxu0 0.0
      %1540 = vmatpush1.msra.mxu0 0.0
      %1541 = vmatprep.mubr.f32.mxu0 0.0
      %1542 = vmatmul.mubr.f32.gmra.mrb[0].mxu0 %v1466
      %v1543 = vpop.f32.mrb[0].mxu0
      %v1544 = vadd.f32 %v1464, %v1543
      %v1545 = vpop.f32.mrb[0].mxu0
      %1546 = vmatprep.mubr.f32.mxu0 0.0
      %1547 = vmatmul.mubr.f32.gmra.mrb[0].mxu0 %v1469
      %v1548 = vpop.f32.mrb[0].mxu0
      %v1549 = vadd.f32 %v1464, %v1548
      %v1550 = vpop.f32.mrb[0].mxu0
      %1551 = vmatprep.mubr.f32.mxu0 0.0
      %1552 = vmatmul.mubr.f32.gmra.mrb[0].mxu0 %v1472
      %v1553 = vpop.f32.mrb[0].mxu0
      %v1554 = vadd.f32 %v1464, %v1553
      %v1555 = vpop.f32.mrb[0].mxu0
      %1556 = vmatprep.mubr.f32.mxu0 0.0
      %1557 = vmatmul.mubr.f32.gmra.mrb[0].mxu0 %v1475
      %v1558 = vpop.f32.mrb[0].mxu0
      %v1559 = vadd.f32 %v1464, %v1558
      %v1560 = vpop.f32.mrb[0].mxu0
      %1561 = vdwg.mxu0
      %v1562 = vmax.f32 %v1544, 0.0
      %v1563 = vmax.f32 %v1549, 0.0
      %v1564 = vmax.f32 %v1554, 0.0
      %v1565 = vmax.f32 %v1559, 0.0
      %v1566 = vld [vmem:[%s1 + $0x80] sm:$0xff]
      %v1567 = vld [vmem:[%s1 + $0x88] sm:$0xff]
      %v1568 = vld [vmem:[%s1 + $0x90] sm:$0xff]
      %v1569 = vld [vmem:[%s1 + $0x98] sm:$0xff]
      %v1570 = vld [vmem:[%s1 + $0xa0] sm:$0xff]
      %v1571 = vld [vmem:[%s1 + $0xa8] sm:$0xff]
      %v1572 = vld [vmem:[%s1 + $0xb0] sm:$0xff]
      %v1573 = vld [vmem:[%s1 + $0xb8] sm:$0xff]
      %v1574 = vld [vmem:[%s1 + $0xc0] sm:$0xff]
      %v1575 = vld [vmem:[%s1 + $0xc8] sm:$0xff]
      %v1576 = vld [vmem:[%s1 + $0xd0] sm:$0xff]
      %v1577 = vld [vmem:[%s1 + $0xd8] sm:$0xff]
      %v1582 = vrot.slane %v1562, 7
      %v1583 = vrot.slane %v1563, 7
      %v1584 = vsel %vm180, %v1582, %v1583
      %v1585 = vrot.slane %v1564, 7
      %v1586 = vsel %vm180, %v1583, %v1585
      %v1587 = vrot.slane %v1565, 7
      %v1588 = vsel %vm180, %v1585, %v1587
      %v1593 = vsel %vm180, 0.0, %v1582
      %v1594 = vrot.slane %v1562, 1
      %v1595 = vrot.slane %v1563, 1
      %v1596 = vsel %vm399, %v1594, %v1595
      %v1597 = vrot.slane %v1564, 1
      %v1598 = vsel %vm399, %v1595, %v1597
      %v1599 = vrot.slane %v1565, 1
      %v1600 = vsel %vm399, %v1597, %v1599
      %v1602 = vsel %vm399, %v1599, 0.0
      %1603 = vrot.lane.b32.xlu0 %v1562, 32
      %v1604 = vpop.permute.xlu0 %1603
      %1605 = vrot.lane.b32.xlu0 %v1563, 32
      %v1606 = vpop.permute.xlu0 %1605
      %1607 = vrot.lane.b32.xlu0 %v1564, 32
      %v1608 = vpop.permute.xlu0 %1607
      %1609 = vrot.lane.b32.xlu0 %v1565, 32
      %v1610 = vpop.permute.xlu0 %1609
      %1616 = vrot.lane.b32.xlu0 %v1596, 64
      %v1617 = vpop.permute.xlu0 %1616
      %1618 = vrot.lane.b32.xlu0 %v1598, 64
      %v1619 = vpop.permute.xlu0 %1618
      %1620 = vrot.lane.b32.xlu0 %v1600, 64
      %v1621 = vpop.permute.xlu0 %1620
      %1622 = vrot.lane.b32.xlu0 %v1602, 64
      %v1623 = vpop.permute.xlu0 %1622
      %v1628 = vsel %vm788, %v1593, %v1604
      %v1629 = vsel %vm788, %v1584, %v1606
      %v1630 = vsel %vm788, %v1586, %v1608
      %v1631 = vsel %vm788, %v1588, %v1610
      %vm1632 = vcmask 523264
      %v1633 = vsel %vm1632, %v1628, %v1617
      %v1634 = vsel %vm1632, %v1629, %v1619
      %v1635 = vsel %vm1632, %v1630, %v1621
      %v1636 = vsel %vm1632, %v1631, %v1623
      %v1637 = vld [vmem:[%s1 + $0xe0] sm:$0x1]
      %v1638 = vlaneseq
      %v1639 = vshrl.u32 %v1638, 7
      %v1640 = vsub.s32 0, %v1639
      %v1641 = vrot.slane %v1637, %v1640
      %vm1642 = vcmask 785408
      %v1644 = vsel %vm1642, %v1633, 0
      %v1647 = vsel %vm1642, %v1634, 0
      %v1650 = vsel %vm1642, %v1635, 0
      %v1653 = vsel %vm1642, %v1636, 0
      %1655 = vmatprep.subr.mxu0 0.0
      %1656 = vmatpush1.msra.mxu0 %v1566
      %1657 = vmatprep.subr.mxu0 0.0
      %1658 = vmatpush1.msra.mxu0 %v1567
      %1659 = vmatprep.subr.mxu0 0.0
      %1660 = vmatpush1.msra.mxu0 %v1568
      %1661 = vmatprep.subr.mxu0 0.0
      %1662 = vmatpush1.msra.mxu0 %v1569
      %1663 = vmatprep.subr.mxu0 0.0
      %1664 = vmatpush1.msra.mxu0 %v1570
      %1665 = vmatprep.subr.mxu0 0.0
      %1666 = vmatpush1.msra.mxu0 %v1571
      %1667 = vmatprep.subr.mxu0 0.0
      %1668 = vmatpush1.msra.mxu0 %v1572
      %1669 = vmatprep.subr.mxu0 0.0
      %1670 = vmatpush1.msra.mxu0 %v1573
      %1671 = vmatprep.subr.mxu0 0.0
      %1672 = vmatpush1.msra.mxu0 %v1574
      %1673 = vmatprep.subr.mxu0 0.0
      %1674 = vmatpush1.msra.mxu0 %v1575
      %1675 = vmatprep.subr.mxu0 0.0
      %1676 = vmatpush1.msra.mxu0 %v1576
      %1677 = vmatprep.subr.mxu0 0.0
      %1678 = vmatpush1.msra.mxu0 %v1577
      %1679 = vmatprep.subr.mxu0 0.0
      %1680 = vmatpush1.msra.mxu0 0.0
      %1681 = vmatprep.subr.mxu0 0.0
      %1682 = vmatpush1.msra.mxu0 0.0
      %1683 = vmatprep.subr.mxu0 0.0
      %1684 = vmatpush1.msra.mxu0 0.0
      %1685 = vmatprep.subr.mxu0 0.0
      %1686 = vmatpush1.msra.mxu0 0.0
      %1687 = vmatprep.subr.mxu0 0.0
      %1688 = vmatpush1.msra.mxu0 0.0
      %1689 = vmatprep.subr.mxu0 0.0
      %1690 = vmatpush1.msra.mxu0 0.0
      %1691 = vmatprep.subr.mxu0 0.0
      %1692 = vmatpush1.msra.mxu0 0.0
      %1693 = vmatprep.subr.mxu0 0.0
      %1694 = vmatpush1.msra.mxu0 0.0
      %1695 = vmatprep.subr.mxu0 0.0
      %1696 = vmatpush1.msra.mxu0 0.0
      %1697 = vmatprep.subr.mxu0 0.0
      %1698 = vmatpush1.msra.mxu0 0.0
      %1699 = vmatprep.subr.mxu0 0.0
      %1700 = vmatpush1.msra.mxu0 0.0
      %1701 = vmatprep.subr.mxu0 0.0
      %1702 = vmatpush1.msra.mxu0 0.0
      %1703 = vmatprep.subr.mxu0 0.0
      %1704 = vmatpush1.msra.mxu0 0.0
      %1705 = vmatprep.subr.mxu0 0.0
      %1706 = vmatpush1.msra.mxu0 0.0
      %1707 = vmatprep.subr.mxu0 0.0
      %1708 = vmatpush1.msra.mxu0 0.0
      %1709 = vmatprep.subr.mxu0 0.0
      %1710 = vmatpush1.msra.mxu0 0.0
      %1711 = vmatprep.subr.mxu0 0.0
      %1712 = vmatpush1.msra.mxu0 0.0
      %1713 = vmatprep.subr.mxu0 0.0
      %1714 = vmatpush1.msra.mxu0 0.0
      %1715 = vmatprep.subr.mxu0 0.0
      %1716 = vmatpush1.msra.mxu0 0.0
      %1717 = vmatprep.subr.mxu0 0.0
      %1718 = vmatpush1.msra.mxu0 0.0
      %1719 = vmatprep.mubr.f32.mxu0 0.0
      %1720 = vmatmul.mubr.f32.gmra.mrb[0].mxu0 %v1644
      %v1721 = vpop.f32.mrb[0].mxu0
      %v1722 = vadd.f32 %v1641, %v1721
      %v1723 = vpop.f32.mrb[0].mxu0
      %1724 = vmatprep.mubr.f32.mxu0 0.0
      %1725 = vmatmul.mubr.f32.gmra.mrb[0].mxu0 %v1647
      %v1726 = vpop.f32.mrb[0].mxu0
      %v1727 = vadd.f32 %v1641, %v1726
      %v1728 = vpop.f32.mrb[0].mxu0
      %1729 = vmatprep.mubr.f32.mxu0 0.0
      %1730 = vmatmul.mubr.f32.gmra.mrb[0].mxu0 %v1650
      %v1731 = vpop.f32.mrb[0].mxu0
      %v1732 = vadd.f32 %v1641, %v1731
      %v1733 = vpop.f32.mrb[0].mxu0
      %1734 = vmatprep.mubr.f32.mxu0 0.0
      %1735 = vmatmul.mubr.f32.gmra.mrb[0].mxu0 %v1653
      %v1736 = vpop.f32.mrb[0].mxu0
      %v1737 = vadd.f32 %v1641, %v1736
      %v1738 = vpop.f32.mrb[0].mxu0
      %1739 = vdwg.mxu0
      %v1740 = vmax.f32 %v1722, 0.0
      %v1741 = vmax.f32 %v1727, 0.0
      %v1742 = vmax.f32 %v1732, 0.0
      %v1743 = vmax.f32 %v1737, 0.0
      %v1748 = vcombine.high %v1740, %v1740
      %v1749 = vcombine.high %v1741, %v1741
      %v1750 = vcombine.high %v1742, %v1742
      %v1751 = vcombine.high %v1743, %v1743
      %vm1756 = vcmask 257024
      %v1757 = vsel %vm1756, %v1740, -inf
      %v1758 = vrot.slane %v1757, 4
      %v1759 = vmax.f32 %v1757, %v1758
      %v1760 = vrot.slane %v1759, 2
      %v1761 = vmax.f32 %v1759, %v1760
      %v1762 = vrot.slane %v1761, 1
      %v1763 = vmax.f32 %v1761, %v1762
      %v1764 = vsel %vm1756, %v1748, -inf
      %v1765 = vrot.slane %v1764, 4
      %v1766 = vmax.f32 %v1764, %v1765
      %v1767 = vrot.slane %v1766, 2
      %v1768 = vmax.f32 %v1766, %v1767
      %v1769 = vrot.slane %v1768, 1
      %v1770 = vmax.f32 %v1768, %v1769
      %v1771 = vsel %vm1756, %v1741, -inf
      %v1772 = vrot.slane %v1771, 4
      %v1773 = vmax.f32 %v1771, %v1772
      %v1774 = vrot.slane %v1773, 2
      %v1775 = vmax.f32 %v1773, %v1774
      %v1776 = vrot.slane %v1775, 1
      %v1777 = vmax.f32 %v1775, %v1776
      %v1778 = vsel %vm1756, %v1749, -inf
      %v1779 = vrot.slane %v1778, 4
      %v1780 = vmax.f32 %v1778, %v1779
      %v1781 = vrot.slane %v1780, 2
      %v1782 = vmax.f32 %v1780, %v1781
      %v1783 = vrot.slane %v1782, 1
      %v1784 = vmax.f32 %v1782, %v1783
      %v1785 = vsel %vm1756, %v1742, -inf
      %v1786 = vrot.slane %v1785, 4
      %v1787 = vmax.f32 %v1785, %v1786
      %v1788 = vrot.slane %v1787, 2
      %v1789 = vmax.f32 %v1787, %v1788
      %v1790 = vrot.slane %v1789, 1
      %v1791 = vmax.f32 %v1789, %v1790
      %v1792 = vsel %vm1756, %v1750, -inf
      %v1793 = vrot.slane %v1792, 4
      %v1794 = vmax.f32 %v1792, %v1793
      %v1795 = vrot.slane %v1794, 2
      %v1796 = vmax.f32 %v1794, %v1795
      %v1797 = vrot.slane %v1796, 1
      %v1798 = vmax.f32 %v1796, %v1797
      %v1799 = vsel %vm1756, %v1743, -inf
      %v1800 = vrot.slane %v1799, 4
      %v1801 = vmax.f32 %v1799, %v1800
      %v1802 = vrot.slane %v1801, 2
      %v1803 = vmax.f32 %v1801, %v1802
      %v1804 = vrot.slane %v1803, 1
      %v1805 = vmax.f32 %v1803, %v1804
      %v1806 = vsel %vm1756, %v1751, -inf
      %v1807 = vrot.slane %v1806, 4
      %v1808 = vmax.f32 %v1806, %v1807
      %v1809 = vrot.slane %v1808, 2
      %v1810 = vmax.f32 %v1808, %v1809
      %v1811 = vrot.slane %v1810, 1
      %v1812 = vmax.f32 %v1810, %v1811
      %v1813 = vld [vmem:[%s1 + $0xe8] sm:$0xff]
      %v1814 = vld [vmem:[%s1 + $0xf0] sm:$0xff]
      %v1815 = vld [vmem:[%s1 + $0xf8] sm:$0xff]
      %v1816 = vld [vmem:[%s1 + $0x100] sm:$0xff]
      %v1817 = vld [vmem:[%s1 + $0x108] sm:$0xff]
      %v1818 = vld [vmem:[%s1 + $0x110] sm:$0xff]
      %v1819 = vld [vmem:[%s1 + $0x118] sm:$0xff]
      %v1820 = vld [vmem:[%s1 + $0x120] sm:$0xff]
      %v1821 = vld [vmem:[%s1 + $0x128] sm:$0xff]
      %v1822 = vld [vmem:[%s1 + $0x130] sm:$0xff]
      %v1823 = vld [vmem:[%s1 + $0x138] sm:$0xff]
      %v1824 = vld [vmem:[%s1 + $0x140] sm:$0xff]
      %v1832 = vsel %vm1330, %v1770, %v1763
      %v1833 = vsel %vm1332, %v1777, %v1832
      %v1834 = vsel %vm1334, %v1784, %v1833
      %v1835 = vsel %vm1336, %v1791, %v1834
      %v1836 = vsel %vm1338, %v1798, %v1835
      %v1837 = vsel %vm1340, %v1805, %v1836
      %v1839 = vsel %vm180, 0.0, %v1837
      %v1841 = vsel %vm1342, %v1777, %v1770
      %v1842 = vsel %vm1330, %v1784, %v1841
      %v1843 = vsel %vm1332, %v1791, %v1842
      %v1844 = vsel %vm1334, %v1798, %v1843
      %v1845 = vsel %vm1336, %v1805, %v1844
      %v1846 = vsel %vm1338, %v1812, %v1845
      %v1848 = vsel %vm399, %v1846, 0.0
      %v1849 = vsel %vm1342, %v1770, %v1763
      %v1850 = vsel %vm1330, %v1777, %v1849
      %v1851 = vsel %vm1332, %v1784, %v1850
      %v1852 = vsel %vm1334, %v1791, %v1851
      %v1853 = vsel %vm1336, %v1798, %v1852
      %v1854 = vsel %vm1338, %v1805, %v1853
      %v1855 = vsel %vm1340, %v1812, %v1854
      %1856 = vrot.lane.b32.xlu0 %v1855, 32
      %v1857 = vpop.permute.xlu0 %1856
      %1860 = vrot.lane.b32.xlu0 %v1848, 64
      %v1861 = vpop.permute.xlu0 %1860
      %v1863 = vsel %vm788, %v1839, %v1857
      %v1864 = vsel %vm1632, %v1863, %v1861
      %v1865 = vld [vmem:[%s1 + $0x148] sm:$0x1]
      %v1866 = vlaneseq
      %v1867 = vshrl.u32 %v1866, 7
      %v1868 = vsub.s32 0, %v1867
      %v1869 = vrot.slane %v1865, %v1868
      %v1871 = vsel %vm1642, %v1864, 0
      %1873 = vmatprep.subr.mxu0 0.0
      %1874 = vmatpush1.msra.mxu0 %v1813
      %1875 = vmatprep.subr.mxu0 0.0
      %1876 = vmatpush1.msra.mxu0 %v1814
      %1877 = vmatprep.subr.mxu0 0.0
      %1878 = vmatpush1.msra.mxu0 %v1815
      %1879 = vmatprep.subr.mxu0 0.0
      %1880 = vmatpush1.msra.mxu0 %v1816
      %1881 = vmatprep.subr.mxu0 0.0
      %1882 = vmatpush1.msra.mxu0 %v1817
      %1883 = vmatprep.subr.mxu0 0.0
      %1884 = vmatpush1.msra.mxu0 %v1818
      %1885 = vmatprep.subr.mxu0 0.0
      %1886 = vmatpush1.msra.mxu0 %v1819
      %1887 = vmatprep.subr.mxu0 0.0
      %1888 = vmatpush1.msra.mxu0 %v1820
      %1889 = vmatprep.subr.mxu0 0.0
      %1890 = vmatpush1.msra.mxu0 %v1821
      %1891 = vmatprep.subr.mxu0 0.0
      %1892 = vmatpush1.msra.mxu0 %v1822
      %1893 = vmatprep.subr.mxu0 0.0
      %1894 = vmatpush1.msra.mxu0 %v1823
      %1895 = vmatprep.subr.mxu0 0.0
      %1896 = vmatpush1.msra.mxu0 %v1824
      %1897 = vmatprep.subr.mxu0 0.0
      %1898 = vmatpush1.msra.mxu0 0.0
      %1899 = vmatprep.subr.mxu0 0.0
      %1900 = vmatpush1.msra.mxu0 0.0
      %1901 = vmatprep.subr.mxu0 0.0
      %1902 = vmatpush1.msra.mxu0 0.0
      %1903 = vmatprep.subr.mxu0 0.0
      %1904 = vmatpush1.msra.mxu0 0.0
      %1905 = vmatprep.subr.mxu0 0.0
      %1906 = vmatpush1.msra.mxu0 0.0
      %1907 = vmatprep.subr.mxu0 0.0
      %1908 = vmatpush1.msra.mxu0 0.0
      %1909 = vmatprep.subr.mxu0 0.0
      %1910 = vmatpush1.msra.mxu0 0.0
      %1911 = vmatprep.subr.mxu0 0.0
      %1912 = vmatpush1.msra.mxu0 0.0
      %1913 = vmatprep.subr.mxu0 0.0
      %1914 = vmatpush1.msra.mxu0 0.0
      %1915 = vmatprep.subr.mxu0 0.0
      %1916 = vmatpush1.msra.mxu0 0.0
      %1917 = vmatprep.subr.mxu0 0.0
      %1918 = vmatpush1.msra.mxu0 0.0
      %1919 = vmatprep.subr.mxu0 0.0
      %1920 = vmatpush1.msra.mxu0 0.0
      %1921 = vmatprep.subr.mxu0 0.0
      %1922 = vmatpush1.msra.mxu0 0.0
      %1923 = vmatprep.subr.mxu0 0.0
      %1924 = vmatpush1.msra.mxu0 0.0
      %1925 = vmatprep.subr.mxu0 0.0
      %1926 = vmatpush1.msra.mxu0 0.0
      %1927 = vmatprep.subr.mxu0 0.0
      %1928 = vmatpush1.msra.mxu0 0.0
      %1929 = vmatprep.subr.mxu0 0.0
      %1930 = vmatpush1.msra.mxu0 0.0
      %1931 = vmatprep.subr.mxu0 0.0
      %1932 = vmatpush1.msra.mxu0 0.0
      %1933 = vmatprep.subr.mxu0 0.0
      %1934 = vmatpush1.msra.mxu0 0.0
      %1935 = vmatprep.subr.mxu0 0.0
      %1936 = vmatpush1.msra.mxu0 0.0
      %1937 = vmatprep.mubr.f32.mxu0 0.0
      %1938 = vmatmul.mubr.f32.gmra.mrb[0].mxu0 %v1871
      %v1939 = vpop.f32.mrb[0].mxu0
      %v1940 = vadd.f32 %v1869, %v1939
      %v1941 = vpop.f32.mrb[0].mxu0
      %1942 = vdwg.mxu0
      %v1943 = vmax.f32 %v1940, 0.0
      %v1944 = vld [vmem:[%s1 + $0x150] sm:$0xff]
      %v1945 = vld [vmem:[%s1 + $0x158] sm:$0xff]
      %v1946 = vld [vmem:[%s1 + $0x160] sm:$0xff]
      %v1947 = vld [vmem:[%s1 + $0x168] sm:$0xff]
      %v1948 = vld [vmem:[%s1 + $0x170] sm:$0xff]
      %v1949 = vld [vmem:[%s1 + $0x178] sm:$0xff]
      %v1950 = vld [vmem:[%s1 + $0x180] sm:$0xff]
      %v1951 = vld [vmem:[%s1 + $0x188] sm:$0xff]
      %v1952 = vld [vmem:[%s1 + $0x190] sm:$0xff]
      %v1953 = vld [vmem:[%s1 + $0x198] sm:$0xff]
      %v1954 = vld [vmem:[%s1 + $0x1a0] sm:$0xff]
      %v1955 = vld [vmem:[%s1 + $0x1a8] sm:$0xff]
      %v1956 = vld [vmem:[%s1 + $0x1b0] sm:$0xff]
      %v1957 = vld [vmem:[%s1 + $0x1b8] sm:$0xff]
      %v1958 = vld [vmem:[%s1 + $0x1c0] sm:$0xff]
      %v1959 = vld [vmem:[%s1 + $0x1c8] sm:$0xff]
      %v1960 = vld [vmem:[%s1 + $0x1d0] sm:$0xff]
      %v1961 = vld [vmem:[%s1 + $0x1d8] sm:$0xff]
      %v1962 = vld [vmem:[%s1 + $0x1e0] sm:$0xff]
      %v1963 = vld [vmem:[%s1 + $0x1e8] sm:$0xff]
      %v1964 = vld [vmem:[%s1 + $0x1f0] sm:$0xff]
      %v1965 = vld [vmem:[%s1 + $0x1f8] sm:$0xff]
      %v1966 = vld [vmem:[%s1 + $0x200] sm:$0xff]
      %v1967 = vld [vmem:[%s1 + $0x208] sm:$0xff]
      %v1969 = vrot.slane %v1943, 7
      %v1971 = vsel %vm180, 0.0, %v1969
      %v1972 = vrot.slane %v1943, 1
      %v1974 = vsel %vm399, %v1972, 0.0
      %1975 = vrot.lane.b32.xlu0 %v1943, 64
      %v1976 = vpop.permute.xlu0 %1975
      %v1978 = vsel %vm1632, %v1971, %v1976
      %v1979 = vld [vmem:[%s1 + $0x210] sm:$0x1]
      %v1980 = vlaneseq
      %v1981 = vshrl.u32 %v1980, 7
      %v1982 = vsub.s32 0, %v1981
      %v1983 = vrot.slane %v1979, %v1982
      %v1985 = vsel %vm1632, %v1974, 0
      %1987 = vmatprep.subr.mxu0 0.0
      %1988 = vmatpush1.msra.mxu0 %v1944
      %1989 = vmatprep.subr.mxu0 0.0
      %1990 = vmatpush1.msra.mxu0 %v1945
      %1991 = vmatprep.subr.mxu0 0.0
      %1992 = vmatpush1.msra.mxu0 %v1946
      %1993 = vmatprep.subr.mxu0 0.0
      %1994 = vmatpush1.msra.mxu0 %v1947
      %1995 = vmatprep.subr.mxu0 0.0
      %1996 = vmatpush1.msra.mxu0 %v1948
      %1997 = vmatprep.subr.mxu0 0.0
      %1998 = vmatpush1.msra.mxu0 %v1949
      %1999 = vmatprep.subr.mxu0 0.0
      %2000 = vmatpush1.msra.mxu0 %v1950
      %2001 = vmatprep.subr.mxu0 0.0
      %2002 = vmatpush1.msra.mxu0 %v1951
      %2003 = vmatprep.subr.mxu0 0.0
      %2004 = vmatpush1.msra.mxu0 %v1952
      %2005 = vmatprep.subr.mxu0 0.0
      %2006 = vmatpush1.msra.mxu0 %v1953
      %2007 = vmatprep.subr.mxu0 0.0
      %2008 = vmatpush1.msra.mxu0 %v1954
      %2009 = vmatprep.subr.mxu0 0.0
      %2010 = vmatpush1.msra.mxu0 %v1955
      %2011 = vmatprep.subr.mxu0 0.0
      %2012 = vmatpush1.msra.mxu0 %v1956
      %2013 = vmatprep.subr.mxu0 0.0
      %2014 = vmatpush1.msra.mxu0 %v1957
      %2015 = vmatprep.subr.mxu0 0.0
      %2016 = vmatpush1.msra.mxu0 %v1958
      %2017 = vmatprep.subr.mxu0 0.0
      %2018 = vmatpush1.msra.mxu0 %v1959
      %2019 = vmatprep.subr.mxu0 0.0
      %2020 = vmatpush1.msra.mxu0 %v1960
      %2021 = vmatprep.subr.mxu0 0.0
      %2022 = vmatpush1.msra.mxu0 %v1961
      %2023 = vmatprep.subr.mxu0 0.0
      %2024 = vmatpush1.msra.mxu0 %v1962
      %2025 = vmatprep.subr.mxu0 0.0
      %2026 = vmatpush1.msra.mxu0 %v1963
      %2027 = vmatprep.subr.mxu0 0.0
      %2028 = vmatpush1.msra.mxu0 %v1964
      %2029 = vmatprep.subr.mxu0 0.0
      %2030 = vmatpush1.msra.mxu0 %v1965
      %2031 = vmatprep.subr.mxu0 0.0
      %2032 = vmatpush1.msra.mxu0 %v1966
      %2033 = vmatprep.subr.mxu0 0.0
      %2034 = vmatpush1.msra.mxu0 %v1967
      %2035 = vmatprep.subr.mxu0 0.0
      %2036 = vmatpush1.msra.mxu0 0.0
      %2037 = vmatprep.subr.mxu0 0.0
      %2038 = vmatpush1.msra.mxu0 0.0
      %2039 = vmatprep.subr.mxu0 0.0
      %2040 = vmatpush1.msra.mxu0 0.0
      %2041 = vmatprep.subr.mxu0 0.0
      %2042 = vmatpush1.msra.mxu0 0.0
      %2043 = vmatprep.subr.mxu0 0.0
      %2044 = vmatpush1.msra.mxu0 0.0
      %2045 = vmatprep.subr.mxu0 0.0
      %2046 = vmatpush1.msra.mxu0 0.0
      %2047 = vmatprep.subr.mxu0 0.0
      %2048 = vmatpush1.msra.mxu0 0.0
      %2049 = vmatprep.subr.mxu0 0.0
      %2050 = vmatpush1.msra.mxu0 0.0
      %2051 = vmatprep.mubr.f32.mxu0 %v1985
      %2052 = vmatmul.mubr.f32.gmra.mrb[0].mxu0 %v1978
      %v2053 = vpop.f32.mrb[0].mxu0
      %v2054 = vadd.f32 %v1983, %v2053
      %v2055 = vpop.f32.mrb[0].mxu0
      %2056 = vdwg.mxu0
      %v2057 = vmax.f32 %v2054, 0.0
      %v2059 = vcombine.high %v2057, %v2057
      %vm2061 = vcmask 519168
      %v2062 = vsel %vm2061, %v2057, -inf
      %v2063 = vrot.slane %v2062, 4
      %v2064 = vmax.f32 %v2062, %v2063
      %v2065 = vrot.slane %v2064, 2
      %v2066 = vmax.f32 %v2064, %v2065
      %v2067 = vrot.slane %v2066, 1
      %v2068 = vmax.f32 %v2066, %v2067
      %v2069 = vsel %vm2061, %v2059, -inf
      %v2070 = vrot.slane %v2069, 4
      %v2071 = vmax.f32 %v2069, %v2070
      %v2072 = vrot.slane %v2071, 2
      %v2073 = vmax.f32 %v2071, %v2072
      %v2074 = vrot.slane %v2073, 1
      %v2075 = vmax.f32 %v2073, %v2074
      %v2076 = vld [vmem:[%s1 + $0x218] sm:$0xff]
      %v2077 = vld [vmem:[%s1 + $0x220] sm:$0xff]
      %v2078 = vld [vmem:[%s1 + $0x228] sm:$0xff]
      %v2079 = vld [vmem:[%s1 + $0x230] sm:$0xff]
      %v2080 = vld [vmem:[%s1 + $0x238] sm:$0xff]
      %v2081 = vld [vmem:[%s1 + $0x240] sm:$0xff]
      %v2082 = vld [vmem:[%s1 + $0x248] sm:$0xff]
      %v2083 = vld [vmem:[%s1 + $0x250] sm:$0xff]
      %v2084 = vld [vmem:[%s1 + $0x258] sm:$0xff]
      %v2085 = vld [vmem:[%s1 + $0x260] sm:$0xff]
      %v2086 = vld [vmem:[%s1 + $0x268] sm:$0xff]
      %v2087 = vld [vmem:[%s1 + $0x270] sm:$0xff]
      %v2088 = vld [vmem:[%s1 + $0x278] sm:$0xff]
      %v2089 = vld [vmem:[%s1 + $0x280] sm:$0xff]
      %v2090 = vld [vmem:[%s1 + $0x288] sm:$0xff]
      %v2091 = vld [vmem:[%s1 + $0x290] sm:$0xff]
      %v2092 = vld [vmem:[%s1 + $0x298] sm:$0xff]
      %v2093 = vld [vmem:[%s1 + $0x2a0] sm:$0xff]
      %v2094 = vld [vmem:[%s1 + $0x2a8] sm:$0xff]
      %v2095 = vld [vmem:[%s1 + $0x2b0] sm:$0xff]
      %v2096 = vld [vmem:[%s1 + $0x2b8] sm:$0xff]
      %v2097 = vld [vmem:[%s1 + $0x2c0] sm:$0xff]
      %v2098 = vld [vmem:[%s1 + $0x2c8] sm:$0xff]
      %v2099 = vld [vmem:[%s1 + $0x2d0] sm:$0xff]
      %v2100 = vsel %vm180, 0.0, %v2068
      %v2101 = vsel %vm180, %v2075, 0.0
      %v2104 = vsel %vm1342, %v2075, %v2068
      %2105 = vrot.lane.b32.xlu0 %v2104, 64
      %v2106 = vpop.permute.xlu0 %2105
      %v2108 = vsel %vm1632, %v2100, %v2106
      %v2109 = vld [vmem:[%s1 + $0x2d8] sm:$0x1]
      %v2110 = vlaneseq
      %v2111 = vshrl.u32 %v2110, 7
      %v2112 = vsub.s32 0, %v2111
      %v2113 = vrot.slane %v2109, %v2112
      %v2115 = vsel %vm1632, %v2101, 0
      %2117 = vmatprep.subr.mxu0 0.0
      %2118 = vmatpush1.msra.mxu0 %v2076
      %2119 = vmatprep.subr.mxu0 0.0
      %2120 = vmatpush1.msra.mxu0 %v2077
      %2121 = vmatprep.subr.mxu0 0.0
      %2122 = vmatpush1.msra.mxu0 %v2078
      %2123 = vmatprep.subr.mxu0 0.0
      %2124 = vmatpush1.msra.mxu0 %v2079
      %2125 = vmatprep.subr.mxu0 0.0
      %2126 = vmatpush1.msra.mxu0 %v2080
      %2127 = vmatprep.subr.mxu0 0.0
      %2128 = vmatpush1.msra.mxu0 %v2081
      %2129 = vmatprep.subr.mxu0 0.0
      %2130 = vmatpush1.msra.mxu0 %v2082
      %2131 = vmatprep.subr.mxu0 0.0
      %2132 = vmatpush1.msra.mxu0 %v2083
      %2133 = vmatprep.subr.mxu0 0.0
      %2134 = vmatpush1.msra.mxu0 %v2084
      %2135 = vmatprep.subr.mxu0 0.0
      %2136 = vmatpush1.msra.mxu0 %v2085
      %2137 = vmatprep.subr.mxu0 0.0
      %2138 = vmatpush1.msra.mxu0 %v2086
      %2139 = vmatprep.subr.mxu0 0.0
      %2140 = vmatpush1.msra.mxu0 %v2087
      %2141 = vmatprep.subr.mxu0 0.0
      %2142 = vmatpush1.msra.mxu0 %v2088
      %2143 = vmatprep.subr.mxu0 0.0
      %2144 = vmatpush1.msra.mxu0 %v2089
      %2145 = vmatprep.subr.mxu0 0.0
      %2146 = vmatpush1.msra.mxu0 %v2090
      %2147 = vmatprep.subr.mxu0 0.0
      %2148 = vmatpush1.msra.mxu0 %v2091
      %2149 = vmatprep.subr.mxu0 0.0
      %2150 = vmatpush1.msra.mxu0 %v2092
      %2151 = vmatprep.subr.mxu0 0.0
      %2152 = vmatpush1.msra.mxu0 %v2093
      %2153 = vmatprep.subr.mxu0 0.0
      %2154 = vmatpush1.msra.mxu0 %v2094
      %2155 = vmatprep.subr.mxu0 0.0
      %2156 = vmatpush1.msra.mxu0 %v2095
      %2157 = vmatprep.subr.mxu0 0.0
      %2158 = vmatpush1.msra.mxu0 %v2096
      %2159 = vmatprep.subr.mxu0 0.0
      %2160 = vmatpush1.msra.mxu0 %v2097
      %2161 = vmatprep.subr.mxu0 0.0
      %2162 = vmatpush1.msra.mxu0 %v2098
      %2163 = vmatprep.subr.mxu0 0.0
      %2164 = vmatpush1.msra.mxu0 %v2099
      %2165 = vmatprep.subr.mxu0 0.0
      %2166 = vmatpush1.msra.mxu0 0.0
      %2167 = vmatprep.subr.mxu0 0.0
      %2168 = vmatpush1.msra.mxu0 0.0
      %2169 = vmatprep.subr.mxu0 0.0
      %2170 = vmatpush1.msra.mxu0 0.0
      %2171 = vmatprep.subr.mxu0 0.0
      %2172 = vmatpush1.msra.mxu0 0.0
      %2173 = vmatprep.subr.mxu0 0.0
      %2174 = vmatpush1.msra.mxu0 0.0
      %2175 = vmatprep.subr.mxu0 0.0
      %2176 = vmatpush1.msra.mxu0 0.0
      %2177 = vmatprep.subr.mxu0 0.0
      %2178 = vmatpush1.msra.mxu0 0.0
      %2179 = vmatprep.subr.mxu0 0.0
      %2180 = vmatpush1.msra.mxu0 0.0
      %2181 = vmatprep.mubr.f32.mxu0 %v2115
      %2182 = vmatmul.mubr.f32.gmra.mrb[0].mxu0 %v2108
      %v2183 = vpop.f32.mrb[0].mxu0
      %v2184 = vadd.f32 %v2113, %v2183
      %v2185 = vpop.f32.mrb[0].mxu0
      %2186 = vdwg.mxu0
      %v2187 = vmax.f32 %v2184, 0.0
      %v2188 = vld [vmem:[%s1 + $0x2e0] sm:$0xff]
      %v2189 = vld [vmem:[%s1 + $0x2e8] sm:$0xff]
      %v2190 = vld [vmem:[%s1 + $0x2f0] sm:$0xff]
      %v2191 = vld [vmem:[%s1 + $0x2f8] sm:$0xff]
      %v2192 = vld [vmem:[%s1 + $0x300] sm:$0xff]
      %v2193 = vld [vmem:[%s1 + $0x308] sm:$0xff]
      %v2194 = vld [vmem:[%s1 + $0x310] sm:$0xff]
      %v2195 = vld [vmem:[%s1 + $0x318] sm:$0xff]
      %v2196 = vld [vmem:[%s1 + $0x320] sm:$0xff]
      %v2197 = vld [vmem:[%s1 + $0x328] sm:$0xff]
      %v2198 = vld [vmem:[%s1 + $0x330] sm:$0xff]
      %v2199 = vld [vmem:[%s1 + $0x338] sm:$0xff]
      %v2200 = vld [vmem:[%s1 + $0x340] sm:$0xff]
      %v2201 = vld [vmem:[%s1 + $0x348] sm:$0xff]
      %v2202 = vld [vmem:[%s1 + $0x350] sm:$0xff]
      %v2203 = vld [vmem:[%s1 + $0x358] sm:$0xff]
      %v2204 = vld [vmem:[%s1 + $0x360] sm:$0xff]
      %v2205 = vld [vmem:[%s1 + $0x368] sm:$0xff]
      %v2206 = vld [vmem:[%s1 + $0x370] sm:$0xff]
      %v2207 = vld [vmem:[%s1 + $0x378] sm:$0xff]
      %v2208 = vld [vmem:[%s1 + $0x380] sm:$0xff]
      %v2209 = vld [vmem:[%s1 + $0x388] sm:$0xff]
      %v2210 = vld [vmem:[%s1 + $0x390] sm:$0xff]
      %v2211 = vld [vmem:[%s1 + $0x398] sm:$0xff]
      %v2212 = vld [vmem:[%s1 + $0x3a0] sm:$0xff]
      %v2213 = vld [vmem:[%s1 + $0x3a8] sm:$0xff]
      %v2214 = vld [vmem:[%s1 + $0x3b0] sm:$0xff]
      %v2215 = vld [vmem:[%s1 + $0x3b8] sm:$0xff]
      %v2216 = vld [vmem:[%s1 + $0x3c0] sm:$0xff]
      %v2217 = vld [vmem:[%s1 + $0x3c8] sm:$0xff]
      %v2218 = vld [vmem:[%s1 + $0x3d0] sm:$0xff]
      %v2219 = vld [vmem:[%s1 + $0x3d8] sm:$0xff]
      %v2220 = vld [vmem:[%s1 + $0x3e0] sm:$0xff]
      %v2221 = vld [vmem:[%s1 + $0x3e8] sm:$0xff]
      %v2222 = vld [vmem:[%s1 + $0x3f0] sm:$0xff]
      %v2223 = vld [vmem:[%s1 + $0x3f8] sm:$0xff]
      %v2224 = vld [vmem:[%s1 + $0x400] sm:$0xff]
      %v2225 = vld [vmem:[%s1 + $0x408] sm:$0xff]
      %v2226 = vld [vmem:[%s1 + $0x410] sm:$0xff]
      %v2227 = vld [vmem:[%s1 + $0x418] sm:$0xff]
      %v2228 = vld [vmem:[%s1 + $0x420] sm:$0xff]
      %v2229 = vld [vmem:[%s1 + $0x428] sm:$0xff]
      %v2230 = vld [vmem:[%s1 + $0x430] sm:$0xff]
      %v2231 = vld [vmem:[%s1 + $0x438] sm:$0xff]
      %v2232 = vld [vmem:[%s1 + $0x440] sm:$0xff]
      %v2233 = vld [vmem:[%s1 + $0x448] sm:$0xff]
      %v2234 = vld [vmem:[%s1 + $0x450] sm:$0xff]
      %v2235 = vld [vmem:[%s1 + $0x458] sm:$0xff]
      %v2237 = vrot.slane %v2187, 7
      %v2239 = vsel %vm180, 0.0, %v2237
      %v2240 = vrot.slane %v2187, 1
      %v2242 = vsel %vm180, %v2240, 0.0
      %v2243 = vld [vmem:[%s1 + $0x460] sm:$0x1]
      %v2244 = vlaneseq
      %v2245 = vshrl.u32 %v2244, 7
      %v2246 = vsub.s32 0, %v2245
      %v2247 = vrot.slane %v2243, %v2246
      %2248 = vmatprep.subr.mxu0 0.0
      %2249 = vmatpush1.msra.mxu0 %v2188
      %2250 = vmatprep.subr.mxu0 0.0
      %2251 = vmatpush1.msra.mxu0 %v2189
      %2252 = vmatprep.subr.mxu0 0.0
      %2253 = vmatpush1.msra.mxu0 %v2190
      %2254 = vmatprep.subr.mxu0 0.0
      %2255 = vmatpush1.msra.mxu0 %v2191
      %2256 = vmatprep.subr.mxu0 0.0
      %2257 = vmatpush1.msra.mxu0 %v2192
      %2258 = vmatprep.subr.mxu0 0.0
      %2259 = vmatpush1.msra.mxu0 %v2193
      %2260 = vmatprep.subr.mxu0 0.0
      %2261 = vmatpush1.msra.mxu0 %v2194
      %2262 = vmatprep.subr.mxu0 0.0
      %2263 = vmatpush1.msra.mxu0 %v2195
      %2264 = vmatprep.subr.mxu0 0.0
      %2265 = vmatpush1.msra.mxu0 %v2196
      %2266 = vmatprep.subr.mxu0 0.0
      %2267 = vmatpush1.msra.mxu0 %v2197
      %2268 = vmatprep.subr.mxu0 0.0
      %2269 = vmatpush1.msra.mxu0 %v2198
      %2270 = vmatprep.subr.mxu0 0.0
      %2271 = vmatpush1.msra.mxu0 %v2199
      %2272 = vmatprep.subr.mxu0 0.0
      %2273 = vmatpush1.msra.mxu0 %v2200
      %2274 = vmatprep.subr.mxu0 0.0
      %2275 = vmatpush1.msra.mxu0 %v2201
      %2276 = vmatprep.subr.mxu0 0.0
      %2277 = vmatpush1.msra.mxu0 %v2202
      %2278 = vmatprep.subr.mxu0 0.0
      %2279 = vmatpush1.msra.mxu0 %v2203
      %2280 = vmatprep.subr.mxu0 0.0
      %2281 = vmatpush1.msra.mxu0 %v2204
      %2282 = vmatprep.subr.mxu0 0.0
      %2283 = vmatpush1.msra.mxu0 %v2205
      %2284 = vmatprep.subr.mxu0 0.0
      %2285 = vmatpush1.msra.mxu0 %v2206
      %2286 = vmatprep.subr.mxu0 0.0
      %2287 = vmatpush1.msra.mxu0 %v2207
      %2288 = vmatprep.subr.mxu0 0.0
      %2289 = vmatpush1.msra.mxu0 %v2208
      %2290 = vmatprep.subr.mxu0 0.0
      %2291 = vmatpush1.msra.mxu0 %v2209
      %2292 = vmatprep.subr.mxu0 0.0
      %2293 = vmatpush1.msra.mxu0 %v2210
      %2294 = vmatprep.subr.mxu0 0.0
      %2295 = vmatpush1.msra.mxu0 %v2211
      %2296 = vmatprep.subr.mxu0 0.0
      %2297 = vmatpush1.msra.mxu0 %v2212
      %2298 = vmatprep.subr.mxu0 0.0
      %2299 = vmatpush1.msra.mxu0 %v2213
      %2300 = vmatprep.subr.mxu0 0.0
      %2301 = vmatpush1.msra.mxu0 %v2214
      %2302 = vmatprep.subr.mxu0 0.0
      %2303 = vmatpush1.msra.mxu0 %v2215
      %2304 = vmatprep.subr.mxu0 0.0
      %2305 = vmatpush1.msra.mxu0 %v2216
      %2306 = vmatprep.subr.mxu0 0.0
      %2307 = vmatpush1.msra.mxu0 %v2217
      %2308 = vmatprep.subr.mxu0 0.0
      %2309 = vmatpush1.msra.mxu0 %v2218
      %2310 = vmatprep.subr.mxu0 0.0
      %2311 = vmatpush1.msra.mxu0 %v2219
      %2312 = vmatprep.mubr.f32.mxu0 %v2187
      %2313 = vmatmul.mubr.f32.gmra.mrb[0].mxu0 %v2239
      %v2314 = vpop.f32.mrb[0].mxu0
      %v2315 = vadd.f32 %v2247, %v2314
      %v2316 = vpop.f32.mrb[0].mxu0
      %2317 = vdwg.mxu0
      %2318 = vmatprep.subr.mxu0 0.0
      %2319 = vmatpush1.msra.mxu0 %v2220
      %2320 = vmatprep.subr.mxu0 0.0
      %2321 = vmatpush1.msra.mxu0 %v2221
      %2322 = vmatprep.subr.mxu0 0.0
      %2323 = vmatpush1.msra.mxu0 %v2222
      %2324 = vmatprep.subr.mxu0 0.0
      %2325 = vmatpush1.msra.mxu0 %v2223
      %2326 = vmatprep.subr.mxu0 0.0
      %2327 = vmatpush1.msra.mxu0 %v2224
      %2328 = vmatprep.subr.mxu0 0.0
      %2329 = vmatpush1.msra.mxu0 %v2225
      %2330 = vmatprep.subr.mxu0 0.0
      %2331 = vmatpush1.msra.mxu0 %v2226
      %2332 = vmatprep.subr.mxu0 0.0
      %2333 = vmatpush1.msra.mxu0 %v2227
      %2334 = vmatprep.subr.mxu0 0.0
      %2335 = vmatpush1.msra.mxu0 %v2228
      %2336 = vmatprep.subr.mxu0 0.0
      %2337 = vmatpush1.msra.mxu0 %v2229
      %2338 = vmatprep.subr.mxu0 0.0
      %2339 = vmatpush1.msra.mxu0 %v2230
      %2340 = vmatprep.subr.mxu0 0.0
      %2341 = vmatpush1.msra.mxu0 %v2231
      %2342 = vmatprep.subr.mxu0 0.0
      %2343 = vmatpush1.msra.mxu0 %v2232
      %2344 = vmatprep.subr.mxu0 0.0
      %2345 = vmatpush1.msra.mxu0 %v2233
      %2346 = vmatprep.subr.mxu0 0.0
      %2347 = vmatpush1.msra.mxu0 %v2234
      %2348 = vmatprep.subr.mxu0 0.0
      %2349 = vmatpush1.msra.mxu0 %v2235
      %2350 = vmatprep.subr.mxu0 0.0
      %2351 = vmatpush1.msra.mxu0 0.0
      %2352 = vmatprep.subr.mxu0 0.0
      %2353 = vmatpush1.msra.mxu0 0.0
      %2354 = vmatprep.subr.mxu0 0.0
      %2355 = vmatpush1.msra.mxu0 0.0
      %2356 = vmatprep.subr.mxu0 0.0
      %2357 = vmatpush1.msra.mxu0 0.0
      %2358 = vmatprep.subr.mxu0 0.0
      %2359 = vmatpush1.msra.mxu0 0.0
      %2360 = vmatprep.subr.mxu0 0.0
      %2361 = vmatpush1.msra.mxu0 0.0
      %2362 = vmatprep.subr.mxu0 0.0
      %2363 = vmatpush1.msra.mxu0 0.0
      %2364 = vmatprep.subr.mxu0 0.0
      %2365 = vmatpush1.msra.mxu0 0.0
      %2366 = vmatprep.subr.mxu0 0.0
      %2367 = vmatpush1.msra.mxu0 0.0
      %2368 = vmatprep.subr.mxu0 0.0
      %2369 = vmatpush1.msra.mxu0 0.0
      %2370 = vmatprep.subr.mxu0 0.0
      %2371 = vmatpush1.msra.mxu0 0.0
      %2372 = vmatprep.subr.mxu0 0.0
      %2373 = vmatpush1.msra.mxu0 0.0
      %2374 = vmatprep.subr.mxu0 0.0
      %2375 = vmatpush1.msra.mxu0 0.0
      %2376 = vmatprep.subr.mxu0 0.0
      %2377 = vmatpush1.msra.mxu0 0.0
      %2378 = vmatprep.subr.mxu0 0.0
      %2379 = vmatpush1.msra.mxu0 0.0
      %2380 = vmatprep.subr.mxu0 0.0
      %2381 = vmatpush1.msra.mxu0 0.0
      %2382 = vmatprep.mubr.f32.mxu0 0.0
      %2383 = vmatmul.mubr.f32.gmra.mrb[0].mxu0 %v2242
      %v2384 = vpop.f32.mrb[0].mxu0
      %v2385 = vadd.f32 %v2315, %v2384
      %v2386 = vpop.f32.mrb[0].mxu0
      %2387 = vdwg.mxu0
      %v2388 = vmax.f32 %v2385, 0.0
      %v2391 = vunpack.c.l.s4 1966171168
      %v2392 = vunpack.c.0.s8 %v2391
      %v2393 = vlaneseq
      %v2394 = vshrl.u32 %v2393, 7
      %v2395 = vsub.s32 %v2392, %v2394
      %v2396 = vrot.slane %v2388, %v2395
      %v2397 = vcombine.high %v2396, %v2396
      %v2399 = vunpack.c.l.s4 1966171168
      %v2400 = vunpack.c.0.s8 %v2399
      %v2401 = vlaneseq
      %v2402 = vshrl.u32 %v2401, 7
      %v2403 = vsub.s32 %v2400, %v2402
      %v2404 = vrot.slane %v2396, %v2403
      %v2406 = vunpack.c.l.s4 1966171168
      %v2407 = vunpack.c.0.s8 %v2406
      %v2408 = vlaneseq
      %v2409 = vshrl.u32 %v2408, 7
      %v2410 = vsub.s32 %v2407, %v2409
      %v2411 = vrot.slane %v2397, %v2410
      %v2412 = vlaneseq
      %v2413 = vshrl.u32 %v2412, 7
      %v2414 = vsub.s32 0, %v2413
      %v2415 = vrot.slane %v2404, %v2414
      %v2416 = vlaneseq
      %v2417 = vshrl.u32 %v2416, 7
      %v2418 = vsub.s32 0, %v2417
      %v2419 = vrot.slane %v2411, %v2418
      %v2420 = vld [vmem:[%s1 + $0x468] sm:$0xff]
      %v2421 = vld [vmem:[%s1 + $0x470] sm:$0xff]
      %v2422 = vld [vmem:[%s1 + $0x478] sm:$0xff]
      %v2423 = vld [vmem:[%s1 + $0x480] sm:$0xff]
      %v2424 = vld [vmem:[%s1 + $0x488] sm:$0xff]
      %v2425 = vld [vmem:[%s1 + $0x490] sm:$0xff]
      %v2426 = vld [vmem:[%s1 + $0x498] sm:$0xff]
      %v2427 = vld [vmem:[%s1 + $0x4a0] sm:$0xff]
      %v2428 = vld [vmem:[%s1 + $0x4a8] sm:$0xff]
      %v2429 = vld [vmem:[%s1 + $0x4b0] sm:$0xff]
      %v2430 = vld [vmem:[%s1 + $0x4b8] sm:$0xff]
      %v2431 = vld [vmem:[%s1 + $0x4c0] sm:$0xff]
      %v2432 = vld [vmem:[%s1 + $0x4c8] sm:$0xff]
      %v2433 = vld [vmem:[%s1 + $0x4d0] sm:$0xff]
      %v2434 = vld [vmem:[%s1 + $0x4d8] sm:$0xff]
      %v2435 = vld [vmem:[%s1 + $0x4e0] sm:$0xff]
      %v2436 = vld [vmem:[%s1 + $0x4e8] sm:$0xff]
      %v2437 = vld [vmem:[%s1 + $0x4f0] sm:$0xff]
      %v2438 = vld [vmem:[%s1 + $0x4f8] sm:$0xff]
      %v2439 = vld [vmem:[%s1 + $0x500] sm:$0xff]
      %v2440 = vld [vmem:[%s1 + $0x508] sm:$0xff]
      %v2441 = vld [vmem:[%s1 + $0x510] sm:$0xff]
      %v2442 = vld [vmem:[%s1 + $0x518] sm:$0xff]
      %v2443 = vld [vmem:[%s1 + $0x520] sm:$0xff]
      %v2444 = vld [vmem:[%s1 + $0x528] sm:$0xff]
      %v2445 = vld [vmem:[%s1 + $0x530] sm:$0xff]
      %v2446 = vld [vmem:[%s1 + $0x538] sm:$0xff]
      %v2447 = vld [vmem:[%s1 + $0x540] sm:$0xff]
      %v2448 = vld [vmem:[%s1 + $0x548] sm:$0xff]
      %v2449 = vld [vmem:[%s1 + $0x550] sm:$0xff]
      %v2450 = vld [vmem:[%s1 + $0x558] sm:$0xff]
      %v2451 = vld [vmem:[%s1 + $0x560] sm:$0xff]
      %v2452 = vld [vmem:[%s1 + $0x568] sm:$0xff]
      %v2453 = vld [vmem:[%s1 + $0x570] sm:$0xff]
      %v2454 = vld [vmem:[%s1 + $0x578] sm:$0xff]
      %v2455 = vld [vmem:[%s1 + $0x580] sm:$0xff]
      %v2456 = vld [vmem:[%s1 + $0x588] sm:$0xff]
      %v2457 = vld [vmem:[%s1 + $0x590] sm:$0xff]
      %v2458 = vld [vmem:[%s1 + $0x598] sm:$0xff]
      %v2459 = vld [vmem:[%s1 + $0x5a0] sm:$0xff]
      %v2460 = vld [vmem:[%s1 + $0x5a8] sm:$0xff]
      %v2461 = vld [vmem:[%s1 + $0x5b0] sm:$0xff]
      %v2462 = vld [vmem:[%s1 + $0x5b8] sm:$0xff]
      %v2463 = vld [vmem:[%s1 + $0x5c0] sm:$0xff]
      %v2464 = vld [vmem:[%s1 + $0x5c8] sm:$0xff]
      %v2465 = vld [vmem:[%s1 + $0x5d0] sm:$0xff]
      %v2466 = vld [vmem:[%s1 + $0x5d8] sm:$0xff]
      %v2467 = vld [vmem:[%s1 + $0x5e0] sm:$0xff]
      %v2468 = vcombine.low %v2415, %v2419
      %v2469 = vrot.slane %v2468, 7
      %v2471 = vsel %vm180, 0.0, %v2469
      %v2472 = vrot.slane %v2468, 1
      %v2474 = vsel %vm399, %v2472, 0.0
      %v2476 = vld [vmem:[%s1 + $0x5e8] sm:$0x1]
      %v2477 = vlaneseq
      %v2478 = vshrl.u32 %v2477, 7
      %v2479 = vsub.s32 0, %v2478
      %v2480 = vrot.slane %v2476, %v2479
      %2481 = vmatprep.subr.mxu0 0.0
      %2482 = vmatpush1.msra.mxu0 %v2420
      %2483 = vmatprep.subr.mxu0 0.0
      %2484 = vmatpush1.msra.mxu0 %v2421
      %2485 = vmatprep.subr.mxu0 0.0
      %2486 = vmatpush1.msra.mxu0 %v2422
      %2487 = vmatprep.subr.mxu0 0.0
      %2488 = vmatpush1.msra.mxu0 %v2423
      %2489 = vmatprep.subr.mxu0 0.0
      %2490 = vmatpush1.msra.mxu0 %v2424
      %2491 = vmatprep.subr.mxu0 0.0
      %2492 = vmatpush1.msra.mxu0 %v2425
      %2493 = vmatprep.subr.mxu0 0.0
      %2494 = vmatpush1.msra.mxu0 %v2426
      %2495 = vmatprep.subr.mxu0 0.0
      %2496 = vmatpush1.msra.mxu0 %v2427
      %2497 = vmatprep.subr.mxu0 0.0
      %2498 = vmatpush1.msra.mxu0 %v2428
      %2499 = vmatprep.subr.mxu0 0.0
      %2500 = vmatpush1.msra.mxu0 %v2429
      %2501 = vmatprep.subr.mxu0 0.0
      %2502 = vmatpush1.msra.mxu0 %v2430
      %2503 = vmatprep.subr.mxu0 0.0
      %2504 = vmatpush1.msra.mxu0 %v2431
      %2505 = vmatprep.subr.mxu0 0.0
      %2506 = vmatpush1.msra.mxu0 %v2432
      %2507 = vmatprep.subr.mxu0 0.0
      %2508 = vmatpush1.msra.mxu0 %v2433
      %2509 = vmatprep.subr.mxu0 0.0
      %2510 = vmatpush1.msra.mxu0 %v2434
      %2511 = vmatprep.subr.mxu0 0.0
      %2512 = vmatpush1.msra.mxu0 %v2435
      %2513 = vmatprep.subr.mxu0 0.0
      %2514 = vmatpush1.msra.mxu0 %v2436
      %2515 = vmatprep.subr.mxu0 0.0
      %2516 = vmatpush1.msra.mxu0 %v2437
      %2517 = vmatprep.subr.mxu0 0.0
      %2518 = vmatpush1.msra.mxu0 %v2438
      %2519 = vmatprep.subr.mxu0 0.0
      %2520 = vmatpush1.msra.mxu0 %v2439
      %2521 = vmatprep.subr.mxu0 0.0
      %2522 = vmatpush1.msra.mxu0 %v2440
      %2523 = vmatprep.subr.mxu0 0.0
      %2524 = vmatpush1.msra.mxu0 %v2441
      %2525 = vmatprep.subr.mxu0 0.0
      %2526 = vmatpush1.msra.mxu0 %v2442
      %2527 = vmatprep.subr.mxu0 0.0
      %2528 = vmatpush1.msra.mxu0 %v2443
      %2529 = vmatprep.subr.mxu0 0.0
      %2530 = vmatpush1.msra.mxu0 %v2444
      %2531 = vmatprep.subr.mxu0 0.0
      %2532 = vmatpush1.msra.mxu0 %v2445
      %2533 = vmatprep.subr.mxu0 0.0
      %2534 = vmatpush1.msra.mxu0 %v2446
      %2535 = vmatprep.subr.mxu0 0.0
      %2536 = vmatpush1.msra.mxu0 %v2447
      %2537 = vmatprep.subr.mxu0 0.0
      %2538 = vmatpush1.msra.mxu0 %v2448
      %2539 = vmatprep.subr.mxu0 0.0
      %2540 = vmatpush1.msra.mxu0 %v2449
      %2541 = vmatprep.subr.mxu0 0.0
      %2542 = vmatpush1.msra.mxu0 %v2450
      %2543 = vmatprep.subr.mxu0 0.0
      %2544 = vmatpush1.msra.mxu0 %v2451
      %2545 = vmatprep.mubr.f32.mxu0 %v2468
      %2546 = vmatmul.mubr.f32.gmra.mrb[0].mxu0 %v2471
      %v2547 = vpop.f32.mrb[0].mxu0
      %v2548 = vadd.f32 %v2480, %v2547
      %v2549 = vpop.f32.mrb[0].mxu0
      %2550 = vdwg.mxu0
      %2551 = vmatprep.subr.mxu0 0.0
      %2552 = vmatpush1.msra.mxu0 %v2452
      %2553 = vmatprep.subr.mxu0 0.0
      %2554 = vmatpush1.msra.mxu0 %v2453
      %2555 = vmatprep.subr.mxu0 0.0
      %2556 = vmatpush1.msra.mxu0 %v2454
      %2557 = vmatprep.subr.mxu0 0.0
      %2558 = vmatpush1.msra.mxu0 %v2455
      %2559 = vmatprep.subr.mxu0 0.0
      %2560 = vmatpush1.msra.mxu0 %v2456
      %2561 = vmatprep.subr.mxu0 0.0
      %2562 = vmatpush1.msra.mxu0 %v2457
      %2563 = vmatprep.subr.mxu0 0.0
      %2564 = vmatpush1.msra.mxu0 %v2458
      %2565 = vmatprep.subr.mxu0 0.0
      %2566 = vmatpush1.msra.mxu0 %v2459
      %2567 = vmatprep.subr.mxu0 0.0
      %2568 = vmatpush1.msra.mxu0 %v2460
      %2569 = vmatprep.subr.mxu0 0.0
      %2570 = vmatpush1.msra.mxu0 %v2461
      %2571 = vmatprep.subr.mxu0 0.0
      %2572 = vmatpush1.msra.mxu0 %v2462
      %2573 = vmatprep.subr.mxu0 0.0
      %2574 = vmatpush1.msra.mxu0 %v2463
      %2575 = vmatprep.subr.mxu0 0.0
      %2576 = vmatpush1.msra.mxu0 %v2464
      %2577 = vmatprep.subr.mxu0 0.0
      %2578 = vmatpush1.msra.mxu0 %v2465
      %2579 = vmatprep.subr.mxu0 0.0
      %2580 = vmatpush1.msra.mxu0 %v2466
      %2581 = vmatprep.subr.mxu0 0.0
      %2582 = vmatpush1.msra.mxu0 %v2467
      %2583 = vmatprep.subr.mxu0 0.0
      %2584 = vmatpush1.msra.mxu0 0.0
      %2585 = vmatprep.subr.mxu0 0.0
      %2586 = vmatpush1.msra.mxu0 0.0
      %2587 = vmatprep.subr.mxu0 0.0
      %2588 = vmatpush1.msra.mxu0 0.0
      %2589 = vmatprep.subr.mxu0 0.0
      %2590 = vmatpush1.msra.mxu0 0.0
      %2591 = vmatprep.subr.mxu0 0.0
      %2592 = vmatpush1.msra.mxu0 0.0
      %2593 = vmatprep.subr.mxu0 0.0
      %2594 = vmatpush1.msra.mxu0 0.0
      %2595 = vmatprep.subr.mxu0 0.0
      %2596 = vmatpush1.msra.mxu0 0.0
      %2597 = vmatprep.subr.mxu0 0.0
      %2598 = vmatpush1.msra.mxu0 0.0
      %2599 = vmatprep.subr.mxu0 0.0
      %2600 = vmatpush1.msra.mxu0 0.0
      %2601 = vmatprep.subr.mxu0 0.0
      %2602 = vmatpush1.msra.mxu0 0.0
      %2603 = vmatprep.subr.mxu0 0.0
      %2604 = vmatpush1.msra.mxu0 0.0
      %2605 = vmatprep.subr.mxu0 0.0
      %2606 = vmatpush1.msra.mxu0 0.0
      %2607 = vmatprep.subr.mxu0 0.0
      %2608 = vmatpush1.msra.mxu0 0.0
      %2609 = vmatprep.subr.mxu0 0.0
      %2610 = vmatpush1.msra.mxu0 0.0
      %2611 = vmatprep.subr.mxu0 0.0
      %2612 = vmatpush1.msra.mxu0 0.0
      %2613 = vmatprep.subr.mxu0 0.0
      %2614 = vmatpush1.msra.mxu0 0.0
      %2615 = vmatprep.mubr.f32.mxu0 0.0
      %2616 = vmatmul.mubr.f32.gmra.mrb[0].mxu0 %v2474
      %v2617 = vpop.f32.mrb[0].mxu0
      %v2618 = vadd.f32 %v2548, %v2617
      %v2619 = vpop.f32.mrb[0].mxu0
      %2620 = vdwg.mxu0
      %v2621 = vld [vmem:[%s1 + $0x5f0] sm:$0xff]
      %v2622 = vld [vmem:[%s1 + $0x5f8] sm:$0xff]
      %v2623 = vld [vmem:[%s1 + $0x600] sm:$0xff]
      %v2624 = vld [vmem:[%s1 + $0x608] sm:$0xff]
      %v2625 = vld [vmem:[%s1 + $0x610] sm:$0xff]
      %v2626 = vld [vmem:[%s1 + $0x618] sm:$0xff]
      %v2627 = vld [vmem:[%s1 + $0x620] sm:$0xff]
      %v2628 = vld [vmem:[%s1 + $0x628] sm:$0xff]
      %v2629 = vld [vmem:[%s1 + $0x630] sm:$0xff]
      %v2630 = vld [vmem:[%s1 + $0x638] sm:$0xff]
      %v2631 = vld [vmem:[%s1 + $0x640] sm:$0xff]
      %v2632 = vld [vmem:[%s1 + $0x648] sm:$0xff]
      %v2633 = vld [vmem:[%s1 + $0x650] sm:$0xff]
      %v2634 = vld [vmem:[%s1 + $0x658] sm:$0xff]
      %v2635 = vld [vmem:[%s1 + $0x660] sm:$0xff]
      %v2636 = vld [vmem:[%s1 + $0x668] sm:$0xff]
      %v2637 = vld [vmem:[%s1 + $0x670] sm:$0xff]
      %v2638 = vld [vmem:[%s1 + $0x678] sm:$0xff]
      %v2639 = vld [vmem:[%s1 + $0x680] sm:$0xff]
      %v2640 = vld [vmem:[%s1 + $0x688] sm:$0xff]
      %v2641 = vld [vmem:[%s1 + $0x690] sm:$0xff]
      %v2642 = vld [vmem:[%s1 + $0x698] sm:$0xff]
      %v2643 = vld [vmem:[%s1 + $0x6a0] sm:$0xff]
      %v2644 = vld [vmem:[%s1 + $0x6a8] sm:$0xff]
      %v2646 = vrot.slane %v2618, 7
      %v2648 = vsel %vm180, 0.0, %v2646
      %v2649 = vrot.slane %v2618, 1
      %v2651 = vsel %vm399, %v2649, 0.0
      %2652 = vrot.lane.b32.xlu0 %v2618, 64
      %v2653 = vpop.permute.xlu0 %2652
      %v2655 = vsel %vm1632, %v2648, %v2653
      %v2656 = vld [vmem:[%s1 + $0x6b0] sm:$0xff]
      %v2657 = vld [vmem:[%s1 + $0x6b8] sm:$0xff]
      %v2658 = vld [vmem:[%s1 + $0x6c0] sm:$0xff]
      %v2659 = vld [vmem:[%s1 + $0x6c8] sm:$0xff]
      %v2660 = vld [vmem:[%s1 + $0x6d0] sm:$0xff]
      %v2661 = vld [vmem:[%s1 + $0x6d8] sm:$0xff]
      %v2662 = vld [vmem:[%s1 + $0x6e0] sm:$0xff]
      %v2663 = vld [vmem:[%s1 + $0x6e8] sm:$0xff]
      %v2664 = vld [vmem:[%s1 + $0x6f0] sm:$0xff]
      %v2665 = vld [vmem:[%s1 + $0x6f8] sm:$0xff]
      %v2666 = vld [vmem:[%s1 + $0x700] sm:$0xff]
      %v2667 = vld [vmem:[%s1 + $0x708] sm:$0xff]
      %v2668 = vld [vmem:[%s1 + $0x710] sm:$0xff]
      %v2669 = vld [vmem:[%s1 + $0x718] sm:$0xff]
      %v2670 = vld [vmem:[%s1 + $0x720] sm:$0xff]
      %v2671 = vld [vmem:[%s1 + $0x728] sm:$0xff]
      %v2672 = vld [vmem:[%s1 + $0x730] sm:$0xff]
      %v2673 = vld [vmem:[%s1 + $0x738] sm:$0xff]
      %v2674 = vld [vmem:[%s1 + $0x740] sm:$0xff]
      %v2675 = vld [vmem:[%s1 + $0x748] sm:$0xff]
      %v2676 = vld [vmem:[%s1 + $0x750] sm:$0xff]
      %v2677 = vld [vmem:[%s1 + $0x758] sm:$0xff]
      %v2678 = vld [vmem:[%s1 + $0x760] sm:$0xff]
      %v2679 = vld [vmem:[%s1 + $0x768] sm:$0xff]
      %v2680 = vrot.slane %v2057, 7
      %v2682 = vsel %vm180, 0.0, %v2680
      %v2683 = vrot.slane %v2057, 1
      %v2685 = vsel %vm399, %v2683, 0.0
      %2686 = vrot.lane.b32.xlu0 %v2057, 64
      %v2687 = vpop.permute.xlu0 %2686
      %v2689 = vsel %vm1632, %v2682, %v2687
      %v2691 = vsel %vm1632, %v2685, 0
      %2693 = vmatprep.subr.mxu0 0.0
      %2694 = vmatpush1.msra.mxu0 %v2656
      %2695 = vmatprep.subr.mxu0 0.0
      %2696 = vmatpush1.msra.mxu0 %v2657
      %2697 = vmatprep.subr.mxu0 0.0
      %2698 = vmatpush1.msra.mxu0 %v2658
      %2699 = vmatprep.subr.mxu0 0.0
      %2700 = vmatpush1.msra.mxu0 %v2659
      %2701 = vmatprep.subr.mxu0 0.0
      %2702 = vmatpush1.msra.mxu0 %v2660
      %2703 = vmatprep.subr.mxu0 0.0
      %2704 = vmatpush1.msra.mxu0 %v2661
      %2705 = vmatprep.subr.mxu0 0.0
      %2706 = vmatpush1.msra.mxu0 %v2662
      %2707 = vmatprep.subr.mxu0 0.0
      %2708 = vmatpush1.msra.mxu0 %v2663
      %2709 = vmatprep.subr.mxu0 0.0
      %2710 = vmatpush1.msra.mxu0 %v2664
      %2711 = vmatprep.subr.mxu0 0.0
      %2712 = vmatpush1.msra.mxu0 %v2665
      %2713 = vmatprep.subr.mxu0 0.0
      %2714 = vmatpush1.msra.mxu0 %v2666
      %2715 = vmatprep.subr.mxu0 0.0
      %2716 = vmatpush1.msra.mxu0 %v2667
      %2717 = vmatprep.subr.mxu0 0.0
      %2718 = vmatpush1.msra.mxu0 %v2668
      %2719 = vmatprep.subr.mxu0 0.0
      %2720 = vmatpush1.msra.mxu0 %v2669
      %2721 = vmatprep.subr.mxu0 0.0
      %2722 = vmatpush1.msra.mxu0 %v2670
      %2723 = vmatprep.subr.mxu0 0.0
      %2724 = vmatpush1.msra.mxu0 %v2671
      %2725 = vmatprep.subr.mxu0 0.0
      %2726 = vmatpush1.msra.mxu0 %v2672
      %2727 = vmatprep.subr.mxu0 0.0
      %2728 = vmatpush1.msra.mxu0 %v2673
      %2729 = vmatprep.subr.mxu0 0.0
      %2730 = vmatpush1.msra.mxu0 %v2674
      %2731 = vmatprep.subr.mxu0 0.0
      %2732 = vmatpush1.msra.mxu0 %v2675
      %2733 = vmatprep.subr.mxu0 0.0
      %2734 = vmatpush1.msra.mxu0 %v2676
      %2735 = vmatprep.subr.mxu0 0.0
      %2736 = vmatpush1.msra.mxu0 %v2677
      %2737 = vmatprep.subr.mxu0 0.0
      %2738 = vmatpush1.msra.mxu0 %v2678
      %2739 = vmatprep.subr.mxu0 0.0
      %2740 = vmatpush1.msra.mxu0 %v2679
      %2741 = vmatprep.subr.mxu0 0.0
      %2742 = vmatpush1.msra.mxu0 0.0
      %2743 = vmatprep.subr.mxu0 0.0
      %2744 = vmatpush1.msra.mxu0 0.0
      %2745 = vmatprep.subr.mxu0 0.0
      %2746 = vmatpush1.msra.mxu0 0.0
      %2747 = vmatprep.subr.mxu0 0.0
      %2748 = vmatpush1.msra.mxu0 0.0
      %2749 = vmatprep.subr.mxu0 0.0
      %2750 = vmatpush1.msra.mxu0 0.0
      %2751 = vmatprep.subr.mxu0 0.0
      %2752 = vmatpush1.msra.mxu0 0.0
      %2753 = vmatprep.subr.mxu0 0.0
      %2754 = vmatpush1.msra.mxu0 0.0
      %2755 = vmatprep.subr.mxu0 0.0
      %2756 = vmatpush1.msra.mxu0 0.0
      %2757 = vmatprep.mubr.f32.mxu0 %v2691
      %2758 = vmatmul.mubr.f32.gmra.mrb[0].mxu0 %v2689
      %v2759 = vpop.f32.mrb[0].mxu0
      %v2760 = vadd.f32 0.0, %v2759
      %v2761 = vpop.f32.mrb[0].mxu0
      %2762 = vdwg.mxu0
      %v2764 = vsel %vm1632, %v2651, 0
      %2766 = vmatprep.subr.mxu0 0.0
      %2767 = vmatpush1.msra.mxu0 %v2621
      %2768 = vmatprep.subr.mxu0 0.0
      %2769 = vmatpush1.msra.mxu0 %v2622
      %2770 = vmatprep.subr.mxu0 0.0
      %2771 = vmatpush1.msra.mxu0 %v2623
      %2772 = vmatprep.subr.mxu0 0.0
      %2773 = vmatpush1.msra.mxu0 %v2624
      %2774 = vmatprep.subr.mxu0 0.0
      %2775 = vmatpush1.msra.mxu0 %v2625
      %2776 = vmatprep.subr.mxu0 0.0
      %2777 = vmatpush1.msra.mxu0 %v2626
      %2778 = vmatprep.subr.mxu0 0.0
      %2779 = vmatpush1.msra.mxu0 %v2627
      %2780 = vmatprep.subr.mxu0 0.0
      %2781 = vmatpush1.msra.mxu0 %v2628
      %2782 = vmatprep.subr.mxu0 0.0
      %2783 = vmatpush1.msra.mxu0 %v2629
      %2784 = vmatprep.subr.mxu0 0.0
      %2785 = vmatpush1.msra.mxu0 %v2630
      %2786 = vmatprep.subr.mxu0 0.0
      %2787 = vmatpush1.msra.mxu0 %v2631
      %2788 = vmatprep.subr.mxu0 0.0
      %2789 = vmatpush1.msra.mxu0 %v2632
      %2790 = vmatprep.subr.mxu0 0.0
      %2791 = vmatpush1.msra.mxu0 %v2633
      %2792 = vmatprep.subr.mxu0 0.0
      %2793 = vmatpush1.msra.mxu0 %v2634
      %2794 = vmatprep.subr.mxu0 0.0
      %2795 = vmatpush1.msra.mxu0 %v2635
      %2796 = vmatprep.subr.mxu0 0.0
      %2797 = vmatpush1.msra.mxu0 %v2636
      %2798 = vmatprep.subr.mxu0 0.0
      %2799 = vmatpush1.msra.mxu0 %v2637
      %2800 = vmatprep.subr.mxu0 0.0
      %2801 = vmatpush1.msra.mxu0 %v2638
      %2802 = vmatprep.subr.mxu0 0.0
      %2803 = vmatpush1.msra.mxu0 %v2639
      %2804 = vmatprep.subr.mxu0 0.0
      %2805 = vmatpush1.msra.mxu0 %v2640
      %2806 = vmatprep.subr.mxu0 0.0
      %2807 = vmatpush1.msra.mxu0 %v2641
      %2808 = vmatprep.subr.mxu0 0.0
      %2809 = vmatpush1.msra.mxu0 %v2642
      %2810 = vmatprep.subr.mxu0 0.0
      %2811 = vmatpush1.msra.mxu0 %v2643
      %2812 = vmatprep.subr.mxu0 0.0
      %2813 = vmatpush1.msra.mxu0 %v2644
      %2814 = vmatprep.subr.mxu0 0.0
      %2815 = vmatpush1.msra.mxu0 0.0
      %2816 = vmatprep.subr.mxu0 0.0
      %2817 = vmatpush1.msra.mxu0 0.0
      %2818 = vmatprep.subr.mxu0 0.0
      %2819 = vmatpush1.msra.mxu0 0.0
      %2820 = vmatprep.subr.mxu0 0.0
      %2821 = vmatpush1.msra.mxu0 0.0
      %2822 = vmatprep.subr.mxu0 0.0
      %2823 = vmatpush1.msra.mxu0 0.0
      %2824 = vmatprep.subr.mxu0 0.0
      %2825 = vmatpush1.msra.mxu0 0.0
      %2826 = vmatprep.subr.mxu0 0.0
      %2827 = vmatpush1.msra.mxu0 0.0
      %2828 = vmatprep.subr.mxu0 0.0
      %2829 = vmatpush1.msra.mxu0 0.0
      %2830 = vmatprep.mubr.f32.mxu0 %v2764
      %2831 = vmatmul.mubr.f32.gmra.mrb[0].mxu0 %v2655
      %v2832 = vpop.f32.mrb[0].mxu0
      %v2833 = vadd.f32 %v2760, %v2832
      %v2834 = vpop.f32.mrb[0].mxu0
      %2835 = vdwg.mxu0
      %v2836 = vld [vmem:[%s1 + $0x770] sm:$0x1]
      %v2837 = vlaneseq
      %v2838 = vshrl.u32 %v2837, 7
      %v2839 = vsub.s32 0, %v2838
      %v2840 = vrot.slane %v2836, %v2839
      %v2841 = vadd.f32 %v2833, %v2840
      %v2842 = vmax.f32 %v2841, 0.0
      %v2843 = vld [vmem:[%s1 + $0x778] sm:$0xff]
      %v2844 = vld [vmem:[%s1 + $0x780] sm:$0xff]
      %v2845 = vld [vmem:[%s1 + $0x788] sm:$0xff]
      %v2846 = vld [vmem:[%s1 + $0x790] sm:$0xff]
      %v2847 = vld [vmem:[%s1 + $0x798] sm:$0xff]
      %v2848 = vld [vmem:[%s1 + $0x7a0] sm:$0xff]
      %v2849 = vld [vmem:[%s1 + $0x7a8] sm:$0xff]
      %v2850 = vld [vmem:[%s1 + $0x7b0] sm:$0xff]
      %v2851 = vld [vmem:[%s1 + $0x7b8] sm:$0xff]
      %v2852 = vld [vmem:[%s1 + $0x7c0] sm:$0xff]
      %v2853 = vld [vmem:[%s1 + $0x7c8] sm:$0xff]
      %v2854 = vld [vmem:[%s1 + $0x7d0] sm:$0xff]
      %v2855 = vld [vmem:[%s1 + $0x7d8] sm:$0xff]
      %v2856 = vld [vmem:[%s1 + $0x7e0] sm:$0xff]
      %v2857 = vld [vmem:[%s1 + $0x7e8] sm:$0xff]
      %v2858 = vld [vmem:[%s1 + $0x7f0] sm:$0xff]
      %v2859 = vld [vmem:[%s1 + $0x7f8] sm:$0xff]
      %v2860 = vld [vmem:[%s1 + $0x800] sm:$0xff]
      %v2861 = vld [vmem:[%s1 + $0x808] sm:$0xff]
      %v2862 = vld [vmem:[%s1 + $0x810] sm:$0xff]
      %v2863 = vld [vmem:[%s1 + $0x818] sm:$0xff]
      %v2864 = vld [vmem:[%s1 + $0x820] sm:$0xff]
      %v2865 = vld [vmem:[%s1 + $0x828] sm:$0xff]
      %v2866 = vld [vmem:[%s1 + $0x830] sm:$0xff]
      %v2868 = vrot.slane %v2842, 7
      %v2870 = vsel %vm180, 0.0, %v2868
      %v2871 = vrot.slane %v2842, 1
      %v2873 = vsel %vm399, %v2871, 0.0
      %2874 = vrot.lane.b32.xlu0 %v2842, 64
      %v2875 = vpop.permute.xlu0 %2874
      %v2877 = vsel %vm1632, %v2870, %v2875
      %v2878 = vld [vmem:[%s1 + $0x838] sm:$0x1]
      %v2879 = vlaneseq
      %v2880 = vshrl.u32 %v2879, 7
      %v2881 = vsub.s32 0, %v2880
      %v2882 = vrot.slane %v2878, %v2881
      %v2884 = vsel %vm1632, %v2873, 0
      %2886 = vmatprep.subr.mxu0 0.0
      %2887 = vmatpush1.msra.mxu0 %v2843
      %2888 = vmatprep.subr.mxu0 0.0
      %2889 = vmatpush1.msra.mxu0 %v2844
      %2890 = vmatprep.subr.mxu0 0.0
      %2891 = vmatpush1.msra.mxu0 %v2845
      %2892 = vmatprep.subr.mxu0 0.0
      %2893 = vmatpush1.msra.mxu0 %v2846
      %2894 = vmatprep.subr.mxu0 0.0
      %2895 = vmatpush1.msra.mxu0 %v2847
      %2896 = vmatprep.subr.mxu0 0.0
      %2897 = vmatpush1.msra.mxu0 %v2848
      %2898 = vmatprep.subr.mxu0 0.0
      %2899 = vmatpush1.msra.mxu0 %v2849
      %2900 = vmatprep.subr.mxu0 0.0
      %2901 = vmatpush1.msra.mxu0 %v2850
      %2902 = vmatprep.subr.mxu0 0.0
      %2903 = vmatpush1.msra.mxu0 %v2851
      %2904 = vmatprep.subr.mxu0 0.0
      %2905 = vmatpush1.msra.mxu0 %v2852
      %2906 = vmatprep.subr.mxu0 0.0
      %2907 = vmatpush1.msra.mxu0 %v2853
      %2908 = vmatprep.subr.mxu0 0.0
      %2909 = vmatpush1.msra.mxu0 %v2854
      %2910 = vmatprep.subr.mxu0 0.0
      %2911 = vmatpush1.msra.mxu0 %v2855
      %2912 = vmatprep.subr.mxu0 0.0
      %2913 = vmatpush1.msra.mxu0 %v2856
      %2914 = vmatprep.subr.mxu0 0.0
      %2915 = vmatpush1.msra.mxu0 %v2857
      %2916 = vmatprep.subr.mxu0 0.0
      %2917 = vmatpush1.msra.mxu0 %v2858
      %2918 = vmatprep.subr.mxu0 0.0
      %2919 = vmatpush1.msra.mxu0 %v2859
      %2920 = vmatprep.subr.mxu0 0.0
      %2921 = vmatpush1.msra.mxu0 %v2860
      %2922 = vmatprep.subr.mxu0 0.0
      %2923 = vmatpush1.msra.mxu0 %v2861
      %2924 = vmatprep.subr.mxu0 0.0
      %2925 = vmatpush1.msra.mxu0 %v2862
      %2926 = vmatprep.subr.mxu0 0.0
      %2927 = vmatpush1.msra.mxu0 %v2863
      %2928 = vmatprep.subr.mxu0 0.0
      %2929 = vmatpush1.msra.mxu0 %v2864
      %2930 = vmatprep.subr.mxu0 0.0
      %2931 = vmatpush1.msra.mxu0 %v2865
      %2932 = vmatprep.subr.mxu0 0.0
      %2933 = vmatpush1.msra.mxu0 %v2866
      %2934 = vmatprep.subr.mxu0 0.0
      %2935 = vmatpush1.msra.mxu0 0.0
      %2936 = vmatprep.subr.mxu0 0.0
      %2937 = vmatpush1.msra.mxu0 0.0
      %2938 = vmatprep.subr.mxu0 0.0
      %2939 = vmatpush1.msra.mxu0 0.0
      %2940 = vmatprep.subr.mxu0 0.0
      %2941 = vmatpush1.msra.mxu0 0.0
      %2942 = vmatprep.subr.mxu0 0.0
      %2943 = vmatpush1.msra.mxu0 0.0
      %2944 = vmatprep.subr.mxu0 0.0
      %2945 = vmatpush1.msra.mxu0 0.0
      %2946 = vmatprep.subr.mxu0 0.0
      %2947 = vmatpush1.msra.mxu0 0.0
      %2948 = vmatprep.subr.mxu0 0.0
      %2949 = vmatpush1.msra.mxu0 0.0
      %2950 = vmatprep.mubr.f32.mxu0 %v2884
      %2951 = vmatmul.mubr.f32.gmra.mrb[0].mxu0 %v2877
      %v2952 = vpop.f32.mrb[0].mxu0
      %v2953 = vadd.f32 %v2882, %v2952
      %v2954 = vpop.f32.mrb[0].mxu0
      %2955 = vdwg.mxu0
      %v2956 = vmax.f32 %v2953, 0.0
      %v2958 = vcombine.high %v2956, %v2956
      %v2960 = vunpack.c.l.s4 1966171168
      %v2961 = vunpack.c.0.s8 %v2960
      %v2962 = vlaneseq
      %v2963 = vshrl.u32 %v2962, 7
      %v2964 = vsub.s32 %v2961, %v2963
      %v2965 = vrot.slane %v2956, %v2964
      %v2967 = vunpack.c.l.s4 1966171168
      %v2968 = vunpack.c.0.s8 %v2967
      %v2969 = vlaneseq
      %v2970 = vshrl.u32 %v2969, 7
      %v2971 = vsub.s32 %v2968, %v2970
      %v2972 = vrot.slane %v2958, %v2971
      %v2973 = vcombine.high %v2965, %v2965
      %v2974 = vcombine.high %v2972, %v2972
      %v2976 = vunpack.c.l.s4 1966171168
      %v2977 = vunpack.c.0.s8 %v2976
      %v2978 = vlaneseq
      %v2979 = vshrl.u32 %v2978, 7
      %v2980 = vsub.s32 %v2977, %v2979
      %v2981 = vrot.slane %v2965, %v2980
      %v2983 = vunpack.c.l.s4 1966171168
      %v2984 = vunpack.c.0.s8 %v2983
      %v2985 = vlaneseq
      %v2986 = vshrl.u32 %v2985, 7
      %v2987 = vsub.s32 %v2984, %v2986
      %v2988 = vrot.slane %v2972, %v2987
      %v2990 = vunpack.c.l.s4 1966171168
      %v2991 = vunpack.c.0.s8 %v2990
      %v2992 = vlaneseq
      %v2993 = vshrl.u32 %v2992, 7
      %v2994 = vsub.s32 %v2991, %v2993
      %v2995 = vrot.slane %v2973, %v2994
      %v2997 = vunpack.c.l.s4 1966171168
      %v2998 = vunpack.c.0.s8 %v2997
      %v2999 = vlaneseq
      %v3000 = vshrl.u32 %v2999, 7
      %v3001 = vsub.s32 %v2998, %v3000
      %v3002 = vrot.slane %v2974, %v3001
      %v3003 = vcombine.high %v2981, %v2981
      %v3004 = vcombine.high %v2988, %v2988
      %v3005 = vcombine.high %v2995, %v2995
      %v3006 = vcombine.high %v3002, %v3002
      %v3007 = vlaneseq
      %v3008 = vshrl.u32 %v3007, 7
      %v3009 = vsub.s32 0, %v3008
      %v3010 = vrot.slane %v2981, %v3009
      %v3011 = vlaneseq
      %v3012 = vshrl.u32 %v3011, 7
      %v3013 = vsub.s32 0, %v3012
      %v3014 = vrot.slane %v2995, %v3013
      %v3015 = vlaneseq
      %v3016 = vshrl.u32 %v3015, 7
      %v3017 = vsub.s32 0, %v3016
      %v3018 = vrot.slane %v3003, %v3017
      %v3019 = vlaneseq
      %v3020 = vshrl.u32 %v3019, 7
      %v3021 = vsub.s32 0, %v3020
      %v3022 = vrot.slane %v3005, %v3021
      %v3023 = vlaneseq
      %v3024 = vshrl.u32 %v3023, 7
      %v3025 = vsub.s32 0, %v3024
      %v3026 = vrot.slane %v2988, %v3025
      %v3027 = vlaneseq
      %v3028 = vshrl.u32 %v3027, 7
      %v3029 = vsub.s32 0, %v3028
      %v3030 = vrot.slane %v3002, %v3029
      %v3031 = vlaneseq
      %v3032 = vshrl.u32 %v3031, 7
      %v3033 = vsub.s32 0, %v3032
      %v3034 = vrot.slane %v3004, %v3033
      %v3035 = vlaneseq
      %v3036 = vshrl.u32 %v3035, 7
      %v3037 = vsub.s32 0, %v3036
      %v3038 = vrot.slane %v3006, %v3037
      %v3039 = vld [vmem:[%s1 + $0x840] sm:$0xff]
      %v3040 = vld [vmem:[%s1 + $0x848] sm:$0xff]
      %v3041 = vld [vmem:[%s1 + $0x850] sm:$0xff]
      %v3042 = vld [vmem:[%s1 + $0x858] sm:$0xff]
      %v3043 = vld [vmem:[%s1 + $0x860] sm:$0xff]
      %v3044 = vld [vmem:[%s1 + $0x868] sm:$0xff]
      %v3045 = vld [vmem:[%s1 + $0x870] sm:$0xff]
      %v3046 = vld [vmem:[%s1 + $0x878] sm:$0xff]
      %v3047 = vld [vmem:[%s1 + $0x880] sm:$0xff]
      %v3048 = vld [vmem:[%s1 + $0x888] sm:$0xff]
      %v3049 = vld [vmem:[%s1 + $0x890] sm:$0xff]
      %v3050 = vld [vmem:[%s1 + $0x898] sm:$0xff]
      %v3051 = vld [vmem:[%s1 + $0x8a0] sm:$0xff]
      %v3052 = vld [vmem:[%s1 + $0x8a8] sm:$0xff]
      %v3053 = vld [vmem:[%s1 + $0x8b0] sm:$0xff]
      %v3054 = vld [vmem:[%s1 + $0x8b8] sm:$0xff]
      %v3055 = vld [vmem:[%s1 + $0x8c0] sm:$0xff]
      %v3056 = vld [vmem:[%s1 + $0x8c8] sm:$0xff]
      %v3057 = vld [vmem:[%s1 + $0x8d0] sm:$0xff]
      %v3058 = vld [vmem:[%s1 + $0x8d8] sm:$0xff]
      %v3059 = vld [vmem:[%s1 + $0x8e0] sm:$0xff]
      %v3060 = vld [vmem:[%s1 + $0x8e8] sm:$0xff]
      %v3061 = vld [vmem:[%s1 + $0x8f0] sm:$0xff]
      %v3062 = vld [vmem:[%s1 + $0x8f8] sm:$0xff]
      %v3063 = vcombine.low %v3010, %v3014
      %v3064 = vcombine.low %v3018, %v3022
      %v3065 = vcombine.low %v3026, %v3030
      %v3066 = vcombine.low %v3034, %v3038
      %v3067 = vrot.slane %v3063, 7
      %v3068 = vrot.slane %v3064, 7
      %v3069 = vsel %vm180, %v3067, %v3068
      %v3070 = vrot.slane %v3065, 7
      %v3071 = vsel %vm180, %v3068, %v3070
      %v3072 = vrot.slane %v3066, 7
      %v3073 = vsel %vm180, %v3070, %v3072
      %v3078 = vsel %vm180, 0.0, %v3067
      %v3079 = vrot.slane %v3063, 1
      %v3080 = vrot.slane %v3064, 1
      %v3081 = vsel %vm399, %v3079, %v3080
      %v3082 = vrot.slane %v3065, 1
      %v3083 = vsel %vm399, %v3080, %v3082
      %v3084 = vrot.slane %v3066, 1
      %v3085 = vsel %vm399, %v3082, %v3084
      %v3087 = vsel %vm399, %v3084, 0.0
      %3088 = vrot.lane.b32.xlu0 %v3063, 64
      %v3089 = vpop.permute.xlu0 %3088
      %3090 = vrot.lane.b32.xlu0 %v3064, 64
      %v3091 = vpop.permute.xlu0 %3090
      %3092 = vrot.lane.b32.xlu0 %v3065, 64
      %v3093 = vpop.permute.xlu0 %3092
      %3094 = vrot.lane.b32.xlu0 %v3066, 64
      %v3095 = vpop.permute.xlu0 %3094
      %v3100 = vsel %vm1632, %v3078, %v3089
      %v3101 = vsel %vm1632, %v3069, %v3091
      %v3102 = vsel %vm1632, %v3071, %v3093
      %v3103 = vsel %vm1632, %v3073, %v3095
      %v3104 = vld [vmem:[%s1 + $0x900] sm:$0x1]
      %v3105 = vlaneseq
      %v3106 = vshrl.u32 %v3105, 7
      %v3107 = vsub.s32 0, %v3106
      %v3108 = vrot.slane %v3104, %v3107
      %v3109 = vsel %vm1632, %v3081, 0
      %v3111 = vsel %vm1632, %v3083, 0
      %v3113 = vsel %vm1632, %v3085, 0
      %v3116 = vsel %vm1632, %v3087, 0
      %3118 = vmatprep.subr.mxu0 0.0
      %3119 = vmatpush1.msra.mxu0 %v3039
      %3120 = vmatprep.subr.mxu0 0.0
      %3121 = vmatpush1.msra.mxu0 %v3040
      %3122 = vmatprep.subr.mxu0 0.0
      %3123 = vmatpush1.msra.mxu0 %v3041
      %3124 = vmatprep.subr.mxu0 0.0
      %3125 = vmatpush1.msra.mxu0 %v3042
      %3126 = vmatprep.subr.mxu0 0.0
      %3127 = vmatpush1.msra.mxu0 %v3043
      %3128 = vmatprep.subr.mxu0 0.0
      %3129 = vmatpush1.msra.mxu0 %v3044
      %3130 = vmatprep.subr.mxu0 0.0
      %3131 = vmatpush1.msra.mxu0 %v3045
      %3132 = vmatprep.subr.mxu0 0.0
      %3133 = vmatpush1.msra.mxu0 %v3046
      %3134 = vmatprep.subr.mxu0 0.0
      %3135 = vmatpush1.msra.mxu0 %v3047
      %3136 = vmatprep.subr.mxu0 0.0
      %3137 = vmatpush1.msra.mxu0 %v3048
      %3138 = vmatprep.subr.mxu0 0.0
      %3139 = vmatpush1.msra.mxu0 %v3049
      %3140 = vmatprep.subr.mxu0 0.0
      %3141 = vmatpush1.msra.mxu0 %v3050
      %3142 = vmatprep.subr.mxu0 0.0
      %3143 = vmatpush1.msra.mxu0 %v3051
      %3144 = vmatprep.subr.mxu0 0.0
      %3145 = vmatpush1.msra.mxu0 %v3052
      %3146 = vmatprep.subr.mxu0 0.0
      %3147 = vmatpush1.msra.mxu0 %v3053
      %3148 = vmatprep.subr.mxu0 0.0
      %3149 = vmatpush1.msra.mxu0 %v3054
      %3150 = vmatprep.subr.mxu0 0.0
      %3151 = vmatpush1.msra.mxu0 %v3055
      %3152 = vmatprep.subr.mxu0 0.0
      %3153 = vmatpush1.msra.mxu0 %v3056
      %3154 = vmatprep.subr.mxu0 0.0
      %3155 = vmatpush1.msra.mxu0 %v3057
      %3156 = vmatprep.subr.mxu0 0.0
      %3157 = vmatpush1.msra.mxu0 %v3058
      %3158 = vmatprep.subr.mxu0 0.0
      %3159 = vmatpush1.msra.mxu0 %v3059
      %3160 = vmatprep.subr.mxu0 0.0
      %3161 = vmatpush1.msra.mxu0 %v3060
      %3162 = vmatprep.subr.mxu0 0.0
      %3163 = vmatpush1.msra.mxu0 %v3061
      %3164 = vmatprep.subr.mxu0 0.0
      %3165 = vmatpush1.msra.mxu0 %v3062
      %3166 = vmatprep.subr.mxu0 0.0
      %3167 = vmatpush1.msra.mxu0 0.0
      %3168 = vmatprep.subr.mxu0 0.0
      %3169 = vmatpush1.msra.mxu0 0.0
      %3170 = vmatprep.subr.mxu0 0.0
      %3171 = vmatpush1.msra.mxu0 0.0
      %3172 = vmatprep.subr.mxu0 0.0
      %3173 = vmatpush1.msra.mxu0 0.0
      %3174 = vmatprep.subr.mxu0 0.0
      %3175 = vmatpush1.msra.mxu0 0.0
      %3176 = vmatprep.subr.mxu0 0.0
      %3177 = vmatpush1.msra.mxu0 0.0
      %3178 = vmatprep.subr.mxu0 0.0
      %3179 = vmatpush1.msra.mxu0 0.0
      %3180 = vmatprep.subr.mxu0 0.0
      %3181 = vmatpush1.msra.mxu0 0.0
      %3182 = vmatprep.mubr.f32.mxu0 %v3109
      %3183 = vmatmul.mubr.f32.gmra.mrb[0].mxu0 %v3100
      %v3184 = vpop.f32.mrb[0].mxu0
      %v3185 = vadd.f32 %v3108, %v3184
      %v3186 = vpop.f32.mrb[0].mxu0
      %3187 = vmatprep.mubr.f32.mxu0 %v3111
      %3188 = vmatmul.mubr.f32.gmra.mrb[0].mxu0 %v3101
      %v3189 = vpop.f32.mrb[0].mxu0
      %v3190 = vadd.f32 %v3108, %v3189
      %v3191 = vpop.f32.mrb[0].mxu0
      %3192 = vmatprep.mubr.f32.mxu0 %v3113
      %3193 = vmatmul.mubr.f32.gmra.mrb[0].mxu0 %v3102
      %v3194 = vpop.f32.mrb[0].mxu0
      %v3195 = vadd.f32 %v3108, %v3194
      %v3196 = vpop.f32.mrb[0].mxu0
      %3197 = vmatprep.mubr.f32.mxu0 %v3116
      %3198 = vmatmul.mubr.f32.gmra.mrb[0].mxu0 %v3103
      %v3199 = vpop.f32.mrb[0].mxu0
      %v3200 = vadd.f32 %v3108, %v3199
      %v3201 = vpop.f32.mrb[0].mxu0
      %3202 = vdwg.mxu0
      %v3203 = vld [vmem:[%s1 + $0x908] sm:$0xff]
      %v3204 = vld [vmem:[%s1 + $0x910] sm:$0xff]
      %v3205 = vld [vmem:[%s1 + $0x918] sm:$0xff]
      %v3206 = vld [vmem:[%s1 + $0x920] sm:$0xff]
      %v3207 = vld [vmem:[%s1 + $0x928] sm:$0xff]
      %v3208 = vld [vmem:[%s1 + $0x930] sm:$0xff]
      %v3209 = vld [vmem:[%s1 + $0x938] sm:$0xff]
      %v3210 = vld [vmem:[%s1 + $0x940] sm:$0xff]
      %v3211 = vld [vmem:[%s1 + $0x948] sm:$0xff]
      %v3212 = vld [vmem:[%s1 + $0x950] sm:$0xff]
      %v3213 = vld [vmem:[%s1 + $0x958] sm:$0xff]
      %v3214 = vld [vmem:[%s1 + $0x960] sm:$0xff]
      %v3219 = vrot.slane %v3185, 7
      %v3220 = vrot.slane %v3190, 7
      %v3221 = vsel %vm180, %v3219, %v3220
      %v3222 = vrot.slane %v3195, 7
      %v3223 = vsel %vm180, %v3220, %v3222
      %v3224 = vrot.slane %v3200, 7
      %v3225 = vsel %vm180, %v3222, %v3224
      %v3230 = vsel %vm180, 0.0, %v3219
      %v3231 = vrot.slane %v3185, 1
      %v3232 = vrot.slane %v3190, 1
      %v3233 = vsel %vm399, %v3231, %v3232
      %v3234 = vrot.slane %v3195, 1
      %v3235 = vsel %vm399, %v3232, %v3234
      %v3236 = vrot.slane %v3200, 1
      %v3237 = vsel %vm399, %v3234, %v3236
      %v3239 = vsel %vm399, %v3236, 0.0
      %3240 = vrot.lane.b32.xlu0 %v3185, 32
      %v3241 = vpop.permute.xlu0 %3240
      %3242 = vrot.lane.b32.xlu0 %v3190, 32
      %v3243 = vpop.permute.xlu0 %3242
      %3244 = vrot.lane.b32.xlu0 %v3195, 32
      %v3245 = vpop.permute.xlu0 %3244
      %3246 = vrot.lane.b32.xlu0 %v3200, 32
      %v3247 = vpop.permute.xlu0 %3246
      %3253 = vrot.lane.b32.xlu0 %v3233, 64
      %v3254 = vpop.permute.xlu0 %3253
      %3255 = vrot.lane.b32.xlu0 %v3235, 64
      %v3256 = vpop.permute.xlu0 %3255
      %3257 = vrot.lane.b32.xlu0 %v3237, 64
      %v3258 = vpop.permute.xlu0 %3257
      %3259 = vrot.lane.b32.xlu0 %v3239, 64
      %v3260 = vpop.permute.xlu0 %3259
      %v3265 = vsel %vm788, %v3230, %v3241
      %v3266 = vsel %vm788, %v3221, %v3243
      %v3267 = vsel %vm788, %v3223, %v3245
      %v3268 = vsel %vm788, %v3225, %v3247
      %v3269 = vsel %vm1632, %v3265, %v3254
      %v3270 = vsel %vm1632, %v3266, %v3256
      %v3271 = vsel %vm1632, %v3267, %v3258
      %v3272 = vsel %vm1632, %v3268, %v3260
      %v3273 = vld [vmem:[%s1 + $0x968] sm:$0xff]
      %v3274 = vld [vmem:[%s1 + $0x970] sm:$0xff]
      %v3275 = vld [vmem:[%s1 + $0x978] sm:$0xff]
      %v3276 = vld [vmem:[%s1 + $0x980] sm:$0xff]
      %v3277 = vld [vmem:[%s1 + $0x988] sm:$0xff]
      %v3278 = vld [vmem:[%s1 + $0x990] sm:$0xff]
      %v3279 = vld [vmem:[%s1 + $0x998] sm:$0xff]
      %v3280 = vld [vmem:[%s1 + $0x9a0] sm:$0xff]
      %v3281 = vld [vmem:[%s1 + $0x9a8] sm:$0xff]
      %v3282 = vld [vmem:[%s1 + $0x9b0] sm:$0xff]
      %v3283 = vld [vmem:[%s1 + $0x9b8] sm:$0xff]
      %v3284 = vld [vmem:[%s1 + $0x9c0] sm:$0xff]
      %v3285 = vrot.slane %v1740, 7
      %v3286 = vrot.slane %v1741, 7
      %v3287 = vsel %vm180, %v3285, %v3286
      %v3288 = vrot.slane %v1742, 7
      %v3289 = vsel %vm180, %v3286, %v3288
      %v3290 = vrot.slane %v1743, 7
      %v3291 = vsel %vm180, %v3288, %v3290
      %v3296 = vsel %vm180, 0.0, %v3285
      %v3297 = vrot.slane %v1740, 1
      %v3298 = vrot.slane %v1741, 1
      %v3299 = vsel %vm399, %v3297, %v3298
      %v3300 = vrot.slane %v1742, 1
      %v3301 = vsel %vm399, %v3298, %v3300
      %v3302 = vrot.slane %v1743, 1
      %v3303 = vsel %vm399, %v3300, %v3302
      %v3305 = vsel %vm399, %v3302, 0.0
      %3306 = vrot.lane.b32.xlu0 %v1740, 32
      %v3307 = vpop.permute.xlu0 %3306
      %3308 = vrot.lane.b32.xlu0 %v1741, 32
      %v3309 = vpop.permute.xlu0 %3308
      %3310 = vrot.lane.b32.xlu0 %v1742, 32
      %v3311 = vpop.permute.xlu0 %3310
      %3312 = vrot.lane.b32.xlu0 %v1743, 32
      %v3313 = vpop.permute.xlu0 %3312
      %3319 = vrot.lane.b32.xlu0 %v3299, 64
      %v3320 = vpop.permute.xlu0 %3319
      %3321 = vrot.lane.b32.xlu0 %v3301, 64
      %v3322 = vpop.permute.xlu0 %3321
      %3323 = vrot.lane.b32.xlu0 %v3303, 64
      %v3324 = vpop.permute.xlu0 %3323
      %3325 = vrot.lane.b32.xlu0 %v3305, 64
      %v3326 = vpop.permute.xlu0 %3325
      %v3331 = vsel %vm788, %v3296, %v3307
      %v3332 = vsel %vm788, %v3287, %v3309
      %v3333 = vsel %vm788, %v3289, %v3311
      %v3334 = vsel %vm788, %v3291, %v3313
      %v3335 = vsel %vm1632, %v3331, %v3320
      %v3336 = vsel %vm1632, %v3332, %v3322
      %v3337 = vsel %vm1632, %v3333, %v3324
      %v3338 = vsel %vm1632, %v3334, %v3326
      %v3340 = vsel %vm1642, %v3335, 0
      %v3343 = vsel %vm1642, %v3336, 0
      %v3346 = vsel %vm1642, %v3337, 0
      %v3349 = vsel %vm1642, %v3338, 0
      %3351 = vmatprep.subr.mxu0 0.0
      %3352 = vmatpush1.msra.mxu0 %v3273
      %3353 = vmatprep.subr.mxu0 0.0
      %3354 = vmatpush1.msra.mxu0 %v3274
      %3355 = vmatprep.subr.mxu0 0.0
      %3356 = vmatpush1.msra.mxu0 %v3275
      %3357 = vmatprep.subr.mxu0 0.0
      %3358 = vmatpush1.msra.mxu0 %v3276
      %3359 = vmatprep.subr.mxu0 0.0
      %3360 = vmatpush1.msra.mxu0 %v3277
      %3361 = vmatprep.subr.mxu0 0.0
      %3362 = vmatpush1.msra.mxu0 %v3278
      %3363 = vmatprep.subr.mxu0 0.0
      %3364 = vmatpush1.msra.mxu0 %v3279
      %3365 = vmatprep.subr.mxu0 0.0
      %3366 = vmatpush1.msra.mxu0 %v3280
      %3367 = vmatprep.subr.mxu0 0.0
      %3368 = vmatpush1.msra.mxu0 %v3281
      %3369 = vmatprep.subr.mxu0 0.0
      %3370 = vmatpush1.msra.mxu0 %v3282
      %3371 = vmatprep.subr.mxu0 0.0
      %3372 = vmatpush1.msra.mxu0 %v3283
      %3373 = vmatprep.subr.mxu0 0.0
      %3374 = vmatpush1.msra.mxu0 %v3284
      %3375 = vmatprep.subr.mxu0 0.0
      %3376 = vmatpush1.msra.mxu0 0.0
      %3377 = vmatprep.subr.mxu0 0.0
      %3378 = vmatpush1.msra.mxu0 0.0
      %3379 = vmatprep.subr.mxu0 0.0
      %3380 = vmatpush1.msra.mxu0 0.0
      %3381 = vmatprep.subr.mxu0 0.0
      %3382 = vmatpush1.msra.mxu0 0.0
      %3383 = vmatprep.subr.mxu0 0.0
      %3384 = vmatpush1.msra.mxu0 0.0
      %3385 = vmatprep.subr.mxu0 0.0
      %3386 = vmatpush1.msra.mxu0 0.0
      %3387 = vmatprep.subr.mxu0 0.0
      %3388 = vmatpush1.msra.mxu0 0.0
      %3389 = vmatprep.subr.mxu0 0.0
      %3390 = vmatpush1.msra.mxu0 0.0
      %3391 = vmatprep.subr.mxu0 0.0
      %3392 = vmatpush1.msra.mxu0 0.0
      %3393 = vmatprep.subr.mxu0 0.0
      %3394 = vmatpush1.msra.mxu0 0.0
      %3395 = vmatprep.subr.mxu0 0.0
      %3396 = vmatpush1.msra.mxu0 0.0
      %3397 = vmatprep.subr.mxu0 0.0
      %3398 = vmatpush1.msra.mxu0 0.0
      %3399 = vmatprep.subr.mxu0 0.0
      %3400 = vmatpush1.msra.mxu0 0.0
      %3401 = vmatprep.subr.mxu0 0.0
      %3402 = vmatpush1.msra.mxu0 0.0
      %3403 = vmatprep.subr.mxu0 0.0
      %3404 = vmatpush1.msra.mxu0 0.0
      %3405 = vmatprep.subr.mxu0 0.0
      %3406 = vmatpush1.msra.mxu0 0.0
      %3407 = vmatprep.subr.mxu0 0.0
      %3408 = vmatpush1.msra.mxu0 0.0
      %3409 = vmatprep.subr.mxu0 0.0
      %3410 = vmatpush1.msra.mxu0 0.0
      %3411 = vmatprep.subr.mxu0 0.0
      %3412 = vmatpush1.msra.mxu0 0.0
      %3413 = vmatprep.subr.mxu0 0.0
      %3414 = vmatpush1.msra.mxu0 0.0
      %3415 = vmatprep.mubr.f32.mxu0 0.0
      %3416 = vmatmul.mubr.f32.gmra.mrb[0].mxu0 %v3340
      %v3417 = vpop.f32.mrb[0].mxu0
      %v3418 = vadd.f32 0.0, %v3417
      %v3419 = vpop.f32.mrb[0].mxu0
      %3420 = vmatprep.mubr.f32.mxu0 0.0
      %3421 = vmatmul.mubr.f32.gmra.mrb[0].mxu0 %v3343
      %v3422 = vpop.f32.mrb[0].mxu0
      %v3423 = vadd.f32 0.0, %v3422
      %v3424 = vpop.f32.mrb[0].mxu0
      %3425 = vmatprep.mubr.f32.mxu0 0.0
      %3426 = vmatmul.mubr.f32.gmra.mrb[0].mxu0 %v3346
      %v3427 = vpop.f32.mrb[0].mxu0
      %v3428 = vadd.f32 0.0, %v3427
      %v3429 = vpop.f32.mrb[0].mxu0
      %3430 = vmatprep.mubr.f32.mxu0 0.0
      %3431 = vmatmul.mubr.f32.gmra.mrb[0].mxu0 %v3349
      %v3432 = vpop.f32.mrb[0].mxu0
      %v3433 = vadd.f32 0.0, %v3432
      %v3434 = vpop.f32.mrb[0].mxu0
      %3435 = vdwg.mxu0
      %v3437 = vsel %vm1642, %v3269, 0
      %v3440 = vsel %vm1642, %v3270, 0
      %v3443 = vsel %vm1642, %v3271, 0
      %v3446 = vsel %vm1642, %v3272, 0
      %3448 = vmatprep.subr.mxu0 0.0
      %3449 = vmatpush1.msra.mxu0 %v3203
      %3450 = vmatprep.subr.mxu0 0.0
      %3451 = vmatpush1.msra.mxu0 %v3204
      %3452 = vmatprep.subr.mxu0 0.0
      %3453 = vmatpush1.msra.mxu0 %v3205
      %3454 = vmatprep.subr.mxu0 0.0
      %3455 = vmatpush1.msra.mxu0 %v3206
      %3456 = vmatprep.subr.mxu0 0.0
      %3457 = vmatpush1.msra.mxu0 %v3207
      %3458 = vmatprep.subr.mxu0 0.0
      %3459 = vmatpush1.msra.mxu0 %v3208
      %3460 = vmatprep.subr.mxu0 0.0
      %3461 = vmatpush1.msra.mxu0 %v3209
      %3462 = vmatprep.subr.mxu0 0.0
      %3463 = vmatpush1.msra.mxu0 %v3210
      %3464 = vmatprep.subr.mxu0 0.0
      %3465 = vmatpush1.msra.mxu0 %v3211
      %3466 = vmatprep.subr.mxu0 0.0
      %3467 = vmatpush1.msra.mxu0 %v3212
      %3468 = vmatprep.subr.mxu0 0.0
      %3469 = vmatpush1.msra.mxu0 %v3213
      %3470 = vmatprep.subr.mxu0 0.0
      %3471 = vmatpush1.msra.mxu0 %v3214
      %3472 = vmatprep.subr.mxu0 0.0
      %3473 = vmatpush1.msra.mxu0 0.0
      %3474 = vmatprep.subr.mxu0 0.0
      %3475 = vmatpush1.msra.mxu0 0.0
      %3476 = vmatprep.subr.mxu0 0.0
      %3477 = vmatpush1.msra.mxu0 0.0
      %3478 = vmatprep.subr.mxu0 0.0
      %3479 = vmatpush1.msra.mxu0 0.0
      %3480 = vmatprep.subr.mxu0 0.0
      %3481 = vmatpush1.msra.mxu0 0.0
      %3482 = vmatprep.subr.mxu0 0.0
      %3483 = vmatpush1.msra.mxu0 0.0
      %3484 = vmatprep.subr.mxu0 0.0
      %3485 = vmatpush1.msra.mxu0 0.0
      %3486 = vmatprep.subr.mxu0 0.0
      %3487 = vmatpush1.msra.mxu0 0.0
      %3488 = vmatprep.subr.mxu0 0.0
      %3489 = vmatpush1.msra.mxu0 0.0
      %3490 = vmatprep.subr.mxu0 0.0
      %3491 = vmatpush1.msra.mxu0 0.0
      %3492 = vmatprep.subr.mxu0 0.0
      %3493 = vmatpush1.msra.mxu0 0.0
      %3494 = vmatprep.subr.mxu0 0.0
      %3495 = vmatpush1.msra.mxu0 0.0
      %3496 = vmatprep.subr.mxu0 0.0
      %3497 = vmatpush1.msra.mxu0 0.0
      %3498 = vmatprep.subr.mxu0 0.0
      %3499 = vmatpush1.msra.mxu0 0.0
      %3500 = vmatprep.subr.mxu0 0.0
      %3501 = vmatpush1.msra.mxu0 0.0
      %3502 = vmatprep.subr.mxu0 0.0
      %3503 = vmatpush1.msra.mxu0 0.0
      %3504 = vmatprep.subr.mxu0 0.0
      %3505 = vmatpush1.msra.mxu0 0.0
      %3506 = vmatprep.subr.mxu0 0.0
      %3507 = vmatpush1.msra.mxu0 0.0
      %3508 = vmatprep.subr.mxu0 0.0
      %3509 = vmatpush1.msra.mxu0 0.0
      %3510 = vmatprep.subr.mxu0 0.0
      %3511 = vmatpush1.msra.mxu0 0.0
      %3512 = vmatprep.mubr.f32.mxu0 0.0
      %3513 = vmatmul.mubr.f32.gmra.mrb[0].mxu0 %v3437
      %v3514 = vpop.f32.mrb[0].mxu0
      %v3515 = vadd.f32 %v3418, %v3514
      %v3516 = vpop.f32.mrb[0].mxu0
      %3517 = vmatprep.mubr.f32.mxu0 0.0
      %3518 = vmatmul.mubr.f32.gmra.mrb[0].mxu0 %v3440
      %v3519 = vpop.f32.mrb[0].mxu0
      %v3520 = vadd.f32 %v3423, %v3519
      %v3521 = vpop.f32.mrb[0].mxu0
      %3522 = vmatprep.mubr.f32.mxu0 0.0
      %3523 = vmatmul.mubr.f32.gmra.mrb[0].mxu0 %v3443
      %v3524 = vpop.f32.mrb[0].mxu0
      %v3525 = vadd.f32 %v3428, %v3524
      %v3526 = vpop.f32.mrb[0].mxu0
      %3527 = vmatprep.mubr.f32.mxu0 0.0
      %3528 = vmatmul.mubr.f32.gmra.mrb[0].mxu0 %v3446
      %v3529 = vpop.f32.mrb[0].mxu0
      %v3530 = vadd.f32 %v3433, %v3529
      %v3531 = vpop.f32.mrb[0].mxu0
      %3532 = vdwg.mxu0
      %v3533 = vld [vmem:[%s1 + $0x9c8] sm:$0x1]
      %v3534 = vlaneseq
      %v3535 = vshrl.u32 %v3534, 7
      %v3536 = vsub.s32 0, %v3535
      %v3537 = vrot.slane %v3533, %v3536
      %v3538 = vadd.f32 %v3515, %v3537
      %v3539 = vadd.f32 %v3520, %v3537
      %v3540 = vadd.f32 %v3525, %v3537
      %v3541 = vadd.f32 %v3530, %v3537
      %v3542 = vmax.f32 %v3538, 0.0
      %v3543 = vmax.f32 %v3539, 0.0
      %v3544 = vmax.f32 %v3540, 0.0
      %v3545 = vmax.f32 %v3541, 0.0
      %v3546 = vld [vmem:[%s1 + $0x9d0] sm:$0xff]
      %v3547 = vld [vmem:[%s1 + $0x9d8] sm:$0xff]
      %v3548 = vld [vmem:[%s1 + $0x9e0] sm:$0xff]
      %v3549 = vld [vmem:[%s1 + $0x9e8] sm:$0xff]
      %v3550 = vld [vmem:[%s1 + $0x9f0] sm:$0xff]
      %v3551 = vld [vmem:[%s1 + $0x9f8] sm:$0xff]
      %v3552 = vld [vmem:[%s1 + $0xa00] sm:$0xff]
      %v3553 = vld [vmem:[%s1 + $0xa08] sm:$0xff]
      %v3554 = vld [vmem:[%s1 + $0xa10] sm:$0xff]
      %v3555 = vld [vmem:[%s1 + $0xa18] sm:$0xff]
      %v3556 = vld [vmem:[%s1 + $0xa20] sm:$0xff]
      %v3557 = vld [vmem:[%s1 + $0xa28] sm:$0xff]
      %v3562 = vrot.slane %v3542, 7
      %v3563 = vrot.slane %v3543, 7
      %v3564 = vsel %vm180, %v3562, %v3563
      %v3565 = vrot.slane %v3544, 7
      %v3566 = vsel %vm180, %v3563, %v3565
      %v3567 = vrot.slane %v3545, 7
      %v3568 = vsel %vm180, %v3565, %v3567
      %v3573 = vsel %vm180, 0.0, %v3562
      %v3574 = vrot.slane %v3542, 1
      %v3575 = vrot.slane %v3543, 1
      %v3576 = vsel %vm399, %v3574, %v3575
      %v3577 = vrot.slane %v3544, 1
      %v3578 = vsel %vm399, %v3575, %v3577
      %v3579 = vrot.slane %v3545, 1
      %v3580 = vsel %vm399, %v3577, %v3579
      %v3582 = vsel %vm399, %v3579, 0.0
      %3583 = vrot.lane.b32.xlu0 %v3542, 32
      %v3584 = vpop.permute.xlu0 %3583
      %3585 = vrot.lane.b32.xlu0 %v3543, 32
      %v3586 = vpop.permute.xlu0 %3585
      %3587 = vrot.lane.b32.xlu0 %v3544, 32
      %v3588 = vpop.permute.xlu0 %3587
      %3589 = vrot.lane.b32.xlu0 %v3545, 32
      %v3590 = vpop.permute.xlu0 %3589
      %3596 = vrot.lane.b32.xlu0 %v3576, 64
      %v3597 = vpop.permute.xlu0 %3596
      %3598 = vrot.lane.b32.xlu0 %v3578, 64
      %v3599 = vpop.permute.xlu0 %3598
      %3600 = vrot.lane.b32.xlu0 %v3580, 64
      %v3601 = vpop.permute.xlu0 %3600
      %3602 = vrot.lane.b32.xlu0 %v3582, 64
      %v3603 = vpop.permute.xlu0 %3602
      %v3608 = vsel %vm788, %v3573, %v3584
      %v3609 = vsel %vm788, %v3564, %v3586
      %v3610 = vsel %vm788, %v3566, %v3588
      %v3611 = vsel %vm788, %v3568, %v3590
      %v3612 = vsel %vm1632, %v3608, %v3597
      %v3613 = vsel %vm1632, %v3609, %v3599
      %v3614 = vsel %vm1632, %v3610, %v3601
      %v3615 = vsel %vm1632, %v3611, %v3603
      %v3616 = vld [vmem:[%s1 + $0xa30] sm:$0x1]
      %v3617 = vlaneseq
      %v3618 = vshrl.u32 %v3617, 7
      %v3619 = vsub.s32 0, %v3618
      %v3620 = vrot.slane %v3616, %v3619
      %v3622 = vsel %vm1642, %v3612, 0
      %v3625 = vsel %vm1642, %v3613, 0
      %v3628 = vsel %vm1642, %v3614, 0
      %v3631 = vsel %vm1642, %v3615, 0
      %3633 = vmatprep.subr.mxu0 0.0
      %3634 = vmatpush1.msra.mxu0 %v3546
      %3635 = vmatprep.subr.mxu0 0.0
      %3636 = vmatpush1.msra.mxu0 %v3547
      %3637 = vmatprep.subr.mxu0 0.0
      %3638 = vmatpush1.msra.mxu0 %v3548
      %3639 = vmatprep.subr.mxu0 0.0
      %3640 = vmatpush1.msra.mxu0 %v3549
      %3641 = vmatprep.subr.mxu0 0.0
      %3642 = vmatpush1.msra.mxu0 %v3550
      %3643 = vmatprep.subr.mxu0 0.0
      %3644 = vmatpush1.msra.mxu0 %v3551
      %3645 = vmatprep.subr.mxu0 0.0
      %3646 = vmatpush1.msra.mxu0 %v3552
      %3647 = vmatprep.subr.mxu0 0.0
      %3648 = vmatpush1.msra.mxu0 %v3553
      %3649 = vmatprep.subr.mxu0 0.0
      %3650 = vmatpush1.msra.mxu0 %v3554
      %3651 = vmatprep.subr.mxu0 0.0
      %3652 = vmatpush1.msra.mxu0 %v3555
      %3653 = vmatprep.subr.mxu0 0.0
      %3654 = vmatpush1.msra.mxu0 %v3556
      %3655 = vmatprep.subr.mxu0 0.0
      %3656 = vmatpush1.msra.mxu0 %v3557
      %3657 = vmatprep.subr.mxu0 0.0
      %3658 = vmatpush1.msra.mxu0 0.0
      %3659 = vmatprep.subr.mxu0 0.0
      %3660 = vmatpush1.msra.mxu0 0.0
      %3661 = vmatprep.subr.mxu0 0.0
      %3662 = vmatpush1.msra.mxu0 0.0
      %3663 = vmatprep.subr.mxu0 0.0
      %3664 = vmatpush1.msra.mxu0 0.0
      %3665 = vmatprep.subr.mxu0 0.0
      %3666 = vmatpush1.msra.mxu0 0.0
      %3667 = vmatprep.subr.mxu0 0.0
      %3668 = vmatpush1.msra.mxu0 0.0
      %3669 = vmatprep.subr.mxu0 0.0
      %3670 = vmatpush1.msra.mxu0 0.0
      %3671 = vmatprep.subr.mxu0 0.0
      %3672 = vmatpush1.msra.mxu0 0.0
      %3673 = vmatprep.subr.mxu0 0.0
      %3674 = vmatpush1.msra.mxu0 0.0
      %3675 = vmatprep.subr.mxu0 0.0
      %3676 = vmatpush1.msra.mxu0 0.0
      %3677 = vmatprep.subr.mxu0 0.0
      %3678 = vmatpush1.msra.mxu0 0.0
      %3679 = vmatprep.subr.mxu0 0.0
      %3680 = vmatpush1.msra.mxu0 0.0
      %3681 = vmatprep.subr.mxu0 0.0
      %3682 = vmatpush1.msra.mxu0 0.0
      %3683 = vmatprep.subr.mxu0 0.0
      %3684 = vmatpush1.msra.mxu0 0.0
      %3685 = vmatprep.subr.mxu0 0.0
      %3686 = vmatpush1.msra.mxu0 0.0
      %3687 = vmatprep.subr.mxu0 0.0
      %3688 = vmatpush1.msra.mxu0 0.0
      %3689 = vmatprep.subr.mxu0 0.0
      %3690 = vmatpush1.msra.mxu0 0.0
      %3691 = vmatprep.subr.mxu0 0.0
      %3692 = vmatpush1.msra.mxu0 0.0
      %3693 = vmatprep.subr.mxu0 0.0
      %3694 = vmatpush1.msra.mxu0 0.0
      %3695 = vmatprep.subr.mxu0 0.0
      %3696 = vmatpush1.msra.mxu0 0.0
      %3697 = vmatprep.mubr.f32.mxu0 0.0
      %3698 = vmatmul.mubr.f32.gmra.mrb[0].mxu0 %v3622
      %v3699 = vpop.f32.mrb[0].mxu0
      %v3700 = vadd.f32 %v3620, %v3699
      %v3701 = vpop.f32.mrb[0].mxu0
      %3702 = vmatprep.mubr.f32.mxu0 0.0
      %3703 = vmatmul.mubr.f32.gmra.mrb[0].mxu0 %v3625
      %v3704 = vpop.f32.mrb[0].mxu0
      %v3705 = vadd.f32 %v3620, %v3704
      %v3706 = vpop.f32.mrb[0].mxu0
      %3707 = vmatprep.mubr.f32.mxu0 0.0
      %3708 = vmatmul.mubr.f32.gmra.mrb[0].mxu0 %v3628
      %v3709 = vpop.f32.mrb[0].mxu0
      %v3710 = vadd.f32 %v3620, %v3709
      %v3711 = vpop.f32.mrb[0].mxu0
      %3712 = vmatprep.mubr.f32.mxu0 0.0
      %3713 = vmatmul.mubr.f32.gmra.mrb[0].mxu0 %v3631
      %v3714 = vpop.f32.mrb[0].mxu0
      %v3715 = vadd.f32 %v3620, %v3714
      %v3716 = vpop.f32.mrb[0].mxu0
      %3717 = vdwg.mxu0
      %v3718 = vmax.f32 %v3700, 0.0
      %v3719 = vmax.f32 %v3705, 0.0
      %v3720 = vmax.f32 %v3710, 0.0
      %v3721 = vmax.f32 %v3715, 0.0
      %v3726 = vcombine.high %v3718, %v3718
      %v3728 = vunpack.c.l.s4 1966171168
      %v3729 = vunpack.c.0.s8 %v3728
      %v3730 = vlaneseq
      %v3731 = vshrl.u32 %v3730, 7
      %v3732 = vsub.s32 %v3729, %v3731
      %v3733 = vrot.slane %v3718, %v3732
      %v3735 = vunpack.c.l.s4 1966171168
      %v3736 = vunpack.c.0.s8 %v3735
      %v3737 = vlaneseq
      %v3738 = vshrl.u32 %v3737, 7
      %v3739 = vsub.s32 %v3736, %v3738
      %v3740 = vrot.slane %v3726, %v3739
      %v3741 = vcombine.high %v3733, %v3733
      %v3742 = vcombine.high %v3740, %v3740
      %v3744 = vunpack.c.l.s4 1966171168
      %v3745 = vunpack.c.0.s8 %v3744
      %v3746 = vlaneseq
      %v3747 = vshrl.u32 %v3746, 7
      %v3748 = vsub.s32 %v3745, %v3747
      %v3749 = vrot.slane %v3733, %v3748
      %v3751 = vunpack.c.l.s4 1966171168
      %v3752 = vunpack.c.0.s8 %v3751
      %v3753 = vlaneseq
      %v3754 = vshrl.u32 %v3753, 7
      %v3755 = vsub.s32 %v3752, %v3754
      %v3756 = vrot.slane %v3740, %v3755
      %v3758 = vunpack.c.l.s4 1966171168
      %v3759 = vunpack.c.0.s8 %v3758
      %v3760 = vlaneseq
      %v3761 = vshrl.u32 %v3760, 7
      %v3762 = vsub.s32 %v3759, %v3761
      %v3763 = vrot.slane %v3741, %v3762
      %v3765 = vunpack.c.l.s4 1966171168
      %v3766 = vunpack.c.0.s8 %v3765
      %v3767 = vlaneseq
      %v3768 = vshrl.u32 %v3767, 7
      %v3769 = vsub.s32 %v3766, %v3768
      %v3770 = vrot.slane %v3742, %v3769
      %v3771 = vcombine.high %v3749, %v3749
      %v3772 = vcombine.high %v3756, %v3756
      %v3773 = vcombine.high %v3763, %v3763
      %v3774 = vcombine.high %v3770, %v3770
      %v3775 = vcombine.high %v3719, %v3719
      %v3777 = vunpack.c.l.s4 1966171168
      %v3778 = vunpack.c.0.s8 %v3777
      %v3779 = vlaneseq
      %v3780 = vshrl.u32 %v3779, 7
      %v3781 = vsub.s32 %v3778, %v3780
      %v3782 = vrot.slane %v3719, %v3781
      %v3784 = vunpack.c.l.s4 1966171168
      %v3785 = vunpack.c.0.s8 %v3784
      %v3786 = vlaneseq
      %v3787 = vshrl.u32 %v3786, 7
      %v3788 = vsub.s32 %v3785, %v3787
      %v3789 = vrot.slane %v3775, %v3788
      %v3790 = vcombine.high %v3782, %v3782
      %v3791 = vcombine.high %v3789, %v3789
      %v3793 = vunpack.c.l.s4 1966171168
      %v3794 = vunpack.c.0.s8 %v3793
      %v3795 = vlaneseq
      %v3796 = vshrl.u32 %v3795, 7
      %v3797 = vsub.s32 %v3794, %v3796
      %v3798 = vrot.slane %v3782, %v3797
      %v3800 = vunpack.c.l.s4 1966171168
      %v3801 = vunpack.c.0.s8 %v3800
      %v3802 = vlaneseq
      %v3803 = vshrl.u32 %v3802, 7
      %v3804 = vsub.s32 %v3801, %v3803
      %v3805 = vrot.slane %v3789, %v3804
      %v3807 = vunpack.c.l.s4 1966171168
      %v3808 = vunpack.c.0.s8 %v3807
      %v3809 = vlaneseq
      %v3810 = vshrl.u32 %v3809, 7
      %v3811 = vsub.s32 %v3808, %v3810
      %v3812 = vrot.slane %v3790, %v3811
      %v3814 = vunpack.c.l.s4 1966171168
      %v3815 = vunpack.c.0.s8 %v3814
      %v3816 = vlaneseq
      %v3817 = vshrl.u32 %v3816, 7
      %v3818 = vsub.s32 %v3815, %v3817
      %v3819 = vrot.slane %v3791, %v3818
      %v3820 = vcombine.high %v3798, %v3798
      %v3821 = vcombine.high %v3805, %v3805
      %v3822 = vcombine.high %v3812, %v3812
      %v3823 = vcombine.high %v3819, %v3819
      %v3824 = vcombine.high %v3720, %v3720
      %v3826 = vunpack.c.l.s4 1966171168
      %v3827 = vunpack.c.0.s8 %v3826
      %v3828 = vlaneseq
      %v3829 = vshrl.u32 %v3828, 7
      %v3830 = vsub.s32 %v3827, %v3829
      %v3831 = vrot.slane %v3720, %v3830
      %v3833 = vunpack.c.l.s4 1966171168
      %v3834 = vunpack.c.0.s8 %v3833
      %v3835 = vlaneseq
      %v3836 = vshrl.u32 %v3835, 7
      %v3837 = vsub.s32 %v3834, %v3836
      %v3838 = vrot.slane %v3824, %v3837
      %v3839 = vcombine.high %v3831, %v3831
      %v3840 = vcombine.high %v3838, %v3838
      %v3842 = vunpack.c.l.s4 1966171168
      %v3843 = vunpack.c.0.s8 %v3842
      %v3844 = vlaneseq
      %v3845 = vshrl.u32 %v3844, 7
      %v3846 = vsub.s32 %v3843, %v3845
      %v3847 = vrot.slane %v3831, %v3846
      %v3849 = vunpack.c.l.s4 1966171168
      %v3850 = vunpack.c.0.s8 %v3849
      %v3851 = vlaneseq
      %v3852 = vshrl.u32 %v3851, 7
      %v3853 = vsub.s32 %v3850, %v3852
      %v3854 = vrot.slane %v3838, %v3853
      %v3856 = vunpack.c.l.s4 1966171168
      %v3857 = vunpack.c.0.s8 %v3856
      %v3858 = vlaneseq
      %v3859 = vshrl.u32 %v3858, 7
      %v3860 = vsub.s32 %v3857, %v3859
      %v3861 = vrot.slane %v3839, %v3860
      %v3863 = vunpack.c.l.s4 1966171168
      %v3864 = vunpack.c.0.s8 %v3863
      %v3865 = vlaneseq
      %v3866 = vshrl.u32 %v3865, 7
      %v3867 = vsub.s32 %v3864, %v3866
      %v3868 = vrot.slane %v3840, %v3867
      %v3869 = vcombine.high %v3847, %v3847
      %v3870 = vcombine.high %v3854, %v3854
      %v3871 = vcombine.high %v3861, %v3861
      %v3872 = vcombine.high %v3868, %v3868
      %v3873 = vcombine.high %v3721, %v3721
      %v3875 = vunpack.c.l.s4 1966171168
      %v3876 = vunpack.c.0.s8 %v3875
      %v3877 = vlaneseq
      %v3878 = vshrl.u32 %v3877, 7
      %v3879 = vsub.s32 %v3876, %v3878
      %v3880 = vrot.slane %v3721, %v3879
      %v3882 = vunpack.c.l.s4 1966171168
      %v3883 = vunpack.c.0.s8 %v3882
      %v3884 = vlaneseq
      %v3885 = vshrl.u32 %v3884, 7
      %v3886 = vsub.s32 %v3883, %v3885
      %v3887 = vrot.slane %v3873, %v3886
      %v3888 = vcombine.high %v3880, %v3880
      %v3889 = vcombine.high %v3887, %v3887
      %v3891 = vunpack.c.l.s4 1966171168
      %v3892 = vunpack.c.0.s8 %v3891
      %v3893 = vlaneseq
      %v3894 = vshrl.u32 %v3893, 7
      %v3895 = vsub.s32 %v3892, %v3894
      %v3896 = vrot.slane %v3880, %v3895
      %v3898 = vunpack.c.l.s4 1966171168
      %v3899 = vunpack.c.0.s8 %v3898
      %v3900 = vlaneseq
      %v3901 = vshrl.u32 %v3900, 7
      %v3902 = vsub.s32 %v3899, %v3901
      %v3903 = vrot.slane %v3887, %v3902
      %v3905 = vunpack.c.l.s4 1966171168
      %v3906 = vunpack.c.0.s8 %v3905
      %v3907 = vlaneseq
      %v3908 = vshrl.u32 %v3907, 7
      %v3909 = vsub.s32 %v3906, %v3908
      %v3910 = vrot.slane %v3888, %v3909
      %v3912 = vunpack.c.l.s4 1966171168
      %v3913 = vunpack.c.0.s8 %v3912
      %v3914 = vlaneseq
      %v3915 = vshrl.u32 %v3914, 7
      %v3916 = vsub.s32 %v3913, %v3915
      %v3917 = vrot.slane %v3889, %v3916
      %v3918 = vcombine.high %v3896, %v3896
      %v3919 = vcombine.high %v3903, %v3903
      %v3920 = vcombine.high %v3910, %v3910
      %v3921 = vcombine.high %v3917, %v3917
      %v3922 = vlaneseq
      %v3923 = vshrl.u32 %v3922, 7
      %v3924 = vsub.s32 0, %v3923
      %v3925 = vrot.slane %v3749, %v3924
      %v3926 = vlaneseq
      %v3927 = vshrl.u32 %v3926, 7
      %v3928 = vsub.s32 0, %v3927
      %v3929 = vrot.slane %v3763, %v3928
      %v3930 = vlaneseq
      %v3931 = vshrl.u32 %v3930, 7
      %v3932 = vsub.s32 0, %v3931
      %v3933 = vrot.slane %v3771, %v3932
      %v3934 = vlaneseq
      %v3935 = vshrl.u32 %v3934, 7
      %v3936 = vsub.s32 0, %v3935
      %v3937 = vrot.slane %v3773, %v3936
      %v3938 = vlaneseq
      %v3939 = vshrl.u32 %v3938, 7
      %v3940 = vsub.s32 0, %v3939
      %v3941 = vrot.slane %v3756, %v3940
      %v3942 = vlaneseq
      %v3943 = vshrl.u32 %v3942, 7
      %v3944 = vsub.s32 0, %v3943
      %v3945 = vrot.slane %v3770, %v3944
      %v3946 = vlaneseq
      %v3947 = vshrl.u32 %v3946, 7
      %v3948 = vsub.s32 0, %v3947
      %v3949 = vrot.slane %v3772, %v3948
      %v3950 = vlaneseq
      %v3951 = vshrl.u32 %v3950, 7
      %v3952 = vsub.s32 0, %v3951
      %v3953 = vrot.slane %v3774, %v3952
      %v3954 = vlaneseq
      %v3955 = vshrl.u32 %v3954, 7
      %v3956 = vsub.s32 0, %v3955
      %v3957 = vrot.slane %v3798, %v3956
      %v3958 = vlaneseq
      %v3959 = vshrl.u32 %v3958, 7
      %v3960 = vsub.s32 0, %v3959
      %v3961 = vrot.slane %v3812, %v3960
      %v3962 = vlaneseq
      %v3963 = vshrl.u32 %v3962, 7
      %v3964 = vsub.s32 0, %v3963
      %v3965 = vrot.slane %v3820, %v3964
      %v3966 = vlaneseq
      %v3967 = vshrl.u32 %v3966, 7
      %v3968 = vsub.s32 0, %v3967
      %v3969 = vrot.slane %v3822, %v3968
      %v3970 = vlaneseq
      %v3971 = vshrl.u32 %v3970, 7
      %v3972 = vsub.s32 0, %v3971
      %v3973 = vrot.slane %v3805, %v3972
      %v3974 = vlaneseq
      %v3975 = vshrl.u32 %v3974, 7
      %v3976 = vsub.s32 0, %v3975
      %v3977 = vrot.slane %v3819, %v3976
      %v3978 = vlaneseq
      %v3979 = vshrl.u32 %v3978, 7
      %v3980 = vsub.s32 0, %v3979
      %v3981 = vrot.slane %v3821, %v3980
      %v3982 = vlaneseq
      %v3983 = vshrl.u32 %v3982, 7
      %v3984 = vsub.s32 0, %v3983
      %v3985 = vrot.slane %v3823, %v3984
      %v3986 = vlaneseq
      %v3987 = vshrl.u32 %v3986, 7
      %v3988 = vsub.s32 0, %v3987
      %v3989 = vrot.slane %v3847, %v3988
      %v3990 = vlaneseq
      %v3991 = vshrl.u32 %v3990, 7
      %v3992 = vsub.s32 0, %v3991
      %v3993 = vrot.slane %v3861, %v3992
      %v3994 = vlaneseq
      %v3995 = vshrl.u32 %v3994, 7
      %v3996 = vsub.s32 0, %v3995
      %v3997 = vrot.slane %v3869, %v3996
      %v3998 = vlaneseq
      %v3999 = vshrl.u32 %v3998, 7
      %v4000 = vsub.s32 0, %v3999
      %v4001 = vrot.slane %v3871, %v4000
      %v4002 = vlaneseq
      %v4003 = vshrl.u32 %v4002, 7
      %v4004 = vsub.s32 0, %v4003
      %v4005 = vrot.slane %v3854, %v4004
      %v4006 = vlaneseq
      %v4007 = vshrl.u32 %v4006, 7
      %v4008 = vsub.s32 0, %v4007
      %v4009 = vrot.slane %v3868, %v4008
      %v4010 = vlaneseq
      %v4011 = vshrl.u32 %v4010, 7
      %v4012 = vsub.s32 0, %v4011
      %v4013 = vrot.slane %v3870, %v4012
      %v4014 = vlaneseq
      %v4015 = vshrl.u32 %v4014, 7
      %v4016 = vsub.s32 0, %v4015
      %v4017 = vrot.slane %v3872, %v4016
      %v4018 = vlaneseq
      %v4019 = vshrl.u32 %v4018, 7
      %v4020 = vsub.s32 0, %v4019
      %v4021 = vrot.slane %v3896, %v4020
      %v4022 = vlaneseq
      %v4023 = vshrl.u32 %v4022, 7
      %v4024 = vsub.s32 0, %v4023
      %v4025 = vrot.slane %v3910, %v4024
      %v4026 = vlaneseq
      %v4027 = vshrl.u32 %v4026, 7
      %v4028 = vsub.s32 0, %v4027
      %v4029 = vrot.slane %v3918, %v4028
      %v4030 = vlaneseq
      %v4031 = vshrl.u32 %v4030, 7
      %v4032 = vsub.s32 0, %v4031
      %v4033 = vrot.slane %v3920, %v4032
      %v4034 = vlaneseq
      %v4035 = vshrl.u32 %v4034, 7
      %v4036 = vsub.s32 0, %v4035
      %v4037 = vrot.slane %v3903, %v4036
      %v4038 = vlaneseq
      %v4039 = vshrl.u32 %v4038, 7
      %v4040 = vsub.s32 0, %v4039
      %v4041 = vrot.slane %v3917, %v4040
      %v4042 = vlaneseq
      %v4043 = vshrl.u32 %v4042, 7
      %v4044 = vsub.s32 0, %v4043
      %v4045 = vrot.slane %v3919, %v4044
      %v4046 = vlaneseq
      %v4047 = vshrl.u32 %v4046, 7
      %v4048 = vsub.s32 0, %v4047
      %v4049 = vrot.slane %v3921, %v4048
      %v4050 = vld [vmem:[%s1 + $0xa38] sm:$0xff]
      %v4051 = vld [vmem:[%s1 + $0xa40] sm:$0xff]
      %v4052 = vld [vmem:[%s1 + $0xa48] sm:$0xff]
      %v4053 = vld [vmem:[%s1 + $0xa50] sm:$0xff]
      %v4054 = vld [vmem:[%s1 + $0xa58] sm:$0xff]
      %v4055 = vld [vmem:[%s1 + $0xa60] sm:$0xff]
      %v4056 = vld [vmem:[%s1 + $0xa68] sm:$0xff]
      %v4057 = vld [vmem:[%s1 + $0xa70] sm:$0xff]
      %v4058 = vld [vmem:[%s1 + $0xa78] sm:$0xff]
      %v4059 = vld [vmem:[%s1 + $0xa80] sm:$0xff]
      %v4060 = vld [vmem:[%s1 + $0xa88] sm:$0xff]
      %v4061 = vld [vmem:[%s1 + $0xa90] sm:$0xff]
      %v4062 = vcombine.low %v3925, %v3929
      %v4063 = vcombine.low %v3933, %v3937
      %v4064 = vcombine.low %v3941, %v3945
      %v4065 = vcombine.low %v3949, %v3953
      %v4066 = vcombine.low %v3957, %v3961
      %v4067 = vcombine.low %v3965, %v3969
      %v4068 = vcombine.low %v3973, %v3977
      %v4069 = vcombine.low %v3981, %v3985
      %v4070 = vcombine.low %v3989, %v3993
      %v4071 = vcombine.low %v3997, %v4001
      %v4072 = vcombine.low %v4005, %v4009
      %v4073 = vcombine.low %v4013, %v4017
      %v4074 = vcombine.low %v4021, %v4025
      %v4075 = vcombine.low %v4029, %v4033
      %v4076 = vcombine.low %v4037, %v4041
      %v4077 = vcombine.low %v4045, %v4049
      %v4078 = vrot.slane %v4062, 7
      %v4079 = vrot.slane %v4063, 7
      %v4080 = vsel %vm180, %v4078, %v4079
      %v4081 = vrot.slane %v4064, 7
      %v4082 = vsel %vm180, %v4079, %v4081
      %v4083 = vrot.slane %v4065, 7
      %v4084 = vsel %vm180, %v4081, %v4083
      %v4085 = vrot.slane %v4066, 7
      %v4086 = vsel %vm180, %v4083, %v4085
      %v4087 = vrot.slane %v4067, 7
      %v4088 = vsel %vm180, %v4085, %v4087
      %v4089 = vrot.slane %v4068, 7
      %v4090 = vsel %vm180, %v4087, %v4089
      %v4091 = vrot.slane %v4069, 7
      %v4092 = vsel %vm180, %v4089, %v4091
      %v4093 = vrot.slane %v4070, 7
      %v4094 = vsel %vm180, %v4091, %v4093
      %v4095 = vrot.slane %v4071, 7
      %v4096 = vsel %vm180, %v4093, %v4095
      %v4097 = vrot.slane %v4072, 7
      %v4098 = vsel %vm180, %v4095, %v4097
      %v4099 = vrot.slane %v4073, 7
      %v4100 = vsel %vm180, %v4097, %v4099
      %v4101 = vrot.slane %v4074, 7
      %v4102 = vsel %vm180, %v4099, %v4101
      %v4103 = vrot.slane %v4075, 7
      %v4104 = vsel %vm180, %v4101, %v4103
      %v4105 = vrot.slane %v4076, 7
      %v4106 = vsel %vm180, %v4103, %v4105
      %v4107 = vrot.slane %v4077, 7
      %v4108 = vsel %vm180, %v4105, %v4107
      %v4125 = vsel %vm180, 0.0, %v4078
      %v4126 = vrot.slane %v4062, 1
      %v4127 = vrot.slane %v4063, 1
      %v4128 = vsel %vm399, %v4126, %v4127
      %v4129 = vrot.slane %v4064, 1
      %v4130 = vsel %vm399, %v4127, %v4129
      %v4131 = vrot.slane %v4065, 1
      %v4132 = vsel %vm399, %v4129, %v4131
      %v4133 = vrot.slane %v4066, 1
      %v4134 = vsel %vm399, %v4131, %v4133
      %v4135 = vrot.slane %v4067, 1
      %v4136 = vsel %vm399, %v4133, %v4135
      %v4137 = vrot.slane %v4068, 1
      %v4138 = vsel %vm399, %v4135, %v4137
      %v4139 = vrot.slane %v4069, 1
      %v4140 = vsel %vm399, %v4137, %v4139
      %v4141 = vrot.slane %v4070, 1
      %v4142 = vsel %vm399, %v4139, %v4141
      %v4143 = vrot.slane %v4071, 1
      %v4144 = vsel %vm399, %v4141, %v4143
      %v4145 = vrot.slane %v4072, 1
      %v4146 = vsel %vm399, %v4143, %v4145
      %v4147 = vrot.slane %v4073, 1
      %v4148 = vsel %vm399, %v4145, %v4147
      %v4149 = vrot.slane %v4074, 1
      %v4150 = vsel %vm399, %v4147, %v4149
      %v4151 = vrot.slane %v4075, 1
      %v4152 = vsel %vm399, %v4149, %v4151
      %v4153 = vrot.slane %v4076, 1
      %v4154 = vsel %vm399, %v4151, %v4153
      %v4155 = vrot.slane %v4077, 1
      %v4156 = vsel %vm399, %v4153, %v4155
      %v4158 = vsel %vm399, %v4155, 0.0
      %4159 = vrot.lane.b32.xlu0 %v4062, 32
      %v4160 = vpop.permute.xlu0 %4159
      %4161 = vrot.lane.b32.xlu0 %v4063, 32
      %v4162 = vpop.permute.xlu0 %4161
      %4163 = vrot.lane.b32.xlu0 %v4064, 32
      %v4164 = vpop.permute.xlu0 %4163
      %4165 = vrot.lane.b32.xlu0 %v4065, 32
      %v4166 = vpop.permute.xlu0 %4165
      %4167 = vrot.lane.b32.xlu0 %v4066, 32
      %v4168 = vpop.permute.xlu0 %4167
      %4169 = vrot.lane.b32.xlu0 %v4067, 32
      %v4170 = vpop.permute.xlu0 %4169
      %4171 = vrot.lane.b32.xlu0 %v4068, 32
      %v4172 = vpop.permute.xlu0 %4171
      %4173 = vrot.lane.b32.xlu0 %v4069, 32
      %v4174 = vpop.permute.xlu0 %4173
      %4175 = vrot.lane.b32.xlu0 %v4070, 32
      %v4176 = vpop.permute.xlu0 %4175
      %4177 = vrot.lane.b32.xlu0 %v4071, 32
      %v4178 = vpop.permute.xlu0 %4177
      %4179 = vrot.lane.b32.xlu0 %v4072, 32
      %v4180 = vpop.permute.xlu0 %4179
      %4181 = vrot.lane.b32.xlu0 %v4073, 32
      %v4182 = vpop.permute.xlu0 %4181
      %4183 = vrot.lane.b32.xlu0 %v4074, 32
      %v4184 = vpop.permute.xlu0 %4183
      %4185 = vrot.lane.b32.xlu0 %v4075, 32
      %v4186 = vpop.permute.xlu0 %4185
      %4187 = vrot.lane.b32.xlu0 %v4076, 32
      %v4188 = vpop.permute.xlu0 %4187
      %4189 = vrot.lane.b32.xlu0 %v4077, 32
      %v4190 = vpop.permute.xlu0 %4189
      %4208 = vrot.lane.b32.xlu0 %v4128, 64
      %v4209 = vpop.permute.xlu0 %4208
      %4210 = vrot.lane.b32.xlu0 %v4130, 64
      %v4211 = vpop.permute.xlu0 %4210
      %4212 = vrot.lane.b32.xlu0 %v4132, 64
      %v4213 = vpop.permute.xlu0 %4212
      %4214 = vrot.lane.b32.xlu0 %v4134, 64
      %v4215 = vpop.permute.xlu0 %4214
      %4216 = vrot.lane.b32.xlu0 %v4136, 64
      %v4217 = vpop.permute.xlu0 %4216
      %4218 = vrot.lane.b32.xlu0 %v4138, 64
      %v4219 = vpop.permute.xlu0 %4218
      %4220 = vrot.lane.b32.xlu0 %v4140, 64
      %v4221 = vpop.permute.xlu0 %4220
      %4222 = vrot.lane.b32.xlu0 %v4142, 64
      %v4223 = vpop.permute.xlu0 %4222
      %4224 = vrot.lane.b32.xlu0 %v4144, 64
      %v4225 = vpop.permute.xlu0 %4224
      %4226 = vrot.lane.b32.xlu0 %v4146, 64
      %v4227 = vpop.permute.xlu0 %4226
      %4228 = vrot.lane.b32.xlu0 %v4148, 64
      %v4229 = vpop.permute.xlu0 %4228
      %4230 = vrot.lane.b32.xlu0 %v4150, 64
      %v4231 = vpop.permute.xlu0 %4230
      %4232 = vrot.lane.b32.xlu0 %v4152, 64
      %v4233 = vpop.permute.xlu0 %4232
      %4234 = vrot.lane.b32.xlu0 %v4154, 64
      %v4235 = vpop.permute.xlu0 %4234
      %4236 = vrot.lane.b32.xlu0 %v4156, 64
      %v4237 = vpop.permute.xlu0 %4236
      %4238 = vrot.lane.b32.xlu0 %v4158, 64
      %v4239 = vpop.permute.xlu0 %4238
      %v4256 = vsel %vm788, %v4125, %v4160
      %v4257 = vsel %vm788, %v4080, %v4162
      %v4258 = vsel %vm788, %v4082, %v4164
      %v4259 = vsel %vm788, %v4084, %v4166
      %v4260 = vsel %vm788, %v4086, %v4168
      %v4261 = vsel %vm788, %v4088, %v4170
      %v4262 = vsel %vm788, %v4090, %v4172
      %v4263 = vsel %vm788, %v4092, %v4174
      %v4264 = vsel %vm788, %v4094, %v4176
      %v4265 = vsel %vm788, %v4096, %v4178
      %v4266 = vsel %vm788, %v4098, %v4180
      %v4267 = vsel %vm788, %v4100, %v4182
      %v4268 = vsel %vm788, %v4102, %v4184
      %v4269 = vsel %vm788, %v4104, %v4186
      %v4270 = vsel %vm788, %v4106, %v4188
      %v4271 = vsel %vm788, %v4108, %v4190
      %v4272 = vsel %vm1632, %v4256, %v4209
      %v4273 = vsel %vm1632, %v4257, %v4211
      %v4274 = vsel %vm1632, %v4258, %v4213
      %v4275 = vsel %vm1632, %v4259, %v4215
      %v4276 = vsel %vm1632, %v4260, %v4217
      %v4277 = vsel %vm1632, %v4261, %v4219
      %v4278 = vsel %vm1632, %v4262, %v4221
      %v4279 = vsel %vm1632, %v4263, %v4223
      %v4280 = vsel %vm1632, %v4264, %v4225
      %v4281 = vsel %vm1632, %v4265, %v4227
      %v4282 = vsel %vm1632, %v4266, %v4229
      %v4283 = vsel %vm1632, %v4267, %v4231
      %v4284 = vsel %vm1632, %v4268, %v4233
      %v4285 = vsel %vm1632, %v4269, %v4235
      %v4286 = vsel %vm1632, %v4270, %v4237
      %v4287 = vsel %vm1632, %v4271, %v4239
      %v4288 = vld [vmem:[%s1 + $0xa98] sm:$0x1]
      %v4289 = vlaneseq
      %v4290 = vshrl.u32 %v4289, 7
      %v4291 = vsub.s32 0, %v4290
      %v4292 = vrot.slane %v4288, %v4291
      %v4294 = vsel %vm1642, %v4272, 0
      %v4297 = vsel %vm1642, %v4273, 0
      %v4300 = vsel %vm1642, %v4274, 0
      %v4303 = vsel %vm1642, %v4275, 0
      %v4306 = vsel %vm1642, %v4276, 0
      %v4309 = vsel %vm1642, %v4277, 0
      %v4312 = vsel %vm1642, %v4278, 0
      %v4315 = vsel %vm1642, %v4279, 0
      %v4318 = vsel %vm1642, %v4280, 0
      %v4321 = vsel %vm1642, %v4281, 0
      %v4324 = vsel %vm1642, %v4282, 0
      %v4327 = vsel %vm1642, %v4283, 0
      %v4330 = vsel %vm1642, %v4284, 0
      %v4333 = vsel %vm1642, %v4285, 0
      %v4336 = vsel %vm1642, %v4286, 0
      %v4339 = vsel %vm1642, %v4287, 0
      %4341 = vmatprep.subr.mxu0 0.0
      %4342 = vmatpush1.msra.mxu0 %v4050
      %4343 = vmatprep.subr.mxu0 0.0
      %4344 = vmatpush1.msra.mxu0 %v4051
      %4345 = vmatprep.subr.mxu0 0.0
      %4346 = vmatpush1.msra.mxu0 %v4052
      %4347 = vmatprep.subr.mxu0 0.0
      %4348 = vmatpush1.msra.mxu0 %v4053
      %4349 = vmatprep.subr.mxu0 0.0
      %4350 = vmatpush1.msra.mxu0 %v4054
      %4351 = vmatprep.subr.mxu0 0.0
      %4352 = vmatpush1.msra.mxu0 %v4055
      %4353 = vmatprep.subr.mxu0 0.0
      %4354 = vmatpush1.msra.mxu0 %v4056
      %4355 = vmatprep.subr.mxu0 0.0
      %4356 = vmatpush1.msra.mxu0 %v4057
      %4357 = vmatprep.subr.mxu0 0.0
      %4358 = vmatpush1.msra.mxu0 %v4058
      %4359 = vmatprep.subr.mxu0 0.0
      %4360 = vmatpush1.msra.mxu0 %v4059
      %4361 = vmatprep.subr.mxu0 0.0
      %4362 = vmatpush1.msra.mxu0 %v4060
      %4363 = vmatprep.subr.mxu0 0.0
      %4364 = vmatpush1.msra.mxu0 %v4061
      %4365 = vmatprep.subr.mxu0 0.0
      %4366 = vmatpush1.msra.mxu0 0.0
      %4367 = vmatprep.subr.mxu0 0.0
      %4368 = vmatpush1.msra.mxu0 0.0
      %4369 = vmatprep.subr.mxu0 0.0
      %4370 = vmatpush1.msra.mxu0 0.0
      %4371 = vmatprep.subr.mxu0 0.0
      %4372 = vmatpush1.msra.mxu0 0.0
      %4373 = vmatprep.subr.mxu0 0.0
      %4374 = vmatpush1.msra.mxu0 0.0
      %4375 = vmatprep.subr.mxu0 0.0
      %4376 = vmatpush1.msra.mxu0 0.0
      %4377 = vmatprep.subr.mxu0 0.0
      %4378 = vmatpush1.msra.mxu0 0.0
      %4379 = vmatprep.subr.mxu0 0.0
      %4380 = vmatpush1.msra.mxu0 0.0
      %4381 = vmatprep.subr.mxu0 0.0
      %4382 = vmatpush1.msra.mxu0 0.0
      %4383 = vmatprep.subr.mxu0 0.0
      %4384 = vmatpush1.msra.mxu0 0.0
      %4385 = vmatprep.subr.mxu0 0.0
      %4386 = vmatpush1.msra.mxu0 0.0
      %4387 = vmatprep.subr.mxu0 0.0
      %4388 = vmatpush1.msra.mxu0 0.0
      %4389 = vmatprep.subr.mxu0 0.0
      %4390 = vmatpush1.msra.mxu0 0.0
      %4391 = vmatprep.subr.mxu0 0.0
      %4392 = vmatpush1.msra.mxu0 0.0
      %4393 = vmatprep.subr.mxu0 0.0
      %4394 = vmatpush1.msra.mxu0 0.0
      %4395 = vmatprep.subr.mxu0 0.0
      %4396 = vmatpush1.msra.mxu0 0.0
      %4397 = vmatprep.subr.mxu0 0.0
      %4398 = vmatpush1.msra.mxu0 0.0
      %4399 = vmatprep.subr.mxu0 0.0
      %4400 = vmatpush1.msra.mxu0 0.0
      %4401 = vmatprep.subr.mxu0 0.0
      %4402 = vmatpush1.msra.mxu0 0.0
      %4403 = vmatprep.subr.mxu0 0.0
      %4404 = vmatpush1.msra.mxu0 0.0
      %4405 = vmatprep.mubr.f32.mxu0 0.0
      %4406 = vmatmul.mubr.f32.gmra.mrb[0].mxu0 %v4294
      %v4407 = vpop.f32.mrb[0].mxu0
      %v4408 = vadd.f32 %v4292, %v4407
      %v4409 = vpop.f32.mrb[0].mxu0
      %4410 = vmatprep.mubr.f32.mxu0 0.0
      %4411 = vmatmul.mubr.f32.gmra.mrb[0].mxu0 %v4297
      %v4412 = vpop.f32.mrb[0].mxu0
      %v4413 = vadd.f32 %v4292, %v4412
      %v4414 = vpop.f32.mrb[0].mxu0
      %4415 = vmatprep.mubr.f32.mxu0 0.0
      %4416 = vmatmul.mubr.f32.gmra.mrb[0].mxu0 %v4300
      %v4417 = vpop.f32.mrb[0].mxu0
      %v4418 = vadd.f32 %v4292, %v4417
      %v4419 = vpop.f32.mrb[0].mxu0
      %4420 = vmatprep.mubr.f32.mxu0 0.0
      %4421 = vmatmul.mubr.f32.gmra.mrb[0].mxu0 %v4303
      %v4422 = vpop.f32.mrb[0].mxu0
      %v4423 = vadd.f32 %v4292, %v4422
      %v4424 = vpop.f32.mrb[0].mxu0
      %4425 = vmatprep.mubr.f32.mxu0 0.0
      %4426 = vmatmul.mubr.f32.gmra.mrb[0].mxu0 %v4306
      %v4427 = vpop.f32.mrb[0].mxu0
      %v4428 = vadd.f32 %v4292, %v4427
      %v4429 = vpop.f32.mrb[0].mxu0
      %4430 = vmatprep.mubr.f32.mxu0 0.0
      %4431 = vmatmul.mubr.f32.gmra.mrb[0].mxu0 %v4309
      %v4432 = vpop.f32.mrb[0].mxu0
      %v4433 = vadd.f32 %v4292, %v4432
      %v4434 = vpop.f32.mrb[0].mxu0
      %4435 = vmatprep.mubr.f32.mxu0 0.0
      %4436 = vmatmul.mubr.f32.gmra.mrb[0].mxu0 %v4312
      %v4437 = vpop.f32.mrb[0].mxu0
      %v4438 = vadd.f32 %v4292, %v4437
      %v4439 = vpop.f32.mrb[0].mxu0
      %4440 = vmatprep.mubr.f32.mxu0 0.0
      %4441 = vmatmul.mubr.f32.gmra.mrb[0].mxu0 %v4315
      %v4442 = vpop.f32.mrb[0].mxu0
      %v4443 = vadd.f32 %v4292, %v4442
      %v4444 = vpop.f32.mrb[0].mxu0
      %4445 = vmatprep.mubr.f32.mxu0 0.0
      %4446 = vmatmul.mubr.f32.gmra.mrb[0].mxu0 %v4318
      %v4447 = vpop.f32.mrb[0].mxu0
      %v4448 = vadd.f32 %v4292, %v4447
      %v4449 = vpop.f32.mrb[0].mxu0
      %4450 = vmatprep.mubr.f32.mxu0 0.0
      %4451 = vmatmul.mubr.f32.gmra.mrb[0].mxu0 %v4321
      %v4452 = vpop.f32.mrb[0].mxu0
      %v4453 = vadd.f32 %v4292, %v4452
      %v4454 = vpop.f32.mrb[0].mxu0
      %4455 = vmatprep.mubr.f32.mxu0 0.0
      %4456 = vmatmul.mubr.f32.gmra.mrb[0].mxu0 %v4324
      %v4457 = vpop.f32.mrb[0].mxu0
      %v4458 = vadd.f32 %v4292, %v4457
      %v4459 = vpop.f32.mrb[0].mxu0
      %4460 = vmatprep.mubr.f32.mxu0 0.0
      %4461 = vmatmul.mubr.f32.gmra.mrb[0].mxu0 %v4327
      %v4462 = vpop.f32.mrb[0].mxu0
      %v4463 = vadd.f32 %v4292, %v4462
      %v4464 = vpop.f32.mrb[0].mxu0
      %4465 = vmatprep.mubr.f32.mxu0 0.0
      %4466 = vmatmul.mubr.f32.gmra.mrb[0].mxu0 %v4330
      %v4467 = vpop.f32.mrb[0].mxu0
      %v4468 = vadd.f32 %v4292, %v4467
      %v4469 = vpop.f32.mrb[0].mxu0
      %4470 = vmatprep.mubr.f32.mxu0 0.0
      %4471 = vmatmul.mubr.f32.gmra.mrb[0].mxu0 %v4333
      %v4472 = vpop.f32.mrb[0].mxu0
      %v4473 = vadd.f32 %v4292, %v4472
      %v4474 = vpop.f32.mrb[0].mxu0
      %4475 = vmatprep.mubr.f32.mxu0 0.0
      %4476 = vmatmul.mubr.f32.gmra.mrb[0].mxu0 %v4336
      %v4477 = vpop.f32.mrb[0].mxu0
      %v4478 = vadd.f32 %v4292, %v4477
      %v4479 = vpop.f32.mrb[0].mxu0
      %4480 = vmatprep.mubr.f32.mxu0 0.0
      %4481 = vmatmul.mubr.f32.gmra.mrb[0].mxu0 %v4339
      %v4482 = vpop.f32.mrb[0].mxu0
      %v4483 = vadd.f32 %v4292, %v4482
      %v4484 = vpop.f32.mrb[0].mxu0
      %4485 = vdwg.mxu0
      %v4486 = vld [vmem:[%s1 + $0xaa0] sm:$0xff]
      %v4487 = vld [vmem:[%s1 + $0xaa8] sm:$0xff]
      %v4488 = vld [vmem:[%s1 + $0xab0] sm:$0xff]
      %v4489 = vld [vmem:[%s1 + $0xab8] sm:$0xff]
      %v4490 = vld [vmem:[%s1 + $0xac0] sm:$0xff]
      %v4491 = vld [vmem:[%s1 + $0xac8] sm:$0xff]
      %v4508 = vrot.slane %v4408, 7
      %v4509 = vrot.slane %v4413, 7
      %v4510 = vsel %vm180, %v4508, %v4509
      %v4511 = vrot.slane %v4418, 7
      %v4512 = vsel %vm180, %v4509, %v4511
      %v4513 = vrot.slane %v4423, 7
      %v4514 = vsel %vm180, %v4511, %v4513
      %v4515 = vrot.slane %v4428, 7
      %v4516 = vsel %vm180, %v4513, %v4515
      %v4517 = vrot.slane %v4433, 7
      %v4518 = vsel %vm180, %v4515, %v4517
      %v4519 = vrot.slane %v4438, 7
      %v4520 = vsel %vm180, %v4517, %v4519
      %v4521 = vrot.slane %v4443, 7
      %v4522 = vsel %vm180, %v4519, %v4521
      %v4523 = vrot.slane %v4448, 7
      %v4524 = vsel %vm180, %v4521, %v4523
      %v4525 = vrot.slane %v4453, 7
      %v4526 = vsel %vm180, %v4523, %v4525
      %v4527 = vrot.slane %v4458, 7
      %v4528 = vsel %vm180, %v4525, %v4527
      %v4529 = vrot.slane %v4463, 7
      %v4530 = vsel %vm180, %v4527, %v4529
      %v4531 = vrot.slane %v4468, 7
      %v4532 = vsel %vm180, %v4529, %v4531
      %v4533 = vrot.slane %v4473, 7
      %v4534 = vsel %vm180, %v4531, %v4533
      %v4535 = vrot.slane %v4478, 7
      %v4536 = vsel %vm180, %v4533, %v4535
      %v4537 = vrot.slane %v4483, 7
      %v4538 = vsel %vm180, %v4535, %v4537
      %v4555 = vsel %vm180, 0.0, %v4508
      %v4556 = vrot.slane %v4408, 1
      %v4557 = vrot.slane %v4413, 1
      %v4558 = vsel %vm399, %v4556, %v4557
      %v4559 = vrot.slane %v4418, 1
      %v4560 = vsel %vm399, %v4557, %v4559
      %v4561 = vrot.slane %v4423, 1
      %v4562 = vsel %vm399, %v4559, %v4561
      %v4563 = vrot.slane %v4428, 1
      %v4564 = vsel %vm399, %v4561, %v4563
      %v4565 = vrot.slane %v4433, 1
      %v4566 = vsel %vm399, %v4563, %v4565
      %v4567 = vrot.slane %v4438, 1
      %v4568 = vsel %vm399, %v4565, %v4567
      %v4569 = vrot.slane %v4443, 1
      %v4570 = vsel %vm399, %v4567, %v4569
      %v4571 = vrot.slane %v4448, 1
      %v4572 = vsel %vm399, %v4569, %v4571
      %v4573 = vrot.slane %v4453, 1
      %v4574 = vsel %vm399, %v4571, %v4573
      %v4575 = vrot.slane %v4458, 1
      %v4576 = vsel %vm399, %v4573, %v4575
      %v4577 = vrot.slane %v4463, 1
      %v4578 = vsel %vm399, %v4575, %v4577
      %v4579 = vrot.slane %v4468, 1
      %v4580 = vsel %vm399, %v4577, %v4579
      %v4581 = vrot.slane %v4473, 1
      %v4582 = vsel %vm399, %v4579, %v4581
      %v4583 = vrot.slane %v4478, 1
      %v4584 = vsel %vm399, %v4581, %v4583
      %v4585 = vrot.slane %v4483, 1
      %v4586 = vsel %vm399, %v4583, %v4585
      %v4588 = vsel %vm399, %v4585, 0.0
      %4589 = vrot.lane.b32.xlu0 %v4408, 16
      %v4590 = vpop.permute.xlu0 %4589
      %4591 = vrot.lane.b32.xlu0 %v4413, 16
      %v4592 = vpop.permute.xlu0 %4591
      %4593 = vrot.lane.b32.xlu0 %v4418, 16
      %v4594 = vpop.permute.xlu0 %4593
      %4595 = vrot.lane.b32.xlu0 %v4423, 16
      %v4596 = vpop.permute.xlu0 %4595
      %4597 = vrot.lane.b32.xlu0 %v4428, 16
      %v4598 = vpop.permute.xlu0 %4597
      %4599 = vrot.lane.b32.xlu0 %v4433, 16
      %v4600 = vpop.permute.xlu0 %4599
      %4601 = vrot.lane.b32.xlu0 %v4438, 16
      %v4602 = vpop.permute.xlu0 %4601
      %4603 = vrot.lane.b32.xlu0 %v4443, 16
      %v4604 = vpop.permute.xlu0 %4603
      %4605 = vrot.lane.b32.xlu0 %v4448, 16
      %v4606 = vpop.permute.xlu0 %4605
      %4607 = vrot.lane.b32.xlu0 %v4453, 16
      %v4608 = vpop.permute.xlu0 %4607
      %4609 = vrot.lane.b32.xlu0 %v4458, 16
      %v4610 = vpop.permute.xlu0 %4609
      %4611 = vrot.lane.b32.xlu0 %v4463, 16
      %v4612 = vpop.permute.xlu0 %4611
      %4613 = vrot.lane.b32.xlu0 %v4468, 16
      %v4614 = vpop.permute.xlu0 %4613
      %4615 = vrot.lane.b32.xlu0 %v4473, 16
      %v4616 = vpop.permute.xlu0 %4615
      %4617 = vrot.lane.b32.xlu0 %v4478, 16
      %v4618 = vpop.permute.xlu0 %4617
      %4619 = vrot.lane.b32.xlu0 %v4483, 16
      %v4620 = vpop.permute.xlu0 %4619
      %4638 = vrot.lane.b32.xlu0 %v4558, 32
      %v4639 = vpop.permute.xlu0 %4638
      %4640 = vrot.lane.b32.xlu0 %v4560, 32
      %v4641 = vpop.permute.xlu0 %4640
      %4642 = vrot.lane.b32.xlu0 %v4562, 32
      %v4643 = vpop.permute.xlu0 %4642
      %4644 = vrot.lane.b32.xlu0 %v4564, 32
      %v4645 = vpop.permute.xlu0 %4644
      %4646 = vrot.lane.b32.xlu0 %v4566, 32
      %v4647 = vpop.permute.xlu0 %4646
      %4648 = vrot.lane.b32.xlu0 %v4568, 32
      %v4649 = vpop.permute.xlu0 %4648
      %4650 = vrot.lane.b32.xlu0 %v4570, 32
      %v4651 = vpop.permute.xlu0 %4650
      %4652 = vrot.lane.b32.xlu0 %v4572, 32
      %v4653 = vpop.permute.xlu0 %4652
      %4654 = vrot.lane.b32.xlu0 %v4574, 32
      %v4655 = vpop.permute.xlu0 %4654
      %4656 = vrot.lane.b32.xlu0 %v4576, 32
      %v4657 = vpop.permute.xlu0 %4656
      %4658 = vrot.lane.b32.xlu0 %v4578, 32
      %v4659 = vpop.permute.xlu0 %4658
      %4660 = vrot.lane.b32.xlu0 %v4580, 32
      %v4661 = vpop.permute.xlu0 %4660
      %4662 = vrot.lane.b32.xlu0 %v4582, 32
      %v4663 = vpop.permute.xlu0 %4662
      %4664 = vrot.lane.b32.xlu0 %v4584, 32
      %v4665 = vpop.permute.xlu0 %4664
      %4666 = vrot.lane.b32.xlu0 %v4586, 32
      %v4667 = vpop.permute.xlu0 %4666
      %4668 = vrot.lane.b32.xlu0 %v4588, 32
      %v4669 = vpop.permute.xlu0 %4668
      %v4686 = vsel %vm771, %v4555, %v4590
      %v4687 = vsel %vm771, %v4510, %v4592
      %v4688 = vsel %vm771, %v4512, %v4594
      %v4689 = vsel %vm771, %v4514, %v4596
      %v4690 = vsel %vm771, %v4516, %v4598
      %v4691 = vsel %vm771, %v4518, %v4600
      %v4692 = vsel %vm771, %v4520, %v4602
      %v4693 = vsel %vm771, %v4522, %v4604
      %v4694 = vsel %vm771, %v4524, %v4606
      %v4695 = vsel %vm771, %v4526, %v4608
      %v4696 = vsel %vm771, %v4528, %v4610
      %v4697 = vsel %vm771, %v4530, %v4612
      %v4698 = vsel %vm771, %v4532, %v4614
      %v4699 = vsel %vm771, %v4534, %v4616
      %v4700 = vsel %vm771, %v4536, %v4618
      %v4701 = vsel %vm771, %v4538, %v4620
      %v4702 = vsel %vm788, %v4686, %v4639
      %v4703 = vsel %vm788, %v4687, %v4641
      %v4704 = vsel %vm788, %v4688, %v4643
      %v4705 = vsel %vm788, %v4689, %v4645
      %v4706 = vsel %vm788, %v4690, %v4647
      %v4707 = vsel %vm788, %v4691, %v4649
      %v4708 = vsel %vm788, %v4692, %v4651
      %v4709 = vsel %vm788, %v4693, %v4653
      %v4710 = vsel %vm788, %v4694, %v4655
      %v4711 = vsel %vm788, %v4695, %v4657
      %v4712 = vsel %vm788, %v4696, %v4659
      %v4713 = vsel %vm788, %v4697, %v4661
      %v4714 = vsel %vm788, %v4698, %v4663
      %v4715 = vsel %vm788, %v4699, %v4665
      %v4716 = vsel %vm788, %v4700, %v4667
      %v4717 = vsel %vm788, %v4701, %v4669
      %v4718 = vld [vmem:[%s1 + $0xad0] sm:$0xff]
      %v4719 = vld [vmem:[%s1 + $0xad8] sm:$0xff]
      %v4720 = vld [vmem:[%s1 + $0xae0] sm:$0xff]
      %v4721 = vld [vmem:[%s1 + $0xae8] sm:$0xff]
      %v4722 = vld [vmem:[%s1 + $0xaf0] sm:$0xff]
      %v4723 = vld [vmem:[%s1 + $0xaf8] sm:$0xff]
      %v4724 = vrot.slane %v1004, 7
      %v4725 = vrot.slane %v1005, 7
      %v4726 = vsel %vm180, %v4724, %v4725
      %v4727 = vrot.slane %v1006, 7
      %v4728 = vsel %vm180, %v4725, %v4727
      %v4729 = vrot.slane %v1007, 7
      %v4730 = vsel %vm180, %v4727, %v4729
      %v4731 = vrot.slane %v1008, 7
      %v4732 = vsel %vm180, %v4729, %v4731
      %v4733 = vrot.slane %v1009, 7
      %v4734 = vsel %vm180, %v4731, %v4733
      %v4735 = vrot.slane %v1010, 7
      %v4736 = vsel %vm180, %v4733, %v4735
      %v4737 = vrot.slane %v1011, 7
      %v4738 = vsel %vm180, %v4735, %v4737
      %v4739 = vrot.slane %v1012, 7
      %v4740 = vsel %vm180, %v4737, %v4739
      %v4741 = vrot.slane %v1013, 7
      %v4742 = vsel %vm180, %v4739, %v4741
      %v4743 = vrot.slane %v1014, 7
      %v4744 = vsel %vm180, %v4741, %v4743
      %v4745 = vrot.slane %v1015, 7
      %v4746 = vsel %vm180, %v4743, %v4745
      %v4747 = vrot.slane %v1016, 7
      %v4748 = vsel %vm180, %v4745, %v4747
      %v4749 = vrot.slane %v1017, 7
      %v4750 = vsel %vm180, %v4747, %v4749
      %v4751 = vrot.slane %v1018, 7
      %v4752 = vsel %vm180, %v4749, %v4751
      %v4753 = vrot.slane %v1019, 7
      %v4754 = vsel %vm180, %v4751, %v4753
      %v4771 = vsel %vm180, 0.0, %v4724
      %v4772 = vrot.slane %v1004, 1
      %v4773 = vrot.slane %v1005, 1
      %v4774 = vsel %vm399, %v4772, %v4773
      %v4775 = vrot.slane %v1006, 1
      %v4776 = vsel %vm399, %v4773, %v4775
      %v4777 = vrot.slane %v1007, 1
      %v4778 = vsel %vm399, %v4775, %v4777
      %v4779 = vrot.slane %v1008, 1
      %v4780 = vsel %vm399, %v4777, %v4779
      %v4781 = vrot.slane %v1009, 1
      %v4782 = vsel %vm399, %v4779, %v4781
      %v4783 = vrot.slane %v1010, 1
      %v4784 = vsel %vm399, %v4781, %v4783
      %v4785 = vrot.slane %v1011, 1
      %v4786 = vsel %vm399, %v4783, %v4785
      %v4787 = vrot.slane %v1012, 1
      %v4788 = vsel %vm399, %v4785, %v4787
      %v4789 = vrot.slane %v1013, 1
      %v4790 = vsel %vm399, %v4787, %v4789
      %v4791 = vrot.slane %v1014, 1
      %v4792 = vsel %vm399, %v4789, %v4791
      %v4793 = vrot.slane %v1015, 1
      %v4794 = vsel %vm399, %v4791, %v4793
      %v4795 = vrot.slane %v1016, 1
      %v4796 = vsel %vm399, %v4793, %v4795
      %v4797 = vrot.slane %v1017, 1
      %v4798 = vsel %vm399, %v4795, %v4797
      %v4799 = vrot.slane %v1018, 1
      %v4800 = vsel %vm399, %v4797, %v4799
      %v4801 = vrot.slane %v1019, 1
      %v4802 = vsel %vm399, %v4799, %v4801
      %v4804 = vsel %vm399, %v4801, 0.0
      %4805 = vrot.lane.b32.xlu0 %v1004, 16
      %v4806 = vpop.permute.xlu0 %4805
      %4807 = vrot.lane.b32.xlu0 %v1005, 16
      %v4808 = vpop.permute.xlu0 %4807
      %4809 = vrot.lane.b32.xlu0 %v1006, 16
      %v4810 = vpop.permute.xlu0 %4809
      %4811 = vrot.lane.b32.xlu0 %v1007, 16
      %v4812 = vpop.permute.xlu0 %4811
      %4813 = vrot.lane.b32.xlu0 %v1008, 16
      %v4814 = vpop.permute.xlu0 %4813
      %4815 = vrot.lane.b32.xlu0 %v1009, 16
      %v4816 = vpop.permute.xlu0 %4815
      %4817 = vrot.lane.b32.xlu0 %v1010, 16
      %v4818 = vpop.permute.xlu0 %4817
      %4819 = vrot.lane.b32.xlu0 %v1011, 16
      %v4820 = vpop.permute.xlu0 %4819
      %4821 = vrot.lane.b32.xlu0 %v1012, 16
      %v4822 = vpop.permute.xlu0 %4821
      %4823 = vrot.lane.b32.xlu0 %v1013, 16
      %v4824 = vpop.permute.xlu0 %4823
      %4825 = vrot.lane.b32.xlu0 %v1014, 16
      %v4826 = vpop.permute.xlu0 %4825
      %4827 = vrot.lane.b32.xlu0 %v1015, 16
      %v4828 = vpop.permute.xlu0 %4827
      %4829 = vrot.lane.b32.xlu0 %v1016, 16
      %v4830 = vpop.permute.xlu0 %4829
      %4831 = vrot.lane.b32.xlu0 %v1017, 16
      %v4832 = vpop.permute.xlu0 %4831
      %4833 = vrot.lane.b32.xlu0 %v1018, 16
      %v4834 = vpop.permute.xlu0 %4833
      %4835 = vrot.lane.b32.xlu0 %v1019, 16
      %v4836 = vpop.permute.xlu0 %4835
      %4854 = vrot.lane.b32.xlu0 %v4774, 32
      %v4855 = vpop.permute.xlu0 %4854
      %4856 = vrot.lane.b32.xlu0 %v4776, 32
      %v4857 = vpop.permute.xlu0 %4856
      %4858 = vrot.lane.b32.xlu0 %v4778, 32
      %v4859 = vpop.permute.xlu0 %4858
      %4860 = vrot.lane.b32.xlu0 %v4780, 32
      %v4861 = vpop.permute.xlu0 %4860
      %4862 = vrot.lane.b32.xlu0 %v4782, 32
      %v4863 = vpop.permute.xlu0 %4862
      %4864 = vrot.lane.b32.xlu0 %v4784, 32
      %v4865 = vpop.permute.xlu0 %4864
      %4866 = vrot.lane.b32.xlu0 %v4786, 32
      %v4867 = vpop.permute.xlu0 %4866
      %4868 = vrot.lane.b32.xlu0 %v4788, 32
      %v4869 = vpop.permute.xlu0 %4868
      %4870 = vrot.lane.b32.xlu0 %v4790, 32
      %v4871 = vpop.permute.xlu0 %4870
      %4872 = vrot.lane.b32.xlu0 %v4792, 32
      %v4873 = vpop.permute.xlu0 %4872
      %4874 = vrot.lane.b32.xlu0 %v4794, 32
      %v4875 = vpop.permute.xlu0 %4874
      %4876 = vrot.lane.b32.xlu0 %v4796, 32
      %v4877 = vpop.permute.xlu0 %4876
      %4878 = vrot.lane.b32.xlu0 %v4798, 32
      %v4879 = vpop.permute.xlu0 %4878
      %4880 = vrot.lane.b32.xlu0 %v4800, 32
      %v4881 = vpop.permute.xlu0 %4880
      %4882 = vrot.lane.b32.xlu0 %v4802, 32
      %v4883 = vpop.permute.xlu0 %4882
      %4884 = vrot.lane.b32.xlu0 %v4804, 32
      %v4885 = vpop.permute.xlu0 %4884
      %v4902 = vsel %vm771, %v4771, %v4806
      %v4903 = vsel %vm771, %v4726, %v4808
      %v4904 = vsel %vm771, %v4728, %v4810
      %v4905 = vsel %vm771, %v4730, %v4812
      %v4906 = vsel %vm771, %v4732, %v4814
      %v4907 = vsel %vm771, %v4734, %v4816
      %v4908 = vsel %vm771, %v4736, %v4818
      %v4909 = vsel %vm771, %v4738, %v4820
      %v4910 = vsel %vm771, %v4740, %v4822
      %v4911 = vsel %vm771, %v4742, %v4824
      %v4912 = vsel %vm771, %v4744, %v4826
      %v4913 = vsel %vm771, %v4746, %v4828
      %v4914 = vsel %vm771, %v4748, %v4830
      %v4915 = vsel %vm771, %v4750, %v4832
      %v4916 = vsel %vm771, %v4752, %v4834
      %v4917 = vsel %vm771, %v4754, %v4836
      %v4918 = vsel %vm788, %v4902, %v4855
      %v4919 = vsel %vm788, %v4903, %v4857
      %v4920 = vsel %vm788, %v4904, %v4859
      %v4921 = vsel %vm788, %v4905, %v4861
      %v4922 = vsel %vm788, %v4906, %v4863
      %v4923 = vsel %vm788, %v4907, %v4865
      %v4924 = vsel %vm788, %v4908, %v4867
      %v4925 = vsel %vm788, %v4909, %v4869
      %v4926 = vsel %vm788, %v4910, %v4871
      %v4927 = vsel %vm788, %v4911, %v4873
      %v4928 = vsel %vm788, %v4912, %v4875
      %v4929 = vsel %vm788, %v4913, %v4877
      %v4930 = vsel %vm788, %v4914, %v4879
      %v4931 = vsel %vm788, %v4915, %v4881
      %v4932 = vsel %vm788, %v4916, %v4883
      %v4933 = vsel %vm788, %v4917, %v4885
      %v4935 = vsel %vm810, %v4918, 0
      %v4938 = vsel %vm810, %v4919, 0
      %v4941 = vsel %vm810, %v4920, 0
      %v4944 = vsel %vm810, %v4921, 0
      %v4947 = vsel %vm810, %v4922, 0
      %v4950 = vsel %vm810, %v4923, 0
      %v4953 = vsel %vm810, %v4924, 0
      %v4956 = vsel %vm810, %v4925, 0
      %v4959 = vsel %vm810, %v4926, 0
      %v4962 = vsel %vm810, %v4927, 0
      %v4965 = vsel %vm810, %v4928, 0
      %v4968 = vsel %vm810, %v4929, 0
      %v4971 = vsel %vm810, %v4930, 0
      %v4974 = vsel %vm810, %v4931, 0
      %v4977 = vsel %vm810, %v4932, 0
      %v4980 = vsel %vm810, %v4933, 0
      %4982 = vmatprep.subr.mxu0 0.0
      %4983 = vmatpush1.msra.mxu0 %v4718
      %4984 = vmatprep.subr.mxu0 0.0
      %4985 = vmatpush1.msra.mxu0 %v4719
      %4986 = vmatprep.subr.mxu0 0.0
      %4987 = vmatpush1.msra.mxu0 %v4720
      %4988 = vmatprep.subr.mxu0 0.0
      %4989 = vmatpush1.msra.mxu0 %v4721
      %4990 = vmatprep.subr.mxu0 0.0
      %4991 = vmatpush1.msra.mxu0 %v4722
      %4992 = vmatprep.subr.mxu0 0.0
      %4993 = vmatpush1.msra.mxu0 %v4723
      %4994 = vmatprep.subr.mxu0 0.0
      %4995 = vmatpush1.msra.mxu0 0.0
      %4996 = vmatprep.subr.mxu0 0.0
      %4997 = vmatpush1.msra.mxu0 0.0
      %4998 = vmatprep.subr.mxu0 0.0
      %4999 = vmatpush1.msra.mxu0 0.0
      %5000 = vmatprep.subr.mxu0 0.0
      %5001 = vmatpush1.msra.mxu0 0.0
      %5002 = vmatprep.subr.mxu0 0.0
      %5003 = vmatpush1.msra.mxu0 0.0
      %5004 = vmatprep.subr.mxu0 0.0
      %5005 = vmatpush1.msra.mxu0 0.0
      %5006 = vmatprep.subr.mxu0 0.0
      %5007 = vmatpush1.msra.mxu0 0.0
      %5008 = vmatprep.subr.mxu0 0.0
      %5009 = vmatpush1.msra.mxu0 0.0
      %5010 = vmatprep.subr.mxu0 0.0
      %5011 = vmatpush1.msra.mxu0 0.0
      %5012 = vmatprep.subr.mxu0 0.0
      %5013 = vmatpush1.msra.mxu0 0.0
      %5014 = vmatprep.subr.mxu0 0.0
      %5015 = vmatpush1.msra.mxu0 0.0
      %5016 = vmatprep.subr.mxu0 0.0
      %5017 = vmatpush1.msra.mxu0 0.0
      %5018 = vmatprep.subr.mxu0 0.0
      %5019 = vmatpush1.msra.mxu0 0.0
      %5020 = vmatprep.subr.mxu0 0.0
      %5021 = vmatpush1.msra.mxu0 0.0
      %5022 = vmatprep.subr.mxu0 0.0
      %5023 = vmatpush1.msra.mxu0 0.0
      %5024 = vmatprep.subr.mxu0 0.0
      %5025 = vmatpush1.msra.mxu0 0.0
      %5026 = vmatprep.subr.mxu0 0.0
      %5027 = vmatpush1.msra.mxu0 0.0
      %5028 = vmatprep.subr.mxu0 0.0
      %5029 = vmatpush1.msra.mxu0 0.0
      %5030 = vmatprep.subr.mxu0 0.0
      %5031 = vmatpush1.msra.mxu0 0.0
      %5032 = vmatprep.subr.mxu0 0.0
      %5033 = vmatpush1.msra.mxu0 0.0
      %5034 = vmatprep.subr.mxu0 0.0
      %5035 = vmatpush1.msra.mxu0 0.0
      %5036 = vmatprep.subr.mxu0 0.0
      %5037 = vmatpush1.msra.mxu0 0.0
      %5038 = vmatprep.subr.mxu0 0.0
      %5039 = vmatpush1.msra.mxu0 0.0
      %5040 = vmatprep.subr.mxu0 0.0
      %5041 = vmatpush1.msra.mxu0 0.0
      %5042 = vmatprep.subr.mxu0 0.0
      %5043 = vmatpush1.msra.mxu0 0.0
      %5044 = vmatprep.subr.mxu0 0.0
      %5045 = vmatpush1.msra.mxu0 0.0
      %5046 = vmatprep.mubr.f32.mxu0 0.0
      %5047 = vmatmul.mubr.f32.gmra.mrb[0].mxu0 %v4935
      %v5048 = vpop.f32.mrb[0].mxu0
      %v5049 = vadd.f32 0.0, %v5048
      %v5050 = vpop.f32.mrb[0].mxu0
      %5051 = vmatprep.mubr.f32.mxu0 0.0
      %5052 = vmatmul.mubr.f32.gmra.mrb[0].mxu0 %v4938
      %v5053 = vpop.f32.mrb[0].mxu0
      %v5054 = vadd.f32 0.0, %v5053
      %v5055 = vpop.f32.mrb[0].mxu0
      %5056 = vmatprep.mubr.f32.mxu0 0.0
      %5057 = vmatmul.mubr.f32.gmra.mrb[0].mxu0 %v4941
      %v5058 = vpop.f32.mrb[0].mxu0
      %v5059 = vadd.f32 0.0, %v5058
      %v5060 = vpop.f32.mrb[0].mxu0
      %5061 = vmatprep.mubr.f32.mxu0 0.0
      %5062 = vmatmul.mubr.f32.gmra.mrb[0].mxu0 %v4944
      %v5063 = vpop.f32.mrb[0].mxu0
      %v5064 = vadd.f32 0.0, %v5063
      %v5065 = vpop.f32.mrb[0].mxu0
      %5066 = vmatprep.mubr.f32.mxu0 0.0
      %5067 = vmatmul.mubr.f32.gmra.mrb[0].mxu0 %v4947
      %v5068 = vpop.f32.mrb[0].mxu0
      %v5069 = vadd.f32 0.0, %v5068
      %v5070 = vpop.f32.mrb[0].mxu0
      %5071 = vmatprep.mubr.f32.mxu0 0.0
      %5072 = vmatmul.mubr.f32.gmra.mrb[0].mxu0 %v4950
      %v5073 = vpop.f32.mrb[0].mxu0
      %v5074 = vadd.f32 0.0, %v5073
      %v5075 = vpop.f32.mrb[0].mxu0
      %5076 = vmatprep.mubr.f32.mxu0 0.0
      %5077 = vmatmul.mubr.f32.gmra.mrb[0].mxu0 %v4953
      %v5078 = vpop.f32.mrb[0].mxu0
      %v5079 = vadd.f32 0.0, %v5078
      %v5080 = vpop.f32.mrb[0].mxu0
      %5081 = vmatprep.mubr.f32.mxu0 0.0
      %5082 = vmatmul.mubr.f32.gmra.mrb[0].mxu0 %v4956
      %v5083 = vpop.f32.mrb[0].mxu0
      %v5084 = vadd.f32 0.0, %v5083
      %v5085 = vpop.f32.mrb[0].mxu0
      %5086 = vmatprep.mubr.f32.mxu0 0.0
      %5087 = vmatmul.mubr.f32.gmra.mrb[0].mxu0 %v4959
      %v5088 = vpop.f32.mrb[0].mxu0
      %v5089 = vadd.f32 0.0, %v5088
      %v5090 = vpop.f32.mrb[0].mxu0
      %5091 = vmatprep.mubr.f32.mxu0 0.0
      %5092 = vmatmul.mubr.f32.gmra.mrb[0].mxu0 %v4962
      %v5093 = vpop.f32.mrb[0].mxu0
      %v5094 = vadd.f32 0.0, %v5093
      %v5095 = vpop.f32.mrb[0].mxu0
      %5096 = vmatprep.mubr.f32.mxu0 0.0
      %5097 = vmatmul.mubr.f32.gmra.mrb[0].mxu0 %v4965
      %v5098 = vpop.f32.mrb[0].mxu0
      %v5099 = vadd.f32 0.0, %v5098
      %v5100 = vpop.f32.mrb[0].mxu0
      %5101 = vmatprep.mubr.f32.mxu0 0.0
      %5102 = vmatmul.mubr.f32.gmra.mrb[0].mxu0 %v4968
      %v5103 = vpop.f32.mrb[0].mxu0
      %v5104 = vadd.f32 0.0, %v5103
      %v5105 = vpop.f32.mrb[0].mxu0
      %5106 = vmatprep.mubr.f32.mxu0 0.0
      %5107 = vmatmul.mubr.f32.gmra.mrb[0].mxu0 %v4971
      %v5108 = vpop.f32.mrb[0].mxu0
      %v5109 = vadd.f32 0.0, %v5108
      %v5110 = vpop.f32.mrb[0].mxu0
      %5111 = vmatprep.mubr.f32.mxu0 0.0
      %5112 = vmatmul.mubr.f32.gmra.mrb[0].mxu0 %v4974
      %v5113 = vpop.f32.mrb[0].mxu0
      %v5114 = vadd.f32 0.0, %v5113
      %v5115 = vpop.f32.mrb[0].mxu0
      %5116 = vmatprep.mubr.f32.mxu0 0.0
      %5117 = vmatmul.mubr.f32.gmra.mrb[0].mxu0 %v4977
      %v5118 = vpop.f32.mrb[0].mxu0
      %v5119 = vadd.f32 0.0, %v5118
      %v5120 = vpop.f32.mrb[0].mxu0
      %5121 = vmatprep.mubr.f32.mxu0 0.0
      %5122 = vmatmul.mubr.f32.gmra.mrb[0].mxu0 %v4980
      %v5123 = vpop.f32.mrb[0].mxu0
      %v5124 = vadd.f32 0.0, %v5123
      %v5125 = vpop.f32.mrb[0].mxu0
      %5126 = vdwg.mxu0
      %v5128 = vsel %vm810, %v4702, 0
      %v5131 = vsel %vm810, %v4703, 0
      %v5134 = vsel %vm810, %v4704, 0
      %v5137 = vsel %vm810, %v4705, 0
      %v5140 = vsel %vm810, %v4706, 0
      %v5143 = vsel %vm810, %v4707, 0
      %v5146 = vsel %vm810, %v4708, 0
      %v5149 = vsel %vm810, %v4709, 0
      %v5152 = vsel %vm810, %v4710, 0
      %v5155 = vsel %vm810, %v4711, 0
      %v5158 = vsel %vm810, %v4712, 0
      %v5161 = vsel %vm810, %v4713, 0
      %v5164 = vsel %vm810, %v4714, 0
      %v5167 = vsel %vm810, %v4715, 0
      %v5170 = vsel %vm810, %v4716, 0
      %v5173 = vsel %vm810, %v4717, 0
      %5175 = vmatprep.subr.mxu0 0.0
      %5176 = vmatpush1.msra.mxu0 %v4486
      %5177 = vmatprep.subr.mxu0 0.0
      %5178 = vmatpush1.msra.mxu0 %v4487
      %5179 = vmatprep.subr.mxu0 0.0
      %5180 = vmatpush1.msra.mxu0 %v4488
      %5181 = vmatprep.subr.mxu0 0.0
      %5182 = vmatpush1.msra.mxu0 %v4489
      %5183 = vmatprep.subr.mxu0 0.0
      %5184 = vmatpush1.msra.mxu0 %v4490
      %5185 = vmatprep.subr.mxu0 0.0
      %5186 = vmatpush1.msra.mxu0 %v4491
      %5187 = vmatprep.subr.mxu0 0.0
      %5188 = vmatpush1.msra.mxu0 0.0
      %5189 = vmatprep.subr.mxu0 0.0
      %5190 = vmatpush1.msra.mxu0 0.0
      %5191 = vmatprep.subr.mxu0 0.0
      %5192 = vmatpush1.msra.mxu0 0.0
      %5193 = vmatprep.subr.mxu0 0.0
      %5194 = vmatpush1.msra.mxu0 0.0
      %5195 = vmatprep.subr.mxu0 0.0
      %5196 = vmatpush1.msra.mxu0 0.0
      %5197 = vmatprep.subr.mxu0 0.0
      %5198 = vmatpush1.msra.mxu0 0.0
      %5199 = vmatprep.subr.mxu0 0.0
      %5200 = vmatpush1.msra.mxu0 0.0
      %5201 = vmatprep.subr.mxu0 0.0
      %5202 = vmatpush1.msra.mxu0 0.0
      %5203 = vmatprep.subr.mxu0 0.0
      %5204 = vmatpush1.msra.mxu0 0.0
      %5205 = vmatprep.subr.mxu0 0.0
      %5206 = vmatpush1.msra.mxu0 0.0
      %5207 = vmatprep.subr.mxu0 0.0
      %5208 = vmatpush1.msra.mxu0 0.0
      %5209 = vmatprep.subr.mxu0 0.0
      %5210 = vmatpush1.msra.mxu0 0.0
      %5211 = vmatprep.subr.mxu0 0.0
      %5212 = vmatpush1.msra.mxu0 0.0
      %5213 = vmatprep.subr.mxu0 0.0
      %5214 = vmatpush1.msra.mxu0 0.0
      %5215 = vmatprep.subr.mxu0 0.0
      %5216 = vmatpush1.msra.mxu0 0.0
      %5217 = vmatprep.subr.mxu0 0.0
      %5218 = vmatpush1.msra.mxu0 0.0
      %5219 = vmatprep.subr.mxu0 0.0
      %5220 = vmatpush1.msra.mxu0 0.0
      %5221 = vmatprep.subr.mxu0 0.0
      %5222 = vmatpush1.msra.mxu0 0.0
      %5223 = vmatprep.subr.mxu0 0.0
      %5224 = vmatpush1.msra.mxu0 0.0
      %5225 = vmatprep.subr.mxu0 0.0
      %5226 = vmatpush1.msra.mxu0 0.0
      %5227 = vmatprep.subr.mxu0 0.0
      %5228 = vmatpush1.msra.mxu0 0.0
      %5229 = vmatprep.subr.mxu0 0.0
      %5230 = vmatpush1.msra.mxu0 0.0
      %5231 = vmatprep.subr.mxu0 0.0
      %5232 = vmatpush1.msra.mxu0 0.0
      %5233 = vmatprep.subr.mxu0 0.0
      %5234 = vmatpush1.msra.mxu0 0.0
      %5235 = vmatprep.subr.mxu0 0.0
      %5236 = vmatpush1.msra.mxu0 0.0
      %5237 = vmatprep.subr.mxu0 0.0
      %5238 = vmatpush1.msra.mxu0 0.0
      %5239 = vmatprep.mubr.f32.mxu0 0.0
      %5240 = vmatmul.mubr.f32.gmra.mrb[0].mxu0 %v5128
      %v5241 = vpop.f32.mrb[0].mxu0
      %v5242 = vadd.f32 %v5049, %v5241
      %v5243 = vpop.f32.mrb[0].mxu0
      %5244 = vmatprep.mubr.f32.mxu0 0.0
      %5245 = vmatmul.mubr.f32.gmra.mrb[0].mxu0 %v5131
      %v5246 = vpop.f32.mrb[0].mxu0
      %v5247 = vadd.f32 %v5054, %v5246
      %v5248 = vpop.f32.mrb[0].mxu0
      %5249 = vmatprep.mubr.f32.mxu0 0.0
      %5250 = vmatmul.mubr.f32.gmra.mrb[0].mxu0 %v5134
      %v5251 = vpop.f32.mrb[0].mxu0
      %v5252 = vadd.f32 %v5059, %v5251
      %v5253 = vpop.f32.mrb[0].mxu0
      %5254 = vmatprep.mubr.f32.mxu0 0.0
      %5255 = vmatmul.mubr.f32.gmra.mrb[0].mxu0 %v5137
      %v5256 = vpop.f32.mrb[0].mxu0
      %v5257 = vadd.f32 %v5064, %v5256
      %v5258 = vpop.f32.mrb[0].mxu0
      %5259 = vmatprep.mubr.f32.mxu0 0.0
      %5260 = vmatmul.mubr.f32.gmra.mrb[0].mxu0 %v5140
      %v5261 = vpop.f32.mrb[0].mxu0
      %v5262 = vadd.f32 %v5069, %v5261
      %v5263 = vpop.f32.mrb[0].mxu0
      %5264 = vmatprep.mubr.f32.mxu0 0.0
      %5265 = vmatmul.mubr.f32.gmra.mrb[0].mxu0 %v5143
      %v5266 = vpop.f32.mrb[0].mxu0
      %v5267 = vadd.f32 %v5074, %v5266
      %v5268 = vpop.f32.mrb[0].mxu0
      %5269 = vmatprep.mubr.f32.mxu0 0.0
      %5270 = vmatmul.mubr.f32.gmra.mrb[0].mxu0 %v5146
      %v5271 = vpop.f32.mrb[0].mxu0
      %v5272 = vadd.f32 %v5079, %v5271
      %v5273 = vpop.f32.mrb[0].mxu0
      %5274 = vmatprep.mubr.f32.mxu0 0.0
      %5275 = vmatmul.mubr.f32.gmra.mrb[0].mxu0 %v5149
      %v5276 = vpop.f32.mrb[0].mxu0
      %v5277 = vadd.f32 %v5084, %v5276
      %v5278 = vpop.f32.mrb[0].mxu0
      %5279 = vmatprep.mubr.f32.mxu0 0.0
      %5280 = vmatmul.mubr.f32.gmra.mrb[0].mxu0 %v5152
      %v5281 = vpop.f32.mrb[0].mxu0
      %v5282 = vadd.f32 %v5089, %v5281
      %v5283 = vpop.f32.mrb[0].mxu0
      %5284 = vmatprep.mubr.f32.mxu0 0.0
      %5285 = vmatmul.mubr.f32.gmra.mrb[0].mxu0 %v5155
      %v5286 = vpop.f32.mrb[0].mxu0
      %v5287 = vadd.f32 %v5094, %v5286
      %v5288 = vpop.f32.mrb[0].mxu0
      %5289 = vmatprep.mubr.f32.mxu0 0.0
      %5290 = vmatmul.mubr.f32.gmra.mrb[0].mxu0 %v5158
      %v5291 = vpop.f32.mrb[0].mxu0
      %v5292 = vadd.f32 %v5099, %v5291
      %v5293 = vpop.f32.mrb[0].mxu0
      %5294 = vmatprep.mubr.f32.mxu0 0.0
      %5295 = vmatmul.mubr.f32.gmra.mrb[0].mxu0 %v5161
      %v5296 = vpop.f32.mrb[0].mxu0
      %v5297 = vadd.f32 %v5104, %v5296
      %v5298 = vpop.f32.mrb[0].mxu0
      %5299 = vmatprep.mubr.f32.mxu0 0.0
      %5300 = vmatmul.mubr.f32.gmra.mrb[0].mxu0 %v5164
      %v5301 = vpop.f32.mrb[0].mxu0
      %v5302 = vadd.f32 %v5109, %v5301
      %v5303 = vpop.f32.mrb[0].mxu0
      %5304 = vmatprep.mubr.f32.mxu0 0.0
      %5305 = vmatmul.mubr.f32.gmra.mrb[0].mxu0 %v5167
      %v5306 = vpop.f32.mrb[0].mxu0
      %v5307 = vadd.f32 %v5114, %v5306
      %v5308 = vpop.f32.mrb[0].mxu0
      %5309 = vmatprep.mubr.f32.mxu0 0.0
      %5310 = vmatmul.mubr.f32.gmra.mrb[0].mxu0 %v5170
      %v5311 = vpop.f32.mrb[0].mxu0
      %v5312 = vadd.f32 %v5119, %v5311
      %v5313 = vpop.f32.mrb[0].mxu0
      %5314 = vmatprep.mubr.f32.mxu0 0.0
      %5315 = vmatmul.mubr.f32.gmra.mrb[0].mxu0 %v5173
      %v5316 = vpop.f32.mrb[0].mxu0
      %v5317 = vadd.f32 %v5124, %v5316
      %v5318 = vpop.f32.mrb[0].mxu0
      %5319 = vdwg.mxu0
      %v5320 = vld [vmem:[%s1 + $0xb00] sm:$0x1]
      %v5321 = vlaneseq
      %v5322 = vshrl.u32 %v5321, 7
      %v5323 = vsub.s32 0, %v5322
      %v5324 = vrot.slane %v5320, %v5323
      %v5325 = vadd.f32 %v5242, %v5324
      %v5326 = vadd.f32 %v5247, %v5324
      %v5327 = vadd.f32 %v5252, %v5324
      %v5328 = vadd.f32 %v5257, %v5324
      %v5329 = vadd.f32 %v5262, %v5324
      %v5330 = vadd.f32 %v5267, %v5324
      %v5331 = vadd.f32 %v5272, %v5324
      %v5332 = vadd.f32 %v5277, %v5324
      %v5333 = vadd.f32 %v5282, %v5324
      %v5334 = vadd.f32 %v5287, %v5324
      %v5335 = vadd.f32 %v5292, %v5324
      %v5336 = vadd.f32 %v5297, %v5324
      %v5337 = vadd.f32 %v5302, %v5324
      %v5338 = vadd.f32 %v5307, %v5324
      %v5339 = vadd.f32 %v5312, %v5324
      %v5340 = vadd.f32 %v5317, %v5324
      %v5341 = vmax.f32 %v5325, 0.0
      %v5342 = vmax.f32 %v5326, 0.0
      %v5343 = vmax.f32 %v5327, 0.0
      %v5344 = vmax.f32 %v5328, 0.0
      %v5345 = vmax.f32 %v5329, 0.0
      %v5346 = vmax.f32 %v5330, 0.0
      %v5347 = vmax.f32 %v5331, 0.0
      %v5348 = vmax.f32 %v5332, 0.0
      %v5349 = vmax.f32 %v5333, 0.0
      %v5350 = vmax.f32 %v5334, 0.0
      %v5351 = vmax.f32 %v5335, 0.0
      %v5352 = vmax.f32 %v5336, 0.0
      %v5353 = vmax.f32 %v5337, 0.0
      %v5354 = vmax.f32 %v5338, 0.0
      %v5355 = vmax.f32 %v5339, 0.0
      %v5356 = vmax.f32 %v5340, 0.0
      %v5357 = vld [vmem:[%s1 + $0xb08] sm:$0xff]
      %v5358 = vld [vmem:[%s1 + $0xb10] sm:$0xff]
      %v5359 = vld [vmem:[%s1 + $0xb18] sm:$0xff]
      %v5360 = vld [vmem:[%s1 + $0xb20] sm:$0xff]
      %v5361 = vld [vmem:[%s1 + $0xb28] sm:$0xff]
      %v5362 = vld [vmem:[%s1 + $0xb30] sm:$0xff]
      %v5379 = vrot.slane %v5341, 7
      %v5380 = vrot.slane %v5342, 7
      %v5381 = vsel %vm180, %v5379, %v5380
      %v5382 = vrot.slane %v5343, 7
      %v5383 = vsel %vm180, %v5380, %v5382
      %v5384 = vrot.slane %v5344, 7
      %v5385 = vsel %vm180, %v5382, %v5384
      %v5386 = vrot.slane %v5345, 7
      %v5387 = vsel %vm180, %v5384, %v5386
      %v5388 = vrot.slane %v5346, 7
      %v5389 = vsel %vm180, %v5386, %v5388
      %v5390 = vrot.slane %v5347, 7
      %v5391 = vsel %vm180, %v5388, %v5390
      %v5392 = vrot.slane %v5348, 7
      %v5393 = vsel %vm180, %v5390, %v5392
      %v5394 = vrot.slane %v5349, 7
      %v5395 = vsel %vm180, %v5392, %v5394
      %v5396 = vrot.slane %v5350, 7
      %v5397 = vsel %vm180, %v5394, %v5396
      %v5398 = vrot.slane %v5351, 7
      %v5399 = vsel %vm180, %v5396, %v5398
      %v5400 = vrot.slane %v5352, 7
      %v5401 = vsel %vm180, %v5398, %v5400
      %v5402 = vrot.slane %v5353, 7
      %v5403 = vsel %vm180, %v5400, %v5402
      %v5404 = vrot.slane %v5354, 7
      %v5405 = vsel %vm180, %v5402, %v5404
      %v5406 = vrot.slane %v5355, 7
      %v5407 = vsel %vm180, %v5404, %v5406
      %v5408 = vrot.slane %v5356, 7
      %v5409 = vsel %vm180, %v5406, %v5408
      %v5426 = vsel %vm180, 0.0, %v5379
      %v5427 = vrot.slane %v5341, 1
      %v5428 = vrot.slane %v5342, 1
      %v5429 = vsel %vm399, %v5427, %v5428
      %v5430 = vrot.slane %v5343, 1
      %v5431 = vsel %vm399, %v5428, %v5430
      %v5432 = vrot.slane %v5344, 1
      %v5433 = vsel %vm399, %v5430, %v5432
      %v5434 = vrot.slane %v5345, 1
      %v5435 = vsel %vm399, %v5432, %v5434
      %v5436 = vrot.slane %v5346, 1
      %v5437 = vsel %vm399, %v5434, %v5436
      %v5438 = vrot.slane %v5347, 1
      %v5439 = vsel %vm399, %v5436, %v5438
      %v5440 = vrot.slane %v5348, 1
      %v5441 = vsel %vm399, %v5438, %v5440
      %v5442 = vrot.slane %v5349, 1
      %v5443 = vsel %vm399, %v5440, %v5442
      %v5444 = vrot.slane %v5350, 1
      %v5445 = vsel %vm399, %v5442, %v5444
      %v5446 = vrot.slane %v5351, 1
      %v5447 = vsel %vm399, %v5444, %v5446
      %v5448 = vrot.slane %v5352, 1
      %v5449 = vsel %vm399, %v5446, %v5448
      %v5450 = vrot.slane %v5353, 1
      %v5451 = vsel %vm399, %v5448, %v5450
      %v5452 = vrot.slane %v5354, 1
      %v5453 = vsel %vm399, %v5450, %v5452
      %v5454 = vrot.slane %v5355, 1
      %v5455 = vsel %vm399, %v5452, %v5454
      %v5456 = vrot.slane %v5356, 1
      %v5457 = vsel %vm399, %v5454, %v5456
      %v5459 = vsel %vm399, %v5456, 0.0
      %5460 = vrot.lane.b32.xlu0 %v5341, 16
      %v5461 = vpop.permute.xlu0 %5460
      %5462 = vrot.lane.b32.xlu0 %v5342, 16
      %v5463 = vpop.permute.xlu0 %5462
      %5464 = vrot.lane.b32.xlu0 %v5343, 16
      %v5465 = vpop.permute.xlu0 %5464
      %5466 = vrot.lane.b32.xlu0 %v5344, 16
      %v5467 = vpop.permute.xlu0 %5466
      %5468 = vrot.lane.b32.xlu0 %v5345, 16
      %v5469 = vpop.permute.xlu0 %5468
      %5470 = vrot.lane.b32.xlu0 %v5346, 16
      %v5471 = vpop.permute.xlu0 %5470
      %5472 = vrot.lane.b32.xlu0 %v5347, 16
      %v5473 = vpop.permute.xlu0 %5472
      %5474 = vrot.lane.b32.xlu0 %v5348, 16
      %v5475 = vpop.permute.xlu0 %5474
      %5476 = vrot.lane.b32.xlu0 %v5349, 16
      %v5477 = vpop.permute.xlu0 %5476
      %5478 = vrot.lane.b32.xlu0 %v5350, 16
      %v5479 = vpop.permute.xlu0 %5478
      %5480 = vrot.lane.b32.xlu0 %v5351, 16
      %v5481 = vpop.permute.xlu0 %5480
      %5482 = vrot.lane.b32.xlu0 %v5352, 16
      %v5483 = vpop.permute.xlu0 %5482
      %5484 = vrot.lane.b32.xlu0 %v5353, 16
      %v5485 = vpop.permute.xlu0 %5484
      %5486 = vrot.lane.b32.xlu0 %v5354, 16
      %v5487 = vpop.permute.xlu0 %5486
      %5488 = vrot.lane.b32.xlu0 %v5355, 16
      %v5489 = vpop.permute.xlu0 %5488
      %5490 = vrot.lane.b32.xlu0 %v5356, 16
      %v5491 = vpop.permute.xlu0 %5490
      %5509 = vrot.lane.b32.xlu0 %v5429, 32
      %v5510 = vpop.permute.xlu0 %5509
      %5511 = vrot.lane.b32.xlu0 %v5431, 32
      %v5512 = vpop.permute.xlu0 %5511
      %5513 = vrot.lane.b32.xlu0 %v5433, 32
      %v5514 = vpop.permute.xlu0 %5513
      %5515 = vrot.lane.b32.xlu0 %v5435, 32
      %v5516 = vpop.permute.xlu0 %5515
      %5517 = vrot.lane.b32.xlu0 %v5437, 32
      %v5518 = vpop.permute.xlu0 %5517
      %5519 = vrot.lane.b32.xlu0 %v5439, 32
      %v5520 = vpop.permute.xlu0 %5519
      %5521 = vrot.lane.b32.xlu0 %v5441, 32
      %v5522 = vpop.permute.xlu0 %5521
      %5523 = vrot.lane.b32.xlu0 %v5443, 32
      %v5524 = vpop.permute.xlu0 %5523
      %5525 = vrot.lane.b32.xlu0 %v5445, 32
      %v5526 = vpop.permute.xlu0 %5525
      %5527 = vrot.lane.b32.xlu0 %v5447, 32
      %v5528 = vpop.permute.xlu0 %5527
      %5529 = vrot.lane.b32.xlu0 %v5449, 32
      %v5530 = vpop.permute.xlu0 %5529
      %5531 = vrot.lane.b32.xlu0 %v5451, 32
      %v5532 = vpop.permute.xlu0 %5531
      %5533 = vrot.lane.b32.xlu0 %v5453, 32
      %v5534 = vpop.permute.xlu0 %5533
      %5535 = vrot.lane.b32.xlu0 %v5455, 32
      %v5536 = vpop.permute.xlu0 %5535
      %5537 = vrot.lane.b32.xlu0 %v5457, 32
      %v5538 = vpop.permute.xlu0 %5537
      %5539 = vrot.lane.b32.xlu0 %v5459, 32
      %v5540 = vpop.permute.xlu0 %5539
      %v5557 = vsel %vm771, %v5426, %v5461
      %v5558 = vsel %vm771, %v5381, %v5463
      %v5559 = vsel %vm771, %v5383, %v5465
      %v5560 = vsel %vm771, %v5385, %v5467
      %v5561 = vsel %vm771, %v5387, %v5469
      %v5562 = vsel %vm771, %v5389, %v5471
      %v5563 = vsel %vm771, %v5391, %v5473
      %v5564 = vsel %vm771, %v5393, %v5475
      %v5565 = vsel %vm771, %v5395, %v5477
      %v5566 = vsel %vm771, %v5397, %v5479
      %v5567 = vsel %vm771, %v5399, %v5481
      %v5568 = vsel %vm771, %v5401, %v5483
      %v5569 = vsel %vm771, %v5403, %v5485
      %v5570 = vsel %vm771, %v5405, %v5487
      %v5571 = vsel %vm771, %v5407, %v5489
      %v5572 = vsel %vm771, %v5409, %v5491
      %v5573 = vsel %vm788, %v5557, %v5510
      %v5574 = vsel %vm788, %v5558, %v5512
      %v5575 = vsel %vm788, %v5559, %v5514
      %v5576 = vsel %vm788, %v5560, %v5516
      %v5577 = vsel %vm788, %v5561, %v5518
      %v5578 = vsel %vm788, %v5562, %v5520
      %v5579 = vsel %vm788, %v5563, %v5522
      %v5580 = vsel %vm788, %v5564, %v5524
      %v5581 = vsel %vm788, %v5565, %v5526
      %v5582 = vsel %vm788, %v5566, %v5528
      %v5583 = vsel %vm788, %v5567, %v5530
      %v5584 = vsel %vm788, %v5568, %v5532
      %v5585 = vsel %vm788, %v5569, %v5534
      %v5586 = vsel %vm788, %v5570, %v5536
      %v5587 = vsel %vm788, %v5571, %v5538
      %v5588 = vsel %vm788, %v5572, %v5540
      %v5589 = vld [vmem:[%s1 + $0xb38] sm:$0x1]
      %v5590 = vlaneseq
      %v5591 = vshrl.u32 %v5590, 7
      %v5592 = vsub.s32 0, %v5591
      %v5593 = vrot.slane %v5589, %v5592
      %v5595 = vsel %vm810, %v5573, 0
      %v5598 = vsel %vm810, %v5574, 0
      %v5601 = vsel %vm810, %v5575, 0
      %v5604 = vsel %vm810, %v5576, 0
      %v5607 = vsel %vm810, %v5577, 0
      %v5610 = vsel %vm810, %v5578, 0
      %v5613 = vsel %vm810, %v5579, 0
      %v5616 = vsel %vm810, %v5580, 0
      %v5619 = vsel %vm810, %v5581, 0
      %v5622 = vsel %vm810, %v5582, 0
      %v5625 = vsel %vm810, %v5583, 0
      %v5628 = vsel %vm810, %v5584, 0
      %v5631 = vsel %vm810, %v5585, 0
      %v5634 = vsel %vm810, %v5586, 0
      %v5637 = vsel %vm810, %v5587, 0
      %v5640 = vsel %vm810, %v5588, 0
      %5642 = vmatprep.subr.mxu0 0.0
      %5643 = vmatpush1.msra.mxu0 %v5357
      %5644 = vmatprep.subr.mxu0 0.0
      %5645 = vmatpush1.msra.mxu0 %v5358
      %5646 = vmatprep.subr.mxu0 0.0
      %5647 = vmatpush1.msra.mxu0 %v5359
      %5648 = vmatprep.subr.mxu0 0.0
      %5649 = vmatpush1.msra.mxu0 %v5360
      %5650 = vmatprep.subr.mxu0 0.0
      %5651 = vmatpush1.msra.mxu0 %v5361
      %5652 = vmatprep.subr.mxu0 0.0
      %5653 = vmatpush1.msra.mxu0 %v5362
      %5654 = vmatprep.subr.mxu0 0.0
      %5655 = vmatpush1.msra.mxu0 0.0
      %5656 = vmatprep.subr.mxu0 0.0
      %5657 = vmatpush1.msra.mxu0 0.0
      %5658 = vmatprep.subr.mxu0 0.0
      %5659 = vmatpush1.msra.mxu0 0.0
      %5660 = vmatprep.subr.mxu0 0.0
      %5661 = vmatpush1.msra.mxu0 0.0
      %5662 = vmatprep.subr.mxu0 0.0
      %5663 = vmatpush1.msra.mxu0 0.0
      %5664 = vmatprep.subr.mxu0 0.0
      %5665 = vmatpush1.msra.mxu0 0.0
      %5666 = vmatprep.subr.mxu0 0.0
      %5667 = vmatpush1.msra.mxu0 0.0
      %5668 = vmatprep.subr.mxu0 0.0
      %5669 = vmatpush1.msra.mxu0 0.0
      %5670 = vmatprep.subr.mxu0 0.0
      %5671 = vmatpush1.msra.mxu0 0.0
      %5672 = vmatprep.subr.mxu0 0.0
      %5673 = vmatpush1.msra.mxu0 0.0
      %5674 = vmatprep.subr.mxu0 0.0
      %5675 = vmatpush1.msra.mxu0 0.0
      %5676 = vmatprep.subr.mxu0 0.0
      %5677 = vmatpush1.msra.mxu0 0.0
      %5678 = vmatprep.subr.mxu0 0.0
      %5679 = vmatpush1.msra.mxu0 0.0
      %5680 = vmatprep.subr.mxu0 0.0
      %5681 = vmatpush1.msra.mxu0 0.0
      %5682 = vmatprep.subr.mxu0 0.0
      %5683 = vmatpush1.msra.mxu0 0.0
      %5684 = vmatprep.subr.mxu0 0.0
      %5685 = vmatpush1.msra.mxu0 0.0
      %5686 = vmatprep.subr.mxu0 0.0
      %5687 = vmatpush1.msra.mxu0 0.0
      %5688 = vmatprep.subr.mxu0 0.0
      %5689 = vmatpush1.msra.mxu0 0.0
      %5690 = vmatprep.subr.mxu0 0.0
      %5691 = vmatpush1.msra.mxu0 0.0
      %5692 = vmatprep.subr.mxu0 0.0
      %5693 = vmatpush1.msra.mxu0 0.0
      %5694 = vmatprep.subr.mxu0 0.0
      %5695 = vmatpush1.msra.mxu0 0.0
      %5696 = vmatprep.subr.mxu0 0.0
      %5697 = vmatpush1.msra.mxu0 0.0
      %5698 = vmatprep.subr.mxu0 0.0
      %5699 = vmatpush1.msra.mxu0 0.0
      %5700 = vmatprep.subr.mxu0 0.0
      %5701 = vmatpush1.msra.mxu0 0.0
      %5702 = vmatprep.subr.mxu0 0.0
      %5703 = vmatpush1.msra.mxu0 0.0
      %5704 = vmatprep.subr.mxu0 0.0
      %5705 = vmatpush1.msra.mxu0 0.0
      %5706 = vmatprep.mubr.f32.mxu0 0.0
      %5707 = vmatmul.mubr.f32.gmra.mrb[0].mxu0 %v5595
      %v5708 = vpop.f32.mrb[0].mxu0
      %v5709 = vadd.f32 %v5593, %v5708
      %v5710 = vpop.f32.mrb[0].mxu0
      %5711 = vmatprep.mubr.f32.mxu0 0.0
      %5712 = vmatmul.mubr.f32.gmra.mrb[0].mxu0 %v5598
      %v5713 = vpop.f32.mrb[0].mxu0
      %v5714 = vadd.f32 %v5593, %v5713
      %v5715 = vpop.f32.mrb[0].mxu0
      %5716 = vmatprep.mubr.f32.mxu0 0.0
      %5717 = vmatmul.mubr.f32.gmra.mrb[0].mxu0 %v5601
      %v5718 = vpop.f32.mrb[0].mxu0
      %v5719 = vadd.f32 %v5593, %v5718
      %v5720 = vpop.f32.mrb[0].mxu0
      %5721 = vmatprep.mubr.f32.mxu0 0.0
      %5722 = vmatmul.mubr.f32.gmra.mrb[0].mxu0 %v5604
      %v5723 = vpop.f32.mrb[0].mxu0
      %v5724 = vadd.f32 %v5593, %v5723
      %v5725 = vpop.f32.mrb[0].mxu0
      %5726 = vmatprep.mubr.f32.mxu0 0.0
      %5727 = vmatmul.mubr.f32.gmra.mrb[0].mxu0 %v5607
      %v5728 = vpop.f32.mrb[0].mxu0
      %v5729 = vadd.f32 %v5593, %v5728
      %v5730 = vpop.f32.mrb[0].mxu0
      %5731 = vmatprep.mubr.f32.mxu0 0.0
      %5732 = vmatmul.mubr.f32.gmra.mrb[0].mxu0 %v5610
      %v5733 = vpop.f32.mrb[0].mxu0
      %v5734 = vadd.f32 %v5593, %v5733
      %v5735 = vpop.f32.mrb[0].mxu0
      %5736 = vmatprep.mubr.f32.mxu0 0.0
      %5737 = vmatmul.mubr.f32.gmra.mrb[0].mxu0 %v5613
      %v5738 = vpop.f32.mrb[0].mxu0
      %v5739 = vadd.f32 %v5593, %v5738
      %v5740 = vpop.f32.mrb[0].mxu0
      %5741 = vmatprep.mubr.f32.mxu0 0.0
      %5742 = vmatmul.mubr.f32.gmra.mrb[0].mxu0 %v5616
      %v5743 = vpop.f32.mrb[0].mxu0
      %v5744 = vadd.f32 %v5593, %v5743
      %v5745 = vpop.f32.mrb[0].mxu0
      %5746 = vmatprep.mubr.f32.mxu0 0.0
      %5747 = vmatmul.mubr.f32.gmra.mrb[0].mxu0 %v5619
      %v5748 = vpop.f32.mrb[0].mxu0
      %v5749 = vadd.f32 %v5593, %v5748
      %v5750 = vpop.f32.mrb[0].mxu0
      %5751 = vmatprep.mubr.f32.mxu0 0.0
      %5752 = vmatmul.mubr.f32.gmra.mrb[0].mxu0 %v5622
      %v5753 = vpop.f32.mrb[0].mxu0
      %v5754 = vadd.f32 %v5593, %v5753
      %v5755 = vpop.f32.mrb[0].mxu0
      %5756 = vmatprep.mubr.f32.mxu0 0.0
      %5757 = vmatmul.mubr.f32.gmra.mrb[0].mxu0 %v5625
      %v5758 = vpop.f32.mrb[0].mxu0
      %v5759 = vadd.f32 %v5593, %v5758
      %v5760 = vpop.f32.mrb[0].mxu0
      %5761 = vmatprep.mubr.f32.mxu0 0.0
      %5762 = vmatmul.mubr.f32.gmra.mrb[0].mxu0 %v5628
      %v5763 = vpop.f32.mrb[0].mxu0
      %v5764 = vadd.f32 %v5593, %v5763
      %v5765 = vpop.f32.mrb[0].mxu0
      %5766 = vmatprep.mubr.f32.mxu0 0.0
      %5767 = vmatmul.mubr.f32.gmra.mrb[0].mxu0 %v5631
      %v5768 = vpop.f32.mrb[0].mxu0
      %v5769 = vadd.f32 %v5593, %v5768
      %v5770 = vpop.f32.mrb[0].mxu0
      %5771 = vmatprep.mubr.f32.mxu0 0.0
      %5772 = vmatmul.mubr.f32.gmra.mrb[0].mxu0 %v5634
      %v5773 = vpop.f32.mrb[0].mxu0
      %v5774 = vadd.f32 %v5593, %v5773
      %v5775 = vpop.f32.mrb[0].mxu0
      %5776 = vmatprep.mubr.f32.mxu0 0.0
      %5777 = vmatmul.mubr.f32.gmra.mrb[0].mxu0 %v5637
      %v5778 = vpop.f32.mrb[0].mxu0
      %v5779 = vadd.f32 %v5593, %v5778
      %v5780 = vpop.f32.mrb[0].mxu0
      %5781 = vmatprep.mubr.f32.mxu0 0.0
      %5782 = vmatmul.mubr.f32.gmra.mrb[0].mxu0 %v5640
      %v5783 = vpop.f32.mrb[0].mxu0
      %v5784 = vadd.f32 %v5593, %v5783
      %v5785 = vpop.f32.mrb[0].mxu0
      %5786 = vdwg.mxu0
      %v5787 = vmax.f32 %v5709, 0.0
      %v5788 = vmax.f32 %v5714, 0.0
      %v5789 = vmax.f32 %v5719, 0.0
      %v5790 = vmax.f32 %v5724, 0.0
      %v5791 = vmax.f32 %v5729, 0.0
      %v5792 = vmax.f32 %v5734, 0.0
      %v5793 = vmax.f32 %v5739, 0.0
      %v5794 = vmax.f32 %v5744, 0.0
      %v5795 = vmax.f32 %v5749, 0.0
      %v5796 = vmax.f32 %v5754, 0.0
      %v5797 = vmax.f32 %v5759, 0.0
      %v5798 = vmax.f32 %v5764, 0.0
      %v5799 = vmax.f32 %v5769, 0.0
      %v5800 = vmax.f32 %v5774, 0.0
      %v5801 = vmax.f32 %v5779, 0.0
      %v5802 = vmax.f32 %v5784, 0.0
      %v5803 = vld [vmem:[%s1 + $0xb40] sm:$0xff]
      %v5804 = vld [vmem:[%s1 + $0xb48] sm:$0xff]
      %v5805 = vld [vmem:[%s1 + $0xb50] sm:$0xff]
      %v5806 = vld [vmem:[%s1 + $0xb58] sm:$0xff]
      %v5807 = vld [vmem:[%s1 + $0xb60] sm:$0xff]
      %v5808 = vld [vmem:[%s1 + $0xb68] sm:$0xff]
      %v5825 = vrot.slane %v5787, 7
      %v5826 = vrot.slane %v5788, 7
      %v5827 = vsel %vm180, %v5825, %v5826
      %v5828 = vrot.slane %v5789, 7
      %v5829 = vsel %vm180, %v5826, %v5828
      %v5830 = vrot.slane %v5790, 7
      %v5831 = vsel %vm180, %v5828, %v5830
      %v5832 = vrot.slane %v5791, 7
      %v5833 = vsel %vm180, %v5830, %v5832
      %v5834 = vrot.slane %v5792, 7
      %v5835 = vsel %vm180, %v5832, %v5834
      %v5836 = vrot.slane %v5793, 7
      %v5837 = vsel %vm180, %v5834, %v5836
      %v5838 = vrot.slane %v5794, 7
      %v5839 = vsel %vm180, %v5836, %v5838
      %v5840 = vrot.slane %v5795, 7
      %v5841 = vsel %vm180, %v5838, %v5840
      %v5842 = vrot.slane %v5796, 7
      %v5843 = vsel %vm180, %v5840, %v5842
      %v5844 = vrot.slane %v5797, 7
      %v5845 = vsel %vm180, %v5842, %v5844
      %v5846 = vrot.slane %v5798, 7
      %v5847 = vsel %vm180, %v5844, %v5846
      %v5848 = vrot.slane %v5799, 7
      %v5849 = vsel %vm180, %v5846, %v5848
      %v5850 = vrot.slane %v5800, 7
      %v5851 = vsel %vm180, %v5848, %v5850
      %v5852 = vrot.slane %v5801, 7
      %v5853 = vsel %vm180, %v5850, %v5852
      %v5854 = vrot.slane %v5802, 7
      %v5855 = vsel %vm180, %v5852, %v5854
      %v5872 = vsel %vm180, 0.0, %v5825
      %v5873 = vrot.slane %v5787, 1
      %v5874 = vrot.slane %v5788, 1
      %v5875 = vsel %vm399, %v5873, %v5874
      %v5876 = vrot.slane %v5789, 1
      %v5877 = vsel %vm399, %v5874, %v5876
      %v5878 = vrot.slane %v5790, 1
      %v5879 = vsel %vm399, %v5876, %v5878
      %v5880 = vrot.slane %v5791, 1
      %v5881 = vsel %vm399, %v5878, %v5880
      %v5882 = vrot.slane %v5792, 1
      %v5883 = vsel %vm399, %v5880, %v5882
      %v5884 = vrot.slane %v5793, 1
      %v5885 = vsel %vm399, %v5882, %v5884
      %v5886 = vrot.slane %v5794, 1
      %v5887 = vsel %vm399, %v5884, %v5886
      %v5888 = vrot.slane %v5795, 1
      %v5889 = vsel %vm399, %v5886, %v5888
      %v5890 = vrot.slane %v5796, 1
      %v5891 = vsel %vm399, %v5888, %v5890
      %v5892 = vrot.slane %v5797, 1
      %v5893 = vsel %vm399, %v5890, %v5892
      %v5894 = vrot.slane %v5798, 1
      %v5895 = vsel %vm399, %v5892, %v5894
      %v5896 = vrot.slane %v5799, 1
      %v5897 = vsel %vm399, %v5894, %v5896
      %v5898 = vrot.slane %v5800, 1
      %v5899 = vsel %vm399, %v5896, %v5898
      %v5900 = vrot.slane %v5801, 1
      %v5901 = vsel %vm399, %v5898, %v5900
      %v5902 = vrot.slane %v5802, 1
      %v5903 = vsel %vm399, %v5900, %v5902
      %v5905 = vsel %vm399, %v5902, 0.0
      %5906 = vrot.lane.b32.xlu0 %v5787, 16
      %v5907 = vpop.permute.xlu0 %5906
      %5908 = vrot.lane.b32.xlu0 %v5788, 16
      %v5909 = vpop.permute.xlu0 %5908
      %5910 = vrot.lane.b32.xlu0 %v5789, 16
      %v5911 = vpop.permute.xlu0 %5910
      %5912 = vrot.lane.b32.xlu0 %v5790, 16
      %v5913 = vpop.permute.xlu0 %5912
      %5914 = vrot.lane.b32.xlu0 %v5791, 16
      %v5915 = vpop.permute.xlu0 %5914
      %5916 = vrot.lane.b32.xlu0 %v5792, 16
      %v5917 = vpop.permute.xlu0 %5916
      %5918 = vrot.lane.b32.xlu0 %v5793, 16
      %v5919 = vpop.permute.xlu0 %5918
      %5920 = vrot.lane.b32.xlu0 %v5794, 16
      %v5921 = vpop.permute.xlu0 %5920
      %5922 = vrot.lane.b32.xlu0 %v5795, 16
      %v5923 = vpop.permute.xlu0 %5922
      %5924 = vrot.lane.b32.xlu0 %v5796, 16
      %v5925 = vpop.permute.xlu0 %5924
      %5926 = vrot.lane.b32.xlu0 %v5797, 16
      %v5927 = vpop.permute.xlu0 %5926
      %5928 = vrot.lane.b32.xlu0 %v5798, 16
      %v5929 = vpop.permute.xlu0 %5928
      %5930 = vrot.lane.b32.xlu0 %v5799, 16
      %v5931 = vpop.permute.xlu0 %5930
      %5932 = vrot.lane.b32.xlu0 %v5800, 16
      %v5933 = vpop.permute.xlu0 %5932
      %5934 = vrot.lane.b32.xlu0 %v5801, 16
      %v5935 = vpop.permute.xlu0 %5934
      %5936 = vrot.lane.b32.xlu0 %v5802, 16
      %v5937 = vpop.permute.xlu0 %5936
      %5955 = vrot.lane.b32.xlu0 %v5875, 32
      %v5956 = vpop.permute.xlu0 %5955
      %5957 = vrot.lane.b32.xlu0 %v5877, 32
      %v5958 = vpop.permute.xlu0 %5957
      %5959 = vrot.lane.b32.xlu0 %v5879, 32
      %v5960 = vpop.permute.xlu0 %5959
      %5961 = vrot.lane.b32.xlu0 %v5881, 32
      %v5962 = vpop.permute.xlu0 %5961
      %5963 = vrot.lane.b32.xlu0 %v5883, 32
      %v5964 = vpop.permute.xlu0 %5963
      %5965 = vrot.lane.b32.xlu0 %v5885, 32
      %v5966 = vpop.permute.xlu0 %5965
      %5967 = vrot.lane.b32.xlu0 %v5887, 32
      %v5968 = vpop.permute.xlu0 %5967
      %5969 = vrot.lane.b32.xlu0 %v5889, 32
      %v5970 = vpop.permute.xlu0 %5969
      %5971 = vrot.lane.b32.xlu0 %v5891, 32
      %v5972 = vpop.permute.xlu0 %5971
      %5973 = vrot.lane.b32.xlu0 %v5893, 32
      %v5974 = vpop.permute.xlu0 %5973
      %5975 = vrot.lane.b32.xlu0 %v5895, 32
      %v5976 = vpop.permute.xlu0 %5975
      %5977 = vrot.lane.b32.xlu0 %v5897, 32
      %v5978 = vpop.permute.xlu0 %5977
      %5979 = vrot.lane.b32.xlu0 %v5899, 32
      %v5980 = vpop.permute.xlu0 %5979
      %5981 = vrot.lane.b32.xlu0 %v5901, 32
      %v5982 = vpop.permute.xlu0 %5981
      %5983 = vrot.lane.b32.xlu0 %v5903, 32
      %v5984 = vpop.permute.xlu0 %5983
      %5985 = vrot.lane.b32.xlu0 %v5905, 32
      %v5986 = vpop.permute.xlu0 %5985
      %v6003 = vsel %vm771, %v5872, %v5907
      %v6004 = vsel %vm771, %v5827, %v5909
      %v6005 = vsel %vm771, %v5829, %v5911
      %v6006 = vsel %vm771, %v5831, %v5913
      %v6007 = vsel %vm771, %v5833, %v5915
      %v6008 = vsel %vm771, %v5835, %v5917
      %v6009 = vsel %vm771, %v5837, %v5919
      %v6010 = vsel %vm771, %v5839, %v5921
      %v6011 = vsel %vm771, %v5841, %v5923
      %v6012 = vsel %vm771, %v5843, %v5925
      %v6013 = vsel %vm771, %v5845, %v5927
      %v6014 = vsel %vm771, %v5847, %v5929
      %v6015 = vsel %vm771, %v5849, %v5931
      %v6016 = vsel %vm771, %v5851, %v5933
      %v6017 = vsel %vm771, %v5853, %v5935
      %v6018 = vsel %vm771, %v5855, %v5937
      %v6019 = vsel %vm788, %v6003, %v5956
      %v6020 = vsel %vm788, %v6004, %v5958
      %v6021 = vsel %vm788, %v6005, %v5960
      %v6022 = vsel %vm788, %v6006, %v5962
      %v6023 = vsel %vm788, %v6007, %v5964
      %v6024 = vsel %vm788, %v6008, %v5966
      %v6025 = vsel %vm788, %v6009, %v5968
      %v6026 = vsel %vm788, %v6010, %v5970
      %v6027 = vsel %vm788, %v6011, %v5972
      %v6028 = vsel %vm788, %v6012, %v5974
      %v6029 = vsel %vm788, %v6013, %v5976
      %v6030 = vsel %vm788, %v6014, %v5978
      %v6031 = vsel %vm788, %v6015, %v5980
      %v6032 = vsel %vm788, %v6016, %v5982
      %v6033 = vsel %vm788, %v6017, %v5984
      %v6034 = vsel %vm788, %v6018, %v5986
      %v6035 = vld [vmem:[%s1 + $0xb70] sm:$0x1]
      %v6036 = vlaneseq
      %v6037 = vshrl.u32 %v6036, 7
      %v6038 = vsub.s32 0, %v6037
      %v6039 = vrot.slane %v6035, %v6038
      %v6041 = vsel %vm810, %v6019, 0
      %v6044 = vsel %vm810, %v6020, 0
      %v6047 = vsel %vm810, %v6021, 0
      %v6050 = vsel %vm810, %v6022, 0
      %v6053 = vsel %vm810, %v6023, 0
      %v6056 = vsel %vm810, %v6024, 0
      %v6059 = vsel %vm810, %v6025, 0
      %v6062 = vsel %vm810, %v6026, 0
      %v6065 = vsel %vm810, %v6027, 0
      %v6068 = vsel %vm810, %v6028, 0
      %v6071 = vsel %vm810, %v6029, 0
      %v6074 = vsel %vm810, %v6030, 0
      %v6077 = vsel %vm810, %v6031, 0
      %v6080 = vsel %vm810, %v6032, 0
      %v6083 = vsel %vm810, %v6033, 0
      %v6086 = vsel %vm810, %v6034, 0
      %6088 = vmatprep.subr.mxu0 0.0
      %6089 = vmatpush1.msra.mxu0 %v5803
      %6090 = vmatprep.subr.mxu0 0.0
      %6091 = vmatpush1.msra.mxu0 %v5804
      %6092 = vmatprep.subr.mxu0 0.0
      %6093 = vmatpush1.msra.mxu0 %v5805
      %6094 = vmatprep.subr.mxu0 0.0
      %6095 = vmatpush1.msra.mxu0 %v5806
      %6096 = vmatprep.subr.mxu0 0.0
      %6097 = vmatpush1.msra.mxu0 %v5807
      %6098 = vmatprep.subr.mxu0 0.0
      %6099 = vmatpush1.msra.mxu0 %v5808
      %6100 = vmatprep.subr.mxu0 0.0
      %6101 = vmatpush1.msra.mxu0 0.0
      %6102 = vmatprep.subr.mxu0 0.0
      %6103 = vmatpush1.msra.mxu0 0.0
      %6104 = vmatprep.subr.mxu0 0.0
      %6105 = vmatpush1.msra.mxu0 0.0
      %6106 = vmatprep.subr.mxu0 0.0
      %6107 = vmatpush1.msra.mxu0 0.0
      %6108 = vmatprep.subr.mxu0 0.0
      %6109 = vmatpush1.msra.mxu0 0.0
      %6110 = vmatprep.subr.mxu0 0.0
      %6111 = vmatpush1.msra.mxu0 0.0
      %6112 = vmatprep.subr.mxu0 0.0
      %6113 = vmatpush1.msra.mxu0 0.0
      %6114 = vmatprep.subr.mxu0 0.0
      %6115 = vmatpush1.msra.mxu0 0.0
      %6116 = vmatprep.subr.mxu0 0.0
      %6117 = vmatpush1.msra.mxu0 0.0
      %6118 = vmatprep.subr.mxu0 0.0
      %6119 = vmatpush1.msra.mxu0 0.0
      %6120 = vmatprep.subr.mxu0 0.0
      %6121 = vmatpush1.msra.mxu0 0.0
      %6122 = vmatprep.subr.mxu0 0.0
      %6123 = vmatpush1.msra.mxu0 0.0
      %6124 = vmatprep.subr.mxu0 0.0
      %6125 = vmatpush1.msra.mxu0 0.0
      %6126 = vmatprep.subr.mxu0 0.0
      %6127 = vmatpush1.msra.mxu0 0.0
      %6128 = vmatprep.subr.mxu0 0.0
      %6129 = vmatpush1.msra.mxu0 0.0
      %6130 = vmatprep.subr.mxu0 0.0
      %6131 = vmatpush1.msra.mxu0 0.0
      %6132 = vmatprep.subr.mxu0 0.0
      %6133 = vmatpush1.msra.mxu0 0.0
      %6134 = vmatprep.subr.mxu0 0.0
      %6135 = vmatpush1.msra.mxu0 0.0
      %6136 = vmatprep.subr.mxu0 0.0
      %6137 = vmatpush1.msra.mxu0 0.0
      %6138 = vmatprep.subr.mxu0 0.0
      %6139 = vmatpush1.msra.mxu0 0.0
      %6140 = vmatprep.subr.mxu0 0.0
      %6141 = vmatpush1.msra.mxu0 0.0
      %6142 = vmatprep.subr.mxu0 0.0
      %6143 = vmatpush1.msra.mxu0 0.0
      %6144 = vmatprep.subr.mxu0 0.0
      %6145 = vmatpush1.msra.mxu0 0.0
      %6146 = vmatprep.subr.mxu0 0.0
      %6147 = vmatpush1.msra.mxu0 0.0
      %6148 = vmatprep.subr.mxu0 0.0
      %6149 = vmatpush1.msra.mxu0 0.0
      %6150 = vmatprep.subr.mxu0 0.0
      %6151 = vmatpush1.msra.mxu0 0.0
      %6152 = vmatprep.mubr.f32.mxu0 0.0
      %6153 = vmatmul.mubr.f32.gmra.mrb[0].mxu0 %v6041
      %v6154 = vpop.f32.mrb[0].mxu0
      %v6155 = vadd.f32 %v6039, %v6154
      %v6156 = vpop.f32.mrb[0].mxu0
      %6157 = vmatprep.mubr.f32.mxu0 0.0
      %6158 = vmatmul.mubr.f32.gmra.mrb[0].mxu0 %v6044
      %v6159 = vpop.f32.mrb[0].mxu0
      %v6160 = vadd.f32 %v6039, %v6159
      %v6161 = vpop.f32.mrb[0].mxu0
      %6162 = vmatprep.mubr.f32.mxu0 0.0
      %6163 = vmatmul.mubr.f32.gmra.mrb[0].mxu0 %v6047
      %v6164 = vpop.f32.mrb[0].mxu0
      %v6165 = vadd.f32 %v6039, %v6164
      %v6166 = vpop.f32.mrb[0].mxu0
      %6167 = vmatprep.mubr.f32.mxu0 0.0
      %6168 = vmatmul.mubr.f32.gmra.mrb[0].mxu0 %v6050
      %v6169 = vpop.f32.mrb[0].mxu0
      %v6170 = vadd.f32 %v6039, %v6169
      %v6171 = vpop.f32.mrb[0].mxu0
      %6172 = vmatprep.mubr.f32.mxu0 0.0
      %6173 = vmatmul.mubr.f32.gmra.mrb[0].mxu0 %v6053
      %v6174 = vpop.f32.mrb[0].mxu0
      %v6175 = vadd.f32 %v6039, %v6174
      %v6176 = vpop.f32.mrb[0].mxu0
      %6177 = vmatprep.mubr.f32.mxu0 0.0
      %6178 = vmatmul.mubr.f32.gmra.mrb[0].mxu0 %v6056
      %v6179 = vpop.f32.mrb[0].mxu0
      %v6180 = vadd.f32 %v6039, %v6179
      %v6181 = vpop.f32.mrb[0].mxu0
      %6182 = vmatprep.mubr.f32.mxu0 0.0
      %6183 = vmatmul.mubr.f32.gmra.mrb[0].mxu0 %v6059
      %v6184 = vpop.f32.mrb[0].mxu0
      %v6185 = vadd.f32 %v6039, %v6184
      %v6186 = vpop.f32.mrb[0].mxu0
      %6187 = vmatprep.mubr.f32.mxu0 0.0
      %6188 = vmatmul.mubr.f32.gmra.mrb[0].mxu0 %v6062
      %v6189 = vpop.f32.mrb[0].mxu0
      %v6190 = vadd.f32 %v6039, %v6189
      %v6191 = vpop.f32.mrb[0].mxu0
      %6192 = vmatprep.mubr.f32.mxu0 0.0
      %6193 = vmatmul.mubr.f32.gmra.mrb[0].mxu0 %v6065
      %v6194 = vpop.f32.mrb[0].mxu0
      %v6195 = vadd.f32 %v6039, %v6194
      %v6196 = vpop.f32.mrb[0].mxu0
      %6197 = vmatprep.mubr.f32.mxu0 0.0
      %6198 = vmatmul.mubr.f32.gmra.mrb[0].mxu0 %v6068
      %v6199 = vpop.f32.mrb[0].mxu0
      %v6200 = vadd.f32 %v6039, %v6199
      %v6201 = vpop.f32.mrb[0].mxu0
      %6202 = vmatprep.mubr.f32.mxu0 0.0
      %6203 = vmatmul.mubr.f32.gmra.mrb[0].mxu0 %v6071
      %v6204 = vpop.f32.mrb[0].mxu0
      %v6205 = vadd.f32 %v6039, %v6204
      %v6206 = vpop.f32.mrb[0].mxu0
      %6207 = vmatprep.mubr.f32.mxu0 0.0
      %6208 = vmatmul.mubr.f32.gmra.mrb[0].mxu0 %v6074
      %v6209 = vpop.f32.mrb[0].mxu0
      %v6210 = vadd.f32 %v6039, %v6209
      %v6211 = vpop.f32.mrb[0].mxu0
      %6212 = vmatprep.mubr.f32.mxu0 0.0
      %6213 = vmatmul.mubr.f32.gmra.mrb[0].mxu0 %v6077
      %v6214 = vpop.f32.mrb[0].mxu0
      %v6215 = vadd.f32 %v6039, %v6214
      %v6216 = vpop.f32.mrb[0].mxu0
      %6217 = vmatprep.mubr.f32.mxu0 0.0
      %6218 = vmatmul.mubr.f32.gmra.mrb[0].mxu0 %v6080
      %v6219 = vpop.f32.mrb[0].mxu0
      %v6220 = vadd.f32 %v6039, %v6219
      %v6221 = vpop.f32.mrb[0].mxu0
      %6222 = vmatprep.mubr.f32.mxu0 0.0
      %6223 = vmatmul.mubr.f32.gmra.mrb[0].mxu0 %v6083
      %v6224 = vpop.f32.mrb[0].mxu0
      %v6225 = vadd.f32 %v6039, %v6224
      %v6226 = vpop.f32.mrb[0].mxu0
      %6227 = vmatprep.mubr.f32.mxu0 0.0
      %6228 = vmatmul.mubr.f32.gmra.mrb[0].mxu0 %v6086
      %v6229 = vpop.f32.mrb[0].mxu0
      %v6230 = vadd.f32 %v6039, %v6229
      %v6231 = vpop.f32.mrb[0].mxu0
      %6232 = vdwg.mxu0
      %v6233 = vxor.u32 %v6155, 2147483648
      %v6234 = vxor.u32 %v6160, 2147483648
      %v6235 = vxor.u32 %v6165, 2147483648
      %v6236 = vxor.u32 %v6170, 2147483648
      %v6237 = vxor.u32 %v6175, 2147483648
      %v6238 = vxor.u32 %v6180, 2147483648
      %v6239 = vxor.u32 %v6185, 2147483648
      %v6240 = vxor.u32 %v6190, 2147483648
      %v6241 = vxor.u32 %v6195, 2147483648
      %v6242 = vxor.u32 %v6200, 2147483648
      %v6243 = vxor.u32 %v6205, 2147483648
      %v6244 = vxor.u32 %v6210, 2147483648
      %v6245 = vxor.u32 %v6215, 2147483648
      %v6246 = vxor.u32 %v6220, 2147483648
      %v6247 = vxor.u32 %v6225, 2147483648
      %v6248 = vxor.u32 %v6230, 2147483648
      %v6249 = vmul.f32 %v6233, 1.442695
      %v6250 = vpow.pop %v6249
      %v6251 = vmul.f32 %v6234, 1.442695
      %v6252 = vpow.pop %v6251
      %v6253 = vmul.f32 %v6235, 1.442695
      %v6254 = vpow.pop %v6253
      %v6255 = vmul.f32 %v6236, 1.442695
      %v6256 = vpow.pop %v6255
      %v6257 = vmul.f32 %v6237, 1.442695
      %v6258 = vpow.pop %v6257
      %v6259 = vmul.f32 %v6238, 1.442695
      %v6260 = vpow.pop %v6259
      %v6261 = vmul.f32 %v6239, 1.442695
      %v6262 = vpow.pop %v6261
      %v6263 = vmul.f32 %v6240, 1.442695
      %v6264 = vpow.pop %v6263
      %v6265 = vmul.f32 %v6241, 1.442695
      %v6266 = vpow.pop %v6265
      %v6267 = vmul.f32 %v6242, 1.442695
      %v6268 = vpow.pop %v6267
      %v6269 = vmul.f32 %v6243, 1.442695
      %v6270 = vpow.pop %v6269
      %v6271 = vmul.f32 %v6244, 1.442695
      %v6272 = vpow.pop %v6271
      %v6273 = vmul.f32 %v6245, 1.442695
      %v6274 = vpow.pop %v6273
      %v6275 = vmul.f32 %v6246, 1.442695
      %v6276 = vpow.pop %v6275
      %v6277 = vmul.f32 %v6247, 1.442695
      %v6278 = vpow.pop %v6277
      %v6279 = vmul.f32 %v6248, 1.442695
      %v6280 = vpow.pop %v6279
      %v6281 = vadd.f32 %v6250, 1.0
      %v6282 = vadd.f32 %v6252, 1.0
      %v6283 = vadd.f32 %v6254, 1.0
      %v6284 = vadd.f32 %v6256, 1.0
      %v6285 = vadd.f32 %v6258, 1.0
      %v6286 = vadd.f32 %v6260, 1.0
      %v6287 = vadd.f32 %v6262, 1.0
      %v6288 = vadd.f32 %v6264, 1.0
      %v6289 = vadd.f32 %v6266, 1.0
      %v6290 = vadd.f32 %v6268, 1.0
      %v6291 = vadd.f32 %v6270, 1.0
      %v6292 = vadd.f32 %v6272, 1.0
      %v6293 = vadd.f32 %v6274, 1.0
      %v6294 = vadd.f32 %v6276, 1.0
      %v6295 = vadd.f32 %v6278, 1.0
      %v6296 = vadd.f32 %v6280, 1.0
      %v6297 = vrcp.pop %v6281
      %v6298 = vmul.f32 1.0, %v6297
      %v6299 = vrcp.pop %v6282
      %v6300 = vmul.f32 1.0, %v6299
      %v6301 = vrcp.pop %v6283
      %v6302 = vmul.f32 1.0, %v6301
      %v6303 = vrcp.pop %v6284
      %v6304 = vmul.f32 1.0, %v6303
      %v6305 = vrcp.pop %v6285
      %v6306 = vmul.f32 1.0, %v6305
      %v6307 = vrcp.pop %v6286
      %v6308 = vmul.f32 1.0, %v6307
      %v6309 = vrcp.pop %v6287
      %v6310 = vmul.f32 1.0, %v6309
      %v6311 = vrcp.pop %v6288
      %v6312 = vmul.f32 1.0, %v6311
      %v6313 = vrcp.pop %v6289
      %v6314 = vmul.f32 1.0, %v6313
      %v6315 = vrcp.pop %v6290
      %v6316 = vmul.f32 1.0, %v6315
      %v6317 = vrcp.pop %v6291
      %v6318 = vmul.f32 1.0, %v6317
      %v6319 = vrcp.pop %v6292
      %v6320 = vmul.f32 1.0, %v6319
      %v6321 = vrcp.pop %v6293
      %v6322 = vmul.f32 1.0, %v6321
      %v6323 = vrcp.pop %v6294
      %v6324 = vmul.f32 1.0, %v6323
      %v6325 = vrcp.pop %v6295
      %v6326 = vmul.f32 1.0, %v6325
      %v6327 = vrcp.pop %v6296
      %v6328 = vmul.f32 1.0, %v6327
      %vm6329 = vcmask 7168
      %6330 = vst.msk [vmem:[%s145] sm:$0xff] %vm6329, %v6298
      %6331 = vst.msk [vmem:[%s145 + $0x8] sm:$0xff] %vm6329, %v6300
      %6332 = vst.msk [vmem:[%s145 + $0x10] sm:$0xff] %vm6329, %v6302
      %6333 = vst.msk [vmem:[%s145 + $0x18] sm:$0xff] %vm6329, %v6304
      %6334 = vst.msk [vmem:[%s145 + $0x20] sm:$0xff] %vm6329, %v6306
      %6335 = vst.msk [vmem:[%s145 + $0x28] sm:$0xff] %vm6329, %v6308
      %6336 = vst.msk [vmem:[%s145 + $0x30] sm:$0xff] %vm6329, %v6310
      %6337 = vst.msk [vmem:[%s145 + $0x38] sm:$0xff] %vm6329, %v6312
      %6338 = vst.msk [vmem:[%s145 + $0x40] sm:$0xff] %vm6329, %v6314
      %6339 = vst.msk [vmem:[%s145 + $0x48] sm:$0xff] %vm6329, %v6316
      %6340 = vst.msk [vmem:[%s145 + $0x50] sm:$0xff] %vm6329, %v6318
      %6341 = vst.msk [vmem:[%s145 + $0x58] sm:$0xff] %vm6329, %v6320
      %6342 = vst.msk [vmem:[%s145 + $0x60] sm:$0xff] %vm6329, %v6322
      %6343 = vst.msk [vmem:[%s145 + $0x68] sm:$0xff] %vm6329, %v6324
      %6344 = vst.msk [vmem:[%s145 + $0x70] sm:$0xff] %vm6329, %v6326
      %6345 = vst.msk [vmem:[%s145 + $0x78] sm:$0xff] %vm6329, %v6328
      %s6346 = smul.u32 16, %s13
      %p6347 = scmp.lt.s32.totalorder %s6346, 31
      %s6348 = scalar_select %p6347, %s6346, 31
      %s6349 = smul.addr %s6348, 8
      %s6350 = scalar_lea.vmem %s2, %s6349
      // Predicated region
      $region29: #{munet_forward_pallas.1} parent=27 // pred_check
        %p6351 = pneg %p78
      $region30: #{munet_forward_pallas.1} parent=27 // pred_check_branch
        %6353 = sbr.rel (%p6351) target = $region32
      $region31: #{munet_forward_pallas.1} parent=27 // pred_region
        %s6354 = smul.u32 16, %s13
      $region32: #{munet_forward_pallas.1} parent=27 // pred_fallthru
        _
    $region28: #{munet_forward_pallas.1} parent=5 // pred_fallthru
      _
    %p6355 = scmp.le.s32.totalorder 2, %s8
    // Predicated region
    $region33: #{munet_forward_pallas.1} parent=5 // pred_check
      %p6356 = pneg %p6355
    $region34: #{munet_forward_pallas.1} parent=5 // pred_check_branch
      %6358 = sbr.rel (%p6356) target = $region36
    $region35: #{munet_forward_pallas.1} parent=5 // pred_region
      %s6359 = ssub.s32 %s8, 2
      // Predicated region
      $region37: #{munet_forward_pallas.1} parent=35 // pred_check
        %p6360 = pneg %p84
      $region38: #{munet_forward_pallas.1} parent=35 // pred_check_branch
        %6362 = sbr.rel (%p6360) target = $region40
      $region39: #{munet_forward_pallas.1} parent=35 // pred_region
        %s6363 = smul.u32 16, %s14
        %p6364 = scmp.lt.s32.totalorder %s6363, 31
        %s6365 = scalar_select %p6364, %s6363, 31
        %s6366 = smul.addr %s6365, 8
        %s6367 = scalar_lea.vmem %s2, %s6366
      $region40: #{munet_forward_pallas.1} parent=35 // pred_fallthru
        _
    $region36: #{munet_forward_pallas.1} parent=5 // pred_fallthru
      _
  $region6: #{munet_forward_pallas.1} parent=0 // loop_footer
    %s12 = sadd.s32 1, %s8
  $region7: #{munet_forward_pallas.1} parent=0 // loop_footer_branch
    %7 = sbr.rel target = $region3
  $region8: #{munet_forward_pallas.1} parent=0 // loop_exit
    _

</llo_original>
